<compile_context>
chip_gen: v5e
topology: v5e:2x2
jax: 0.10.0
libtpu: 0.0.40
codegen_flags: <defaults>
</compile_context>

<pallas_src>
import jax
import jax.numpy as jnp
import numpy as np
from jax import lax
from jax.experimental import pallas as pl
from jax.experimental.pallas import tpu as pltpu

_LANE = 128


def _residual_block_kernel(x_ref, w1_ref, g1_ref, w2_ref, g2_ref, o_ref, col2_ref):
    # x_ref   : (NB, H, W, Cin)       bf16 input block (cast in the wrapper, no halo)
    # w1_ref  : (9*Cin, Cop)          bf16 conv1 weights, (kh, kw, ci) flattened, Cout padded
    # g1_ref  : (2, Cop)              f32 folded BN1: row 0 = scale, row 1 = bias
    # w2_ref  : (3, 3*Cop, Cop)       bf16 conv2 weights, dx-concatenated per kh
    # g2_ref  : (2, Cop)              f32 folded BN2
    # o_ref   : (NB, H, W, Cout)      f32 output block (UNPADDED channels -> no HBM
    #                                 write amplification)
    # col2_ref: (NB, H+2, W, 3*Cop)   bf16 scratch: dx-im2col of relu(bn1(conv1(x)))
    NB, H, W, Cin = x_ref.shape
    Cout = o_ref.shape[3]
    Cop = g1_ref.shape[1]
    K2 = 3 * Cop

    # Zero only the two H-halo rows of the conv2 column buffer (the interior is fully
    # rewritten every step).  Unconditional (not program_id-gated) so it stays correct
    # when the 'parallel' batch axis is sharded across TensorCores.
    col2_ref[:, 0:1, :, :] = jnp.zeros((NB, 1, W, K2), col2_ref.dtype)
    col2_ref[:, H + 1:H + 2, :, :] = jnp.zeros((NB, 1, W, K2), col2_ref.dtype)

    def im2col_dx(v):
        # v: (NB, H, W, C) -> (NB, H, W, 3C); channel blocks = [x(:,w-1) | x(:,w) | x(:,w+1)],
        # zero at the W boundary (the conv's 'same' halo along W).
        C = v.shape[-1]
        zcol = jnp.zeros((NB, H, 1, C), v.dtype)
        left = jnp.concatenate([zcol, v[:, :, :W - 1, :]], axis=2)   # tap dx = -1 (kw = 0)
        right = jnp.concatenate([v[:, :, 1:, :], zcol], axis=2)      # tap dx = +1 (kw = 2)
        return jnp.concatenate([left, v, right], axis=-1)

    def shift_h(v, dy):
        # Zero-padded shift along H: result[h] = v[h + dy] (H is a leading dim -> cheap).
        zrow = jnp.zeros((NB, 1, W, v.shape[-1]), v.dtype)
        if dy < 0:                                                   # tap dy = -1 (kh = 0)
            return jnp.concatenate([zrow, v[:, :H - 1, :, :]], axis=1)
        return jnp.concatenate([v[:, 1:, :, :], zrow], axis=1)       # tap dy = +1 (kh = 2)

    # ---- conv1: tiny Cin -> ONE (NB*H*W, 9*Cin) x (9*Cin, Cop) matmul, no scratch ----
    x = x_ref[...]                                                   # bf16 already
    xcol = im2col_dx(x)                                              # (NB, H, W, 3*Cin)
    patch1 = jnp.concatenate(                                        # (NB, H, W, 9*Cin)
        [shift_h(xcol, -1), xcol, shift_h(xcol, +1)], axis=-1)       # kh = 0, 1, 2 blocks
    acc1 = jnp.dot(patch1.reshape(NB * H * W, 9 * Cin), w1_ref[...],
                   preferred_element_type=jnp.float32)               # (M, Cop) f32

    # ---- bn1 (folded) + relu, f32 ----
    scale1 = g1_ref[0:1, :]                                           # (1, Cop), read once
    bias1 = g1_ref[1:2, :]
    y = jnp.maximum(acc1 * scale1 + bias1, 0.0)                       # (NB*H*W, Cop) f32

    # ---- conv2: lane-dense dx-im2col in VMEM scratch, 3 dy-slab matmuls ----
    col2_ref[:, 1:1 + H, :, :] = im2col_dx(
        y.reshape(NB, H, W, Cop).astype(jnp.bfloat16))                # full-width store
    acc2 = jnp.zeros((NB * H * W, Cop), jnp.float32)
    for dy in range(3):                                               # dy == kh
        patch2 = col2_ref[:, dy:dy + H, :, :].reshape(NB * H * W, K2)
        acc2 = acc2 + jnp.dot(patch2, w2_ref[dy],
                              preferred_element_type=jnp.float32)

    # ---- bn2 (folded) + relu, f32 ----
    scale2 = g2_ref[0:1, :]
    bias2 = g2_ref[1:2, :]
    z = jnp.maximum(acc2 * scale2 + bias2, 0.0)                       # (M, Cop) f32

    # Unpadded writeback: only the first Cout lanes go to HBM (stores are masked when
    # Cout < 128, but the HBM bytes are exactly the useful ones).
    o_ref[...] = z.reshape(NB, H, W, Cop)[:, :, :, :Cout].astype(o_ref.dtype)


def _fold_bn(bn_params, c_pad, eps):
    # (gamma, beta, running_mean, running_var) -> (2, c_pad) f32 [scale; bias].
    # Padded channels get scale = bias = 0, so they stay exactly 0 after ReLU.
    gamma, beta, mean, var = bn_params
    scale = gamma / jnp.sqrt(var + eps)
    bias = beta - mean * scale
    g = jnp.stack([scale, bias], axis=0).astype(jnp.float32)
    return jnp.pad(g, ((0, 0), (0, c_pad - g.shape[1])))


def _prep_conv1_weight(w_oihw, cout_pad):
    # OIHW -> HWIO -> (9*Cin, Cop) bf16; K index = kh*3*Cin + kw*Cin + ci, matching patch1.
    w = jnp.transpose(w_oihw, (2, 3, 1, 0))                           # (3, 3, Cin, Cout)
    cin, cout = w.shape[2], w.shape[3]
    w = jnp.pad(w, ((0, 0), (0, 0), (0, 0), (0, cout_pad - cout)))
    return w.reshape(9 * cin, cout_pad).astype(jnp.bfloat16)


def _prep_conv2_weight(w_oihw, cin_pad, cout_pad):
    # OIHW -> HWIO, zero-pad channels, merge (kw, ci) -> K so the K index (kw*Cop + ci)
    # matches the dx-im2col channel layout of col2.
    w = jnp.transpose(w_oihw, (2, 3, 1, 0))                           # (3, 3, Cin, Cout)
    cin, cout = w.shape[2], w.shape[3]
    w = jnp.pad(w, ((0, 0), (0, 0), (0, cin_pad - cin), (0, cout_pad - cout)))
    return w.reshape(3, 3 * cin_pad, cout_pad).astype(jnp.bfloat16)


def residual_block_pallas(x_nchw, w1_oihw, bn1, w2_oihw, bn2, eps=1e-5):
    N, Cin, H, W = x_nchw.shape
    Cout = w1_oihw.shape[0]
    Cop = max(_LANE, -(-Cout // _LANE) * _LANE)       # matmul N dim padded to a lane multiple

    # Batch block: big enough to amortize the ~0.35us/step overhead, small enough that the
    # grid has >= 2 steps (ideally >= 4) so double-buffering overlaps DMA with compute and a
    # second TensorCore (v7x) gets work on the 'parallel' axis.
    if N >= 4:
        max_nb = max(1, N // 4)
    elif N >= 2:
        max_nb = max(1, N // 2)
    else:
        max_nb = 1
    max_nb = min(max_nb, 8)
    nb = 1
    for cand in range(max_nb, 0, -1):
        if N % cand == 0:
            nb = cand
            break

    # NCHW -> NHWC and bf16 in the wrapper (halves the input DMA bytes).
    # TODO(synk): a NHWC-native caller could skip these transposes entirely.
    x_nhwc = jnp.transpose(x_nchw, (0, 2, 3, 1)).astype(jnp.bfloat16)
    w1 = _prep_conv1_weight(w1_oihw, Cop)             # (9*Cin, Cop) bf16
    w2 = _prep_conv2_weight(w2_oihw, Cop, Cop)        # (3, 3*Cop, Cop) bf16
    g1 = _fold_bn(bn1, Cop, eps)
    g2 = _fold_bn(bn2, Cop, eps)

    # Explicit scoped-VMEM limit from the block + scratch footprint (+headroom).
    col2_bytes = nb * (H + 2) * W * 3 * Cop * 2
    io_bytes = 2 * (nb * H * W * Cin * 2) + 2 * (nb * H * W * Cout * 4)
    w_bytes = 2 * (w1.size * 2 + w2.size * 2 + g1.size * 4 + g2.size * 4)
    vmem_limit = int(min(64 * 2**20, max(32 * 2**20, 2 * (col2_bytes + io_bytes + w_bytes))))

    flops = int(2 * N * H * W * 9 * (Cin * Cop + Cop * Cop))
    bytes_accessed = int(x_nhwc.size * 2 + w1.size * 2 + w2.size * 2
                         + g1.size * 4 + g2.size * 4 + N * H * W * Cout * 4)

    out_nhwc = pl.pallas_call(
        _residual_block_kernel,
        out_shape=jax.ShapeDtypeStruct((N, H, W, Cout), jnp.float32),
        grid_spec=pltpu.PrefetchScalarGridSpec(
            num_scalar_prefetch=0,
            grid=(N // nb,),
            in_specs=[
                pl.BlockSpec((nb, H, W, Cin), lambda n: (n, 0, 0, 0)),
                pl.BlockSpec((9 * Cin, Cop), lambda n: (0, 0)),
                pl.BlockSpec((2, Cop), lambda n: (0, 0)),
                pl.BlockSpec((3, 3 * Cop, Cop), lambda n: (0, 0, 0)),
                pl.BlockSpec((2, Cop), lambda n: (0, 0)),
            ],
            out_specs=pl.BlockSpec((nb, H, W, Cout), lambda n: (n, 0, 0, 0)),
            scratch_shapes=[
                pltpu.VMEM((nb, H + 2, W, 3 * Cop), jnp.bfloat16),
            ],
        ),
        compiler_params=pltpu.CompilerParams(
            dimension_semantics=("parallel",),
            vmem_limit_bytes=vmem_limit,
        ),
        cost_estimate=pl.CostEstimate(flops=flops, transcendentals=0,
                                      bytes_accessed=bytes_accessed),
    )(x_nhwc, w1, g1, w2, g2)

    return jnp.transpose(out_nhwc, (0, 3, 1, 2)).astype(x_nchw.dtype)   # NHWC -> NCHW


def residual_block_ref(x_nchw, w1_oihw, bn1, w2_oihw, bn2, eps=1e-5):
    """Pure-JAX f32 reference (NCHW, same semantics as the PyTorch module in eval mode)."""
    def conv(x, w):
        return lax.conv_general_dilated(
            x, w, window_strides=(1, 1), padding=((1, 1), (1, 1)),
            dimension_numbers=("NCHW", "OIHW", "NCHW"))

    def bn(x, p):
        gamma, beta, mean, var = p
        s = gamma / jnp.sqrt(var + eps)
        b = beta - mean * s
        return x * s[None, :, None, None] + b[None, :, None, None]

    out = jnp.maximum(bn(conv(x_nchw, w1_oihw), bn1), 0.0)
    out = jnp.maximum(bn(conv(out, w2_oihw), bn2), 0.0)
    return out


if __name__ == "__main__":
    N, Cin, Cout, H, W = 2, 4, 8, 16, 16

    key = jax.random.PRNGKey(0)
    ks = jax.random.split(key, 10)

    x = jax.random.normal(ks[0], (N, Cin, H, W), jnp.float32)

    # Conv weights in PyTorch OIHW layout, no bias.
    w1 = 0.1 * jax.random.normal(ks[1], (Cout, Cin, 3, 3), jnp.float32)
    w2 = 0.1 * jax.random.normal(ks[2], (Cout, Cout, 3, 3), jnp.float32)

    # BatchNorm params: (gamma, beta, running_mean, running_var)
    bn1 = (1.0 + 0.1 * jax.random.normal(ks[3], (Cout,), jnp.float32),
           0.1 * jax.random.normal(ks[4], (Cout,), jnp.float32),
           0.1 * jax.random.normal(ks[5], (Cout,), jnp.float32),
           jax.random.uniform(ks[6], (Cout,), jnp.float32, 0.5, 1.5))
    bn2 = (1.0 + 0.1 * jax.random.normal(ks[7], (Cout,), jnp.float32),
           0.1 * jax.random.normal(ks[8], (Cout,), jnp.float32),
           0.1 * jax.random.normal(ks[9], (Cout,), jnp.float32),
           jax.random.uniform(jax.random.PRNGKey(1), (Cout,), jnp.float32, 0.5, 1.5))

    out = jax.block_until_ready(residual_block_pallas(x, w1, bn1, w2, bn2))
    ref = jax.block_until_ready(residual_block_ref(x, w1, bn1, w2, bn2))

    # Tolerance reflects bf16 conv inputs (f32 accumulation) vs. the all-f32 reference.
    np.testing.assert_allclose(np.asarray(out), np.asarray(ref), rtol=2e-2, atol=2e-2)

    print("KERNEL_OK")
</pallas_src>

<mosaic_0001>
module attributes {stable_mosaic.version = 11 : i64} {
  func.func @_residual_block_kernel(%arg0: i32, %arg1: memref<1x16x16x4xbf16, #tpu.memory_space<vmem>>, %arg2: memref<36x128xbf16, #tpu.memory_space<vmem>>, %arg3: memref<2x128xf32, #tpu.memory_space<vmem>>, %arg4: memref<3x384x128xbf16, #tpu.memory_space<vmem>>, %arg5: memref<2x128xf32, #tpu.memory_space<vmem>>, %arg6: memref<1x16x16x8xf32, #tpu.memory_space<vmem>>, %arg7: memref<1x18x16x384xbf16, #tpu.memory_space<vmem>>) attributes {dimension_semantics = [#tpu.dimension_semantics<parallel>], iteration_bounds = array<i64: 2>, scalar_prefetch = 0 : i64, scratch_operands = 1 : i64, tpu.core_type = #tpu.core_type<tc>, window_params = [{transform_indices = @transform_0, window_bounds = array<i64: 1, 16, 16, 4>}, {pipeline_mode = #tpu.pipeline_mode<synchronous>, transform_indices = @transform_1, window_bounds = array<i64: 36, 128>}, {pipeline_mode = #tpu.pipeline_mode<synchronous>, transform_indices = @transform_2, window_bounds = array<i64: 2, 128>}, {pipeline_mode = #tpu.pipeline_mode<synchronous>, transform_indices = @transform_3, window_bounds = array<i64: 3, 384, 128>}, {pipeline_mode = #tpu.pipeline_mode<synchronous>, transform_indices = @transform_4, window_bounds = array<i64: 2, 128>}, {transform_indices = @transform_5, window_bounds = array<i64: 1, 16, 16, 8>}]} {
    %cst = arith.constant 0.000000e+00 : bf16
    %0 = vector.broadcast %cst : bf16 to vector<1x1x16x384xbf16>
    %c0 = arith.constant 0 : index
    %c0_0 = arith.constant 0 : index
    %c0_1 = arith.constant 0 : index
    %c0_2 = arith.constant 0 : index
    %1 = vector.load %arg7[%c0, %c0_0, %c0_1, %c0_2] : memref<1x18x16x384xbf16, #tpu.memory_space<vmem>>, vector<1x1x16x384xbf16>
    tpu.vector_store %arg7[%c0, %c0_0, %c0_1, %c0_2], %0 {strides = array<i32>} : memref<1x18x16x384xbf16, #tpu.memory_space<vmem>>, vector<1x1x16x384xbf16>,
    %cst_3 = arith.constant 0.000000e+00 : bf16
    %2 = vector.broadcast %cst_3 : bf16 to vector<1x1x16x384xbf16>
    %c0_4 = arith.constant 0 : index
    %c17 = arith.constant 17 : index
    %c0_5 = arith.constant 0 : index
    %c0_6 = arith.constant 0 : index
    %3 = vector.load %arg7[%c0_4, %c17, %c0_5, %c0_6] : memref<1x18x16x384xbf16, #tpu.memory_space<vmem>>, vector<1x1x16x384xbf16>
    tpu.vector_store %arg7[%c0_4, %c17, %c0_5, %c0_6], %2 {strides = array<i32>} : memref<1x18x16x384xbf16, #tpu.memory_space<vmem>>, vector<1x1x16x384xbf16>,
    %c0_7 = arith.constant 0 : index
    %c0_8 = arith.constant 0 : index
    %c0_9 = arith.constant 0 : index
    %c0_10 = arith.constant 0 : index
    %4 = vector.load %arg1[%c0_7, %c0_8, %c0_9, %c0_10] : memref<1x16x16x4xbf16, #tpu.memory_space<vmem>>, vector<1x16x16x4xbf16>
    %cst_11 = arith.constant 0.000000e+00 : bf16
    %5 = vector.broadcast %cst_11 : bf16 to vector<1x16x1x4xbf16>
    %6 = vector.extract_strided_slice %4 {offsets = [0, 0, 0, 0], sizes = [1, 16, 15, 4], strides = [1, 1, 1, 1]} : vector<1x16x16x4xbf16> to vector<1x16x15x4xbf16>
    %7 = tpu.concatenate %5, %6 in 2 : vector<1x16x1x4xbf16>, vector<1x16x15x4xbf16> -> vector<1x16x16x4xbf16>
    %8 = vector.extract_strided_slice %4 {offsets = [0, 0, 1, 0], sizes = [1, 16, 15, 4], strides = [1, 1, 1, 1]} : vector<1x16x16x4xbf16> to vector<1x16x15x4xbf16>
    %9 = tpu.concatenate %8, %5 in 2 : vector<1x16x15x4xbf16>, vector<1x16x1x4xbf16> -> vector<1x16x16x4xbf16>
    %10 = tpu.concatenate %7, %4, %9 in 3 : vector<1x16x16x4xbf16>, vector<1x16x16x4xbf16>, vector<1x16x16x4xbf16> -> vector<1x16x16x12xbf16>
    %cst_12 = arith.constant 0.000000e+00 : bf16
    %11 = vector.broadcast %cst_12 : bf16 to vector<1x1x16x12xbf16>
    %12 = vector.extract_strided_slice %10 {offsets = [0, 0, 0, 0], sizes = [1, 15, 16, 12], strides = [1, 1, 1, 1]} : vector<1x16x16x12xbf16> to vector<1x15x16x12xbf16>
    %13 = tpu.concatenate %11, %12 in 1 : vector<1x1x16x12xbf16>, vector<1x15x16x12xbf16> -> vector<1x16x16x12xbf16>
    %cst_13 = arith.constant 0.000000e+00 : bf16
    %14 = vector.broadcast %cst_13 : bf16 to vector<1x1x16x12xbf16>
    %15 = vector.extract_strided_slice %10 {offsets = [0, 1, 0, 0], sizes = [1, 15, 16, 12], strides = [1, 1, 1, 1]} : vector<1x16x16x12xbf16> to vector<1x15x16x12xbf16>
    %16 = tpu.concatenate %15, %14 in 1 : vector<1x15x16x12xbf16>, vector<1x1x16x12xbf16> -> vector<1x16x16x12xbf16>
    %17 = tpu.concatenate %13, %10, %16 in 3 : vector<1x16x16x12xbf16>, vector<1x16x16x12xbf16>, vector<1x16x16x12xbf16> -> vector<1x16x16x36xbf16>
    %18 = vector.shape_cast %17 : vector<1x16x16x36xbf16> to vector<256x36xbf16>
    %c0_14 = arith.constant 0 : index
    %c0_15 = arith.constant 0 : index
    %19 = vector.load %arg2[%c0_14, %c0_15] : memref<36x128xbf16, #tpu.memory_space<vmem>>, vector<36x128xbf16>
    %cst_16 = arith.constant dense<0.000000e+00> : vector<256x128xf32>
    %20 = tpu.matmul %18, %19, %cst_16 {dimension_numbers = #tpu.dot_dimension_numbers<[1], [0], [0], [1], [0, 0, 1, 1], [], []>} : vector<256x36xbf16>, vector<36x128xbf16>, vector<256x128xf32> -> vector<256x128xf32>
    %c0_17 = arith.constant 0 : index
    %c0_18 = arith.constant 0 : index
    %21 = vector.load %arg3[%c0_17, %c0_18] : memref<2x128xf32, #tpu.memory_space<vmem>>, vector<1x128xf32>
    %c1 = arith.constant 1 : index
    %c0_19 = arith.constant 0 : index
    %22 = vector.load %arg3[%c1, %c0_19] : memref<2x128xf32, #tpu.memory_space<vmem>>, vector<1x128xf32>
    %23 = vector.broadcast %21 : vector<1x128xf32> to vector<256x128xf32>
    %24 = arith.mulf %20, %23 : vector<256x128xf32>
    %25 = vector.broadcast %22 : vector<1x128xf32> to vector<256x128xf32>
    %26 = arith.addf %24, %25 : vector<256x128xf32>
    %cst_20 = arith.constant 0.000000e+00 : f32
    %27 = vector.broadcast %cst_20 : f32 to vector<256x128xf32>
    %28 = arith.maximumf %26, %27 : vector<256x128xf32>
    %29 = vector.shape_cast %28 : vector<256x128xf32> to vector<1x16x16x128xf32>
    %30 = arith.truncf %29 : vector<1x16x16x128xf32> to vector<1x16x16x128xbf16>
    %cst_21 = arith.constant 0.000000e+00 : bf16
    %31 = vector.broadcast %cst_21 : bf16 to vector<1x16x1x128xbf16>
    %32 = vector.extract_strided_slice %30 {offsets = [0, 0, 0, 0], sizes = [1, 16, 15, 128], strides = [1, 1, 1, 1]} : vector<1x16x16x128xbf16> to vector<1x16x15x128xbf16>
    %33 = tpu.concatenate %31, %32 in 2 : vector<1x16x1x128xbf16>, vector<1x16x15x128xbf16> -> vector<1x16x16x128xbf16>
    %34 = vector.extract_strided_slice %30 {offsets = [0, 0, 1, 0], sizes = [1, 16, 15, 128], strides = [1, 1, 1, 1]} : vector<1x16x16x128xbf16> to vector<1x16x15x128xbf16>
    %35 = tpu.concatenate %34, %31 in 2 : vector<1x16x15x128xbf16>, vector<1x16x1x128xbf16> -> vector<1x16x16x128xbf16>
    %36 = tpu.concatenate %33, %30, %35 in 3 : vector<1x16x16x128xbf16>, vector<1x16x16x128xbf16>, vector<1x16x16x128xbf16> -> vector<1x16x16x384xbf16>
    %c0_22 = arith.constant 0 : index
    %c1_23 = arith.constant 1 : index
    %c0_24 = arith.constant 0 : index
    %c0_25 = arith.constant 0 : index
    %37 = vector.load %arg7[%c0_22, %c1_23, %c0_24, %c0_25] : memref<1x18x16x384xbf16, #tpu.memory_space<vmem>>, vector<1x16x16x384xbf16>
    tpu.vector_store %arg7[%c0_22, %c1_23, %c0_24, %c0_25], %36 {strides = array<i32>} : memref<1x18x16x384xbf16, #tpu.memory_space<vmem>>, vector<1x16x16x384xbf16>,
    %cst_26 = arith.constant 0.000000e+00 : f32
    %38 = vector.broadcast %cst_26 : f32 to vector<256x128xf32>
    %c0_27 = arith.constant 0 : index
    %c0_28 = arith.constant 0 : index
    %c0_29 = arith.constant 0 : index
    %c0_30 = arith.constant 0 : index
    %39 = vector.load %arg7[%c0_27, %c0_28, %c0_29, %c0_30] : memref<1x18x16x384xbf16, #tpu.memory_space<vmem>>, vector<1x16x16x384xbf16>
    %40 = vector.shape_cast %39 : vector<1x16x16x384xbf16> to vector<256x384xbf16>
    %c0_31 = arith.constant 0 : index
    %c0_32 = arith.constant 0 : index
    %c0_33 = arith.constant 0 : index
    %41 = vector.load %arg4[%c0_31, %c0_32, %c0_33] : memref<3x384x128xbf16, #tpu.memory_space<vmem>>, vector<1x384x128xbf16>
    %42 = vector.shape_cast %41 : vector<1x384x128xbf16> to vector<384x128xbf16>
    %cst_34 = arith.constant dense<0.000000e+00> : vector<256x128xf32>
    %43 = tpu.matmul %40, %42, %cst_34 {dimension_numbers = #tpu.dot_dimension_numbers<[1], [0], [0], [1], [0, 0, 1, 1], [], []>} : vector<256x384xbf16>, vector<384x128xbf16>, vector<256x128xf32> -> vector<256x128xf32>
    %44 = arith.addf %38, %43 : vector<256x128xf32>
    %c0_35 = arith.constant 0 : index
    %c1_36 = arith.constant 1 : index
    %c0_37 = arith.constant 0 : index
    %c0_38 = arith.constant 0 : index
    %45 = vector.load %arg7[%c0_35, %c1_36, %c0_37, %c0_38] : memref<1x18x16x384xbf16, #tpu.memory_space<vmem>>, vector<1x16x16x384xbf16>
    %46 = vector.shape_cast %45 : vector<1x16x16x384xbf16> to vector<256x384xbf16>
    %c1_39 = arith.constant 1 : index
    %c0_40 = arith.constant 0 : index
    %c0_41 = arith.constant 0 : index
    %47 = vector.load %arg4[%c1_39, %c0_40, %c0_41] : memref<3x384x128xbf16, #tpu.memory_space<vmem>>, vector<1x384x128xbf16>
    %48 = vector.shape_cast %47 : vector<1x384x128xbf16> to vector<384x128xbf16>
    %cst_42 = arith.constant dense<0.000000e+00> : vector<256x128xf32>
    %49 = tpu.matmul %46, %48, %cst_42 {dimension_numbers = #tpu.dot_dimension_numbers<[1], [0], [0], [1], [0, 0, 1, 1], [], []>} : vector<256x384xbf16>, vector<384x128xbf16>, vector<256x128xf32> -> vector<256x128xf32>
    %50 = arith.addf %44, %49 : vector<256x128xf32>
    %c0_43 = arith.constant 0 : index
    %c2 = arith.constant 2 : index
    %c0_44 = arith.constant 0 : index
    %c0_45 = arith.constant 0 : index
    %51 = vector.load %arg7[%c0_43, %c2, %c0_44, %c0_45] : memref<1x18x16x384xbf16, #tpu.memory_space<vmem>>, vector<1x16x16x384xbf16>
    %52 = vector.shape_cast %51 : vector<1x16x16x384xbf16> to vector<256x384xbf16>
    %c2_46 = arith.constant 2 : index
    %c0_47 = arith.constant 0 : index
    %c0_48 = arith.constant 0 : index
    %53 = vector.load %arg4[%c2_46, %c0_47, %c0_48] : memref<3x384x128xbf16, #tpu.memory_space<vmem>>, vector<1x384x128xbf16>
    %54 = vector.shape_cast %53 : vector<1x384x128xbf16> to vector<384x128xbf16>
    %cst_49 = arith.constant dense<0.000000e+00> : vector<256x128xf32>
    %55 = tpu.matmul %52, %54, %cst_49 {dimension_numbers = #tpu.dot_dimension_numbers<[1], [0], [0], [1], [0, 0, 1, 1], [], []>} : vector<256x384xbf16>, vector<384x128xbf16>, vector<256x128xf32> -> vector<256x128xf32>
    %56 = arith.addf %50, %55 : vector<256x128xf32>
    %c0_50 = arith.constant 0 : index
    %c0_51 = arith.constant 0 : index
    %57 = vector.load %arg5[%c0_50, %c0_51] : memref<2x128xf32, #tpu.memory_space<vmem>>, vector<1x128xf32>
    %c1_52 = arith.constant 1 : index
    %c0_53 = arith.constant 0 : index
    %58 = vector.load %arg5[%c1_52, %c0_53] : memref<2x128xf32, #tpu.memory_space<vmem>>, vector<1x128xf32>
    %59 = vector.broadcast %57 : vector<1x128xf32> to vector<256x128xf32>
    %60 = arith.mulf %56, %59 : vector<256x128xf32>
    %61 = vector.broadcast %58 : vector<1x128xf32> to vector<256x128xf32>
    %62 = arith.addf %60, %61 : vector<256x128xf32>
    %cst_54 = arith.constant 0.000000e+00 : f32
    %63 = vector.broadcast %cst_54 : f32 to vector<256x128xf32>
    %64 = arith.maximumf %62, %63 : vector<256x128xf32>
    %65 = vector.shape_cast %64 : vector<256x128xf32> to vector<1x16x16x128xf32>
    %66 = vector.extract_strided_slice %65 {offsets = [0, 0, 0, 0], sizes = [1, 16, 16, 8], strides = [1, 1, 1, 1]} : vector<1x16x16x128xf32> to vector<1x16x16x8xf32>
    %c0_55 = arith.constant 0 : index
    %c0_56 = arith.constant 0 : index
    %c0_57 = arith.constant 0 : index
    %c0_58 = arith.constant 0 : index
    %67 = vector.load %arg6[%c0_55, %c0_56, %c0_57, %c0_58] : memref<1x16x16x8xf32, #tpu.memory_space<vmem>>, vector<1x16x16x8xf32>
    tpu.vector_store %arg6[%c0_55, %c0_56, %c0_57, %c0_58], %66 {strides = array<i32>} : memref<1x16x16x8xf32, #tpu.memory_space<vmem>>, vector<1x16x16x8xf32>,
    return
  }
  func.func @transform_0(%arg0: i32) -> (i32, i32, i32, i32) {
    %c0_i32 = arith.constant 0 : i32
    %c0_i32_0 = arith.constant 0 : i32
    %c0_i32_1 = arith.constant 0 : i32
    %c0_i32_2 = arith.constant 0 : i32
    return %arg0, %c0_i32, %c0_i32_0, %c0_i32_1 : i32, i32, i32, i32
  }
  func.func @transform_1(%arg0: i32) -> (i32, i32) {
    %c0_i32 = arith.constant 0 : i32
    %c0_i32_0 = arith.constant 0 : i32
    %c0_i32_1 = arith.constant 0 : i32
    return %c0_i32, %c0_i32_0 : i32, i32
  }
  func.func @transform_2(%arg0: i32) -> (i32, i32) {
    %c0_i32 = arith.constant 0 : i32
    %c0_i32_0 = arith.constant 0 : i32
    %c0_i32_1 = arith.constant 0 : i32
    return %c0_i32, %c0_i32_0 : i32, i32
  }
  func.func @transform_3(%arg0: i32) -> (i32, i32, i32) {
    %c0_i32 = arith.constant 0 : i32
    %c0_i32_0 = arith.constant 0 : i32
    %c0_i32_1 = arith.constant 0 : i32
    %c0_i32_2 = arith.constant 0 : i32
    return %c0_i32, %c0_i32_0, %c0_i32_1 : i32, i32, i32
  }
  func.func @transform_4(%arg0: i32) -> (i32, i32) {
    %c0_i32 = arith.constant 0 : i32
    %c0_i32_0 = arith.constant 0 : i32
    %c0_i32_1 = arith.constant 0 : i32
    return %c0_i32, %c0_i32_0 : i32, i32
  }
  func.func @transform_5(%arg0: i32) -> (i32, i32, i32, i32) {
    %c0_i32 = arith.constant 0 : i32
    %c0_i32_0 = arith.constant 0 : i32
    %c0_i32_1 = arith.constant 0 : i32
    %c0_i32_2 = arith.constant 0 : i32
    return %arg0, %c0_i32, %c0_i32_0, %c0_i32_1 : i32, i32, i32, i32
  }
}

</mosaic_0001>

<llo_original>
// kernel: tpu_custom_call.1
$region0: #{tpu_custom_call.1}
  #allocation0 [shape = 'u32[]', space=smem, size = 0x4, offset = 0x4, fixed_abs, tag = 'smem constant byte address 0x4 - core index']
  #allocation1 [shape = 'u32[72,128]{1,0:T(1,128)}', space=vmem, size = 0x9000, scoped, tag = 'internal scratch']
  #allocation2 [shape = 'bf16[1,18,16,384]{3,2,1,0:T(8,128)(2,1)}', space=vmem, size = 0x36000, scoped, tag = 'scratch operand']
  %s0 = inlined_call_operand.vmem [shape: bf16[2,16,16,4], index: 0, kind: input, shape index: {}]
  %s1 = inlined_call_operand.vmem [shape: bf16[36,128], index: 1, kind: input, shape index: {}]
  %s2 = inlined_call_operand.vmem [shape: f32[2,128], index: 2, kind: input, shape index: {}]
  %s3 = inlined_call_operand.hbm [shape: bf16[3,384,128], index: 3, kind: input, shape index: {}]
  %s4 = inlined_call_operand.vmem [shape: f32[2,128], index: 4, kind: input, shape index: {}]
  %s5 = inlined_call_operand.vmem [shape: f32[2,16,16,8], index: 5, kind: output, shape index: {}]
  %s6 = sld [smem:[#allocation0]]
  $region57: #{tpu_custom_call.1} parent=0
    _
  %s8 = ssub.s32 1, %s6
  %s9 = scalar_select 0, %s8, %s6
  $region1: #{tpu_custom_call.1} parent=0
    #allocation3 [shape = 'u8[294912]{0}', space=vmem, size = 0x48000, scoped, tag = 'input window, operand 3, single buffered']
    #allocation4 [shape = 's32[2]{0}', space=sflag, size = 0x8, scoped, tag = 'scoped memory for tpu_custom_call.1']
    %10 = vsyncpa [#allocation4], 0
    loop: start=0, step=1, limit=4
    $region2: #{tpu_custom_call.1} parent=1 // loop_pre_header
      _
    $region3: #{tpu_custom_call.1} parent=1 // loop_header
      %s12 = sphi 0, %s16
      %p13 = scmp.ge.s32.totalorder %s12, 4
      %s22 = sphi 0, %s24
      %s25 = sphi 0, %s22
      %s26 = sphi 0, %s25
      %s42 = sphi 0, %s26
      %s46 = sphi 0, %s46
      %s48 = sphi 0, %s46
      %s49 = sphi 0, %s48
      %s63 = sphi 0, %s49
      %s67 = sphi 0, %s67
      %s69 = sphi 0, %s67
      %s70 = sphi 0, %s69
      %s84 = sphi 0, %s70
      %s88 = sphi 0, %s88
      %s90 = sphi 0, %s88
      %s91 = sphi 0, %s90
      %s105 = sphi 0, %s91
      %s109 = sphi 0, %s109
      %s111 = sphi 0, %s109
      %s112 = sphi 0, %s111
      %s126 = sphi 0, %s112
      %s132 = sphi 0, %s134
      %s135 = sphi 0, %s132
      %s136 = sphi 0, %s135
      %s152 = sphi 0, %s136
    $region4: #{tpu_custom_call.1} parent=1 // loop_header_branch
      %15 = sbr.rel (%p13) target = $region8
    $region5: #{tpu_custom_call.1} parent=1 // loop_body
      %s17 = ssub.s32 %s12, 1
      %s18 = ssub.s32 %s12, 2
      %s19 = sadd.s32 %s12, 1
      %s20 = ssub.s32 %s12, %s19
      %p21 = scmp.eq.s32.totalorder %s20, 0
      %s23 = sadd.s32 %s22, 1
      %s24 = scalar_select %p21, %s22, %s23
      %p27 = pneg %p21
      %p28 = scmp.eq.s32.totalorder %s12, 1
      %p29 = por %p27, %p28
      %p30 = scmp.ne.s32.totalorder %s22, %s25
      %p31 = scmp.eq.s32.totalorder %s12, 0
      %p32 = por %p30, %p31
      %p33 = scmp.ne.s32.totalorder %s22, %s25
      %p34 = scmp.eq.s32.totalorder %s17, 1
      %p35 = por %p33, %p34
      %p36 = scmp.ne.s32.totalorder %s25, %s26
      %p37 = scmp.eq.s32.totalorder %s17, 0
      %p38 = por %p36, %p37
      %p39 = scmp.ne.s32.totalorder %s25, %s26
      %p40 = scmp.eq.s32.totalorder %s18, 1
      %p41 = por %p39, %p40
      %p43 = scmp.ne.s32.totalorder %s26, %s42
      %p44 = scmp.eq.s32.totalorder %s18, 0
      %p45 = por %p43, %p44
      %s47 = sadd.s32 %s46, 1
      %p50 = scmp.eq.s32.totalorder %s12, 1
      %p51 = scmp.ne.s32.totalorder %s46, %s48
      %p52 = scmp.eq.s32.totalorder %s12, 0
      %p53 = por %p51, %p52
      %p54 = scmp.ne.s32.totalorder %s46, %s48
      %p55 = scmp.eq.s32.totalorder %s17, 1
      %p56 = por %p54, %p55
      %p57 = scmp.ne.s32.totalorder %s48, %s49
      %p58 = scmp.eq.s32.totalorder %s17, 0
      %p59 = por %p57, %p58
      %p60 = scmp.ne.s32.totalorder %s48, %s49
      %p61 = scmp.eq.s32.totalorder %s18, 1
      %p62 = por %p60, %p61
      %p64 = scmp.ne.s32.totalorder %s49, %s63
      %p65 = scmp.eq.s32.totalorder %s18, 0
      %p66 = por %p64, %p65
      %s68 = sadd.s32 %s67, 1
      %p71 = scmp.eq.s32.totalorder %s12, 1
      %p72 = scmp.ne.s32.totalorder %s67, %s69
      %p73 = scmp.eq.s32.totalorder %s12, 0
      %p74 = por %p72, %p73
      %p75 = scmp.ne.s32.totalorder %s67, %s69
      %p76 = scmp.eq.s32.totalorder %s17, 1
      %p77 = por %p75, %p76
      %p78 = scmp.ne.s32.totalorder %s69, %s70
      %p79 = scmp.eq.s32.totalorder %s17, 0
      %p80 = por %p78, %p79
      %p81 = scmp.ne.s32.totalorder %s69, %s70
      %p82 = scmp.eq.s32.totalorder %s18, 1
      %p83 = por %p81, %p82
      %p85 = scmp.ne.s32.totalorder %s70, %s84
      %p86 = scmp.eq.s32.totalorder %s18, 0
      %p87 = por %p85, %p86
      %s89 = sadd.s32 %s88, 1
      %p92 = scmp.eq.s32.totalorder %s12, 1
      %p93 = scmp.ne.s32.totalorder %s88, %s90
      %p94 = scmp.eq.s32.totalorder %s12, 0
      %p95 = por %p93, %p94
      %p96 = scmp.ne.s32.totalorder %s88, %s90
      %p97 = scmp.eq.s32.totalorder %s17, 1
      %p98 = por %p96, %p97
      %p99 = scmp.ne.s32.totalorder %s90, %s91
      %p100 = scmp.eq.s32.totalorder %s17, 0
      %p101 = por %p99, %p100
      %p102 = scmp.ne.s32.totalorder %s90, %s91
      %p103 = scmp.eq.s32.totalorder %s18, 1
      %p104 = por %p102, %p103
      %p106 = scmp.ne.s32.totalorder %s91, %s105
      %p107 = scmp.eq.s32.totalorder %s18, 0
      %p108 = por %p106, %p107
      %s110 = sadd.s32 %s109, 1
      %p113 = scmp.eq.s32.totalorder %s12, 1
      %p114 = scmp.ne.s32.totalorder %s109, %s111
      %p115 = scmp.eq.s32.totalorder %s12, 0
      %p116 = por %p114, %p115
      %p117 = scmp.ne.s32.totalorder %s109, %s111
      %p118 = scmp.eq.s32.totalorder %s17, 1
      %p119 = por %p117, %p118
      %p120 = scmp.ne.s32.totalorder %s111, %s112
      %p121 = scmp.eq.s32.totalorder %s17, 0
      %p122 = por %p120, %p121
      %p123 = scmp.ne.s32.totalorder %s111, %s112
      %p124 = scmp.eq.s32.totalorder %s18, 1
      %p125 = por %p123, %p124
      %p127 = scmp.ne.s32.totalorder %s112, %s126
      %p128 = scmp.eq.s32.totalorder %s18, 0
      %p129 = por %p127, %p128
      %s130 = ssub.s32 %s12, %s19
      %p131 = scmp.eq.s32.totalorder %s130, 0
      %s133 = sadd.s32 %s132, 1
      %s134 = scalar_select %p131, %s132, %s133
      %p137 = pneg %p131
      %p138 = scmp.eq.s32.totalorder %s12, 1
      %p139 = por %p137, %p138
      %p140 = scmp.ne.s32.totalorder %s132, %s135
      %p141 = scmp.eq.s32.totalorder %s12, 0
      %p142 = por %p140, %p141
      %p143 = scmp.ne.s32.totalorder %s132, %s135
      %p144 = scmp.eq.s32.totalorder %s17, 1
      %p145 = por %p143, %p144
      %p146 = scmp.ne.s32.totalorder %s135, %s136
      %p147 = scmp.eq.s32.totalorder %s17, 0
      %p148 = por %p146, %p147
      %p149 = scmp.ne.s32.totalorder %s135, %s136
      %p150 = scmp.eq.s32.totalorder %s18, 1
      %p151 = por %p149, %p150
      %p153 = scmp.ne.s32.totalorder %s136, %s152
      %p154 = scmp.eq.s32.totalorder %s18, 0
      %p155 = por %p153, %p154
      %p156 = scmp.le.s32.totalorder 1, %s12
      %p157 = scmp.lt.s32.totalorder %s12, 3
      %p158 = pnand %p156, %p157
      %p159 = pneg %p158
      // Predicated region
      $region9: #{tpu_custom_call.1} parent=5 // pred_check
        _
      $region10: #{tpu_custom_call.1} parent=5 // pred_check_branch
        %161 = sbr.rel (%p158) target = $region12
      $region11: #{tpu_custom_call.1} parent=5 // pred_region
        %s162 = ssub.s32 %s12, 1
        // Predicated region
        $region13: #{tpu_custom_call.1} parent=11 // pred_check
          %p163 = pneg %p59
        $region14: #{tpu_custom_call.1} parent=11 // pred_check_branch
          %165 = sbr.rel (%p163) target = $region16
        $region15: #{tpu_custom_call.1} parent=11 // pred_region
          _
        $region16: #{tpu_custom_call.1} parent=11 // pred_fallthru
          _
        // Predicated region
        $region17: #{tpu_custom_call.1} parent=11 // pred_check
          %p166 = pneg %p80
        $region18: #{tpu_custom_call.1} parent=11 // pred_check_branch
          %168 = sbr.rel (%p166) target = $region20
        $region19: #{tpu_custom_call.1} parent=11 // pred_region
          _
        $region20: #{tpu_custom_call.1} parent=11 // pred_fallthru
          _
        // Predicated region
        $region21: #{tpu_custom_call.1} parent=11 // pred_check
          %p169 = pneg %p101
        $region22: #{tpu_custom_call.1} parent=11 // pred_check_branch
          %171 = sbr.rel (%p169) target = $region24
        $region23: #{tpu_custom_call.1} parent=11 // pred_region
          %173 = vsyncadd [#allocation4], 0
          %s174 = sshll.u32 %s3, 4
          %s175 = int_to_ptr.hbm [resolvable:$true] %s174
          %s176 = sshll.u32 [#allocation3], 4
          %s177 = int_to_ptr.vmem [resolvable:$true] %s176
          %182 = dma.hbm_to_vmem [thread:$0]  %s175, 9216, %s177, [#allocation4], 64, 64, 4
        $region24: #{tpu_custom_call.1} parent=11 // pred_fallthru
          _
        // Predicated region
        $region25: #{tpu_custom_call.1} parent=11 // pred_check
          %p183 = pneg %p122
        $region26: #{tpu_custom_call.1} parent=11 // pred_check_branch
          %185 = sbr.rel (%p183) target = $region28
        $region27: #{tpu_custom_call.1} parent=11 // pred_region
          _
        $region28: #{tpu_custom_call.1} parent=11 // pred_fallthru
          _
      $region12: #{tpu_custom_call.1} parent=5 // pred_fallthru
        _
      %p186 = scmp.lt.s32.totalorder %s12, 2
      // Predicated region
      $region29: #{tpu_custom_call.1} parent=5 // pred_check
        %p187 = pneg %p186
      $region30: #{tpu_custom_call.1} parent=5 // pred_check_branch
        %189 = sbr.rel (%p187) target = $region32
      $region31: #{tpu_custom_call.1} parent=5 // pred_region
        // Predicated region
        $region33: #{tpu_custom_call.1} parent=31 // pred_check
          %p190 = pneg %p32
        $region34: #{tpu_custom_call.1} parent=31 // pred_check_branch
          %192 = sbr.rel (%p190) target = $region36
        $region35: #{tpu_custom_call.1} parent=31 // pred_region
          %p193 = scmp.lt.s32.totalorder %s12, 1
          %s194 = scalar_select %p193, %s12, 1
          %s195 = smul.addr %s194, 32
          %s196 = smul.addr %s195, 4
          %s197 = scalar_lea.vmem %s0, %s196
        $region36: #{tpu_custom_call.1} parent=31 // pred_fallthru
          _
      $region32: #{tpu_custom_call.1} parent=5 // pred_fallthru
        _
      %p198 = scmp.le.s32.totalorder 1, %s12
      %p199 = scmp.lt.s32.totalorder %s12, 3
      %p200 = pnand %p198, %p199
      %p201 = pneg %p200
      // Predicated region
      $region37: #{tpu_custom_call.1} parent=5 // pred_check
        _
      $region38: #{tpu_custom_call.1} parent=5 // pred_check_branch
        %203 = sbr.rel (%p200) target = $region40
      $region39: #{tpu_custom_call.1} parent=5 // pred_region
        %s204 = ssub.s32 %s12, 1
        // Predicated region
        $region41: #{tpu_custom_call.1} parent=39 // pred_check
          %p205 = pneg %p101
        $region42: #{tpu_custom_call.1} parent=39 // pred_check_branch
          %207 = sbr.rel (%p205) target = $region44
        $region43: #{tpu_custom_call.1} parent=39 // pred_region
          %209 = dma.done [#allocation4], 9216
        $region44: #{tpu_custom_call.1} parent=39 // pred_fallthru
          _
        %p210 = scmp.lt.s32.totalorder %s17, 1
        %s211 = scalar_select %p210, %s17, 1
        %s212 = smul.addr %s211, 32
        %s213 = smul.addr %s212, 4
        %s214 = scalar_lea.vmem %s0, %s213
        %p215 = pneg %p38
        %p216 = pneg %p35
        %p217 = pneg %p59
        %p218 = pneg %p56
        %p219 = pneg %p80
        %p220 = pneg %p77
        %p221 = pneg %p101
        %p222 = pneg %p98
        %p223 = pneg %p122
        %p224 = pneg %p119
        %p225 = pneg %p148
        %p226 = pneg %p145
        %p227 = scmp.lt.s32.totalorder %s17, 1
        %s228 = scalar_select %p227, %s17, 1
        %s229 = smul.addr %s228, 32
        %s230 = smul.addr %s229, 8
        %s231 = scalar_lea.vmem %s5, %s230
        %p232 = scmp.lt.s32.totalorder %s17, 1
        %s233 = scalar_select %p232, %s17, 1
        %s234 = smul.addr %s233, 32
        %s235 = smul.addr %s234, 4
        %s236 = scalar_lea.vmem %s0, %s235
        %p237 = scmp.lt.s32.totalorder %s17, 1
        %s238 = scalar_select %p237, %s17, 1
        %s239 = smul.addr %s238, 32
        %s240 = smul.addr %s239, 8
        %s241 = scalar_lea.vmem %s5, %s240
        %243 = vst [vmem:[#allocation2] sm:$0xff] 0
        %244 = vst [vmem:[#allocation2 + $0x8] sm:$0xf] 0
        %245 = vst [vmem:[#allocation2 + $0xc] sm:$0xff] 0
        %246 = vst [vmem:[#allocation2 + $0x14] sm:$0xf] 0
        %s247 = scalar_lea.vmem [#allocation2], 408
        %248 = vst [vmem:[%s247] sm:$0xff] 0
        %249 = vst [vmem:[%s247 + $0x8] sm:$0xf] 0
        %250 = vst [vmem:[%s247 + $0xc] sm:$0xff] 0
        %251 = vst [vmem:[%s247 + $0x14] sm:$0xf] 0
        %v252 = vld [vmem:[%s236] sm:$0xf]
        %v253 = vld [vmem:[%s236 + $0x4] sm:$0xf]
        %v254 = vld [vmem:[%s236 + $0x8] sm:$0xf]
        %v255 = vld [vmem:[%s236 + $0xc] sm:$0xf]
        %v256 = vld [vmem:[%s236 + $0x10] sm:$0xf]
        %v257 = vld [vmem:[%s236 + $0x14] sm:$0xf]
        %v258 = vld [vmem:[%s236 + $0x18] sm:$0xf]
        %v259 = vld [vmem:[%s236 + $0x1c] sm:$0xf]
        %v260 = vld [vmem:[%s236 + $0x20] sm:$0xf]
        %v261 = vld [vmem:[%s236 + $0x24] sm:$0xf]
        %v262 = vld [vmem:[%s236 + $0x28] sm:$0xf]
        %v263 = vld [vmem:[%s236 + $0x2c] sm:$0xf]
        %v264 = vld [vmem:[%s236 + $0x30] sm:$0xf]
        %v265 = vld [vmem:[%s236 + $0x34] sm:$0xf]
        %v266 = vld [vmem:[%s236 + $0x38] sm:$0xf]
        %v267 = vld [vmem:[%s236 + $0x3c] sm:$0xf]
        %v268 = vld [vmem:[%s236 + $0x40] sm:$0xf]
        %v269 = vld [vmem:[%s236 + $0x44] sm:$0xf]
        %v270 = vld [vmem:[%s236 + $0x48] sm:$0xf]
        %v271 = vld [vmem:[%s236 + $0x4c] sm:$0xf]
        %v272 = vld [vmem:[%s236 + $0x50] sm:$0xf]
        %v273 = vld [vmem:[%s236 + $0x54] sm:$0xf]
        %v274 = vld [vmem:[%s236 + $0x58] sm:$0xf]
        %v275 = vld [vmem:[%s236 + $0x5c] sm:$0xf]
        %v276 = vld [vmem:[%s236 + $0x60] sm:$0xf]
        %v277 = vld [vmem:[%s236 + $0x64] sm:$0xf]
        %v278 = vld [vmem:[%s236 + $0x68] sm:$0xf]
        %v279 = vld [vmem:[%s236 + $0x6c] sm:$0xf]
        %v280 = vld [vmem:[%s236 + $0x70] sm:$0xf]
        %v281 = vld [vmem:[%s236 + $0x74] sm:$0xf]
        %v282 = vld [vmem:[%s236 + $0x78] sm:$0xf]
        %v283 = vld [vmem:[%s236 + $0x7c] sm:$0xf]
        %v316 = vunpack.c.l.b16 %v252
        %v317 = vunpack.c.l.b16 %v253
        %v318 = vunpack.c.l.b16 %v254
        %v319 = vunpack.c.l.b16 %v255
        %v320 = vunpack.c.l.b16 %v256
        %v321 = vunpack.c.l.b16 %v257
        %v322 = vunpack.c.l.b16 %v258
        %v323 = vunpack.c.l.b16 %v259
        %v324 = vunpack.c.l.b16 %v260
        %v325 = vunpack.c.l.b16 %v261
        %v326 = vunpack.c.l.b16 %v262
        %v327 = vunpack.c.l.b16 %v263
        %v328 = vunpack.c.l.b16 %v264
        %v329 = vunpack.c.l.b16 %v265
        %v330 = vunpack.c.l.b16 %v266
        %v331 = vunpack.c.l.b16 %v267
        %v332 = vunpack.c.l.b16 %v268
        %v333 = vunpack.c.l.b16 %v269
        %v334 = vunpack.c.l.b16 %v270
        %v335 = vunpack.c.l.b16 %v271
        %v336 = vunpack.c.l.b16 %v272
        %v337 = vunpack.c.l.b16 %v273
        %v338 = vunpack.c.l.b16 %v274
        %v339 = vunpack.c.l.b16 %v275
        %v340 = vunpack.c.l.b16 %v276
        %v341 = vunpack.c.l.b16 %v277
        %v342 = vunpack.c.l.b16 %v278
        %v343 = vunpack.c.l.b16 %v279
        %v344 = vunpack.c.l.b16 %v280
        %v345 = vunpack.c.l.b16 %v281
        %v346 = vunpack.c.l.b16 %v282
        %v347 = vunpack.c.l.b16 %v283
        %v348 = vpack.c.b16 %v317, %v316
        %v349 = vpack.c.b16 %v319, %v318
        %v350 = vpack.c.b16 %v321, %v320
        %v351 = vpack.c.b16 %v323, %v322
        %v352 = vpack.c.b16 %v325, %v324
        %v353 = vpack.c.b16 %v327, %v326
        %v354 = vpack.c.b16 %v329, %v328
        %v355 = vpack.c.b16 %v331, %v330
        %v356 = vpack.c.b16 %v333, %v332
        %v357 = vpack.c.b16 %v335, %v334
        %v358 = vpack.c.b16 %v337, %v336
        %v359 = vpack.c.b16 %v339, %v338
        %v360 = vpack.c.b16 %v341, %v340
        %v361 = vpack.c.b16 %v343, %v342
        %v362 = vpack.c.b16 %v345, %v344
        %v363 = vpack.c.b16 %v347, %v346
        %v365 = vshrl.u32 %v348, 16
        %v367 = vrot.slane %v365, 7
        %v368 = vshll.u32 %v348, 16
        %v370 = vor.u32 %v367, %v368
        %v372 = vshrl.u32 %v349, 16
        %v374 = vrot.slane %v372, 7
        %v375 = vshll.u32 %v349, 16
        %v377 = vor.u32 %v374, %v375
        %v379 = vshrl.u32 %v350, 16
        %v381 = vrot.slane %v379, 7
        %v382 = vshll.u32 %v350, 16
        %v384 = vor.u32 %v381, %v382
        %v386 = vshrl.u32 %v351, 16
        %v388 = vrot.slane %v386, 7
        %v389 = vshll.u32 %v351, 16
        %v391 = vor.u32 %v388, %v389
        %v393 = vshrl.u32 %v352, 16
        %v395 = vrot.slane %v393, 7
        %v396 = vshll.u32 %v352, 16
        %v398 = vor.u32 %v395, %v396
        %v400 = vshrl.u32 %v353, 16
        %v402 = vrot.slane %v400, 7
        %v403 = vshll.u32 %v353, 16
        %v405 = vor.u32 %v402, %v403
        %v407 = vshrl.u32 %v354, 16
        %v409 = vrot.slane %v407, 7
        %v410 = vshll.u32 %v354, 16
        %v412 = vor.u32 %v409, %v410
        %v414 = vshrl.u32 %v355, 16
        %v416 = vrot.slane %v414, 7
        %v417 = vshll.u32 %v355, 16
        %v419 = vor.u32 %v416, %v417
        %v421 = vshrl.u32 %v356, 16
        %v423 = vrot.slane %v421, 7
        %v424 = vshll.u32 %v356, 16
        %v426 = vor.u32 %v423, %v424
        %v428 = vshrl.u32 %v357, 16
        %v430 = vrot.slane %v428, 7
        %v431 = vshll.u32 %v357, 16
        %v433 = vor.u32 %v430, %v431
        %v435 = vshrl.u32 %v358, 16
        %v437 = vrot.slane %v435, 7
        %v438 = vshll.u32 %v358, 16
        %v440 = vor.u32 %v437, %v438
        %v442 = vshrl.u32 %v359, 16
        %v444 = vrot.slane %v442, 7
        %v445 = vshll.u32 %v359, 16
        %v447 = vor.u32 %v444, %v445
        %v449 = vshrl.u32 %v360, 16
        %v451 = vrot.slane %v449, 7
        %v452 = vshll.u32 %v360, 16
        %v454 = vor.u32 %v451, %v452
        %v456 = vshrl.u32 %v361, 16
        %v458 = vrot.slane %v456, 7
        %v459 = vshll.u32 %v361, 16
        %v461 = vor.u32 %v458, %v459
        %v463 = vshrl.u32 %v362, 16
        %v465 = vrot.slane %v463, 7
        %v466 = vshll.u32 %v362, 16
        %v468 = vor.u32 %v465, %v466
        %v470 = vshrl.u32 %v363, 16
        %v472 = vrot.slane %v470, 7
        %v473 = vshll.u32 %v363, 16
        %v475 = vor.u32 %v472, %v473
        %vm492 = vcmask 1040384
        %vm493 = vsmask.f32 256
        %vm494 = vmand %vm492, %vm493
        %v495 = vsel %vm494, 0, %v370
        %v496 = vsel %vm494, 0, %v377
        %v497 = vsel %vm494, 0, %v384
        %v498 = vsel %vm494, 0, %v391
        %v499 = vsel %vm494, 0, %v398
        %v500 = vsel %vm494, 0, %v405
        %v501 = vsel %vm494, 0, %v412
        %v502 = vsel %vm494, 0, %v419
        %v503 = vsel %vm494, 0, %v426
        %v504 = vsel %vm494, 0, %v433
        %v505 = vsel %vm494, 0, %v440
        %v506 = vsel %vm494, 0, %v447
        %v507 = vsel %vm494, 0, %v454
        %v508 = vsel %vm494, 0, %v461
        %v509 = vsel %vm494, 0, %v468
        %v510 = vsel %vm494, 0, %v475
        %v511 = vrot.slane %v368, 1
        %v512 = vor.u32 %v365, %v511
        %v513 = vrot.slane %v375, 1
        %v514 = vor.u32 %v372, %v513
        %v515 = vrot.slane %v382, 1
        %v516 = vor.u32 %v379, %v515
        %v517 = vrot.slane %v389, 1
        %v518 = vor.u32 %v386, %v517
        %v519 = vrot.slane %v396, 1
        %v520 = vor.u32 %v393, %v519
        %v521 = vrot.slane %v403, 1
        %v522 = vor.u32 %v400, %v521
        %v523 = vrot.slane %v410, 1
        %v524 = vor.u32 %v407, %v523
        %v525 = vrot.slane %v417, 1
        %v526 = vor.u32 %v414, %v525
        %v527 = vrot.slane %v424, 1
        %v528 = vor.u32 %v421, %v527
        %v529 = vrot.slane %v431, 1
        %v530 = vor.u32 %v428, %v529
        %v531 = vrot.slane %v438, 1
        %v532 = vor.u32 %v435, %v531
        %v533 = vrot.slane %v445, 1
        %v534 = vor.u32 %v442, %v533
        %v535 = vrot.slane %v452, 1
        %v536 = vor.u32 %v449, %v535
        %v537 = vrot.slane %v459, 1
        %v538 = vor.u32 %v456, %v537
        %v539 = vrot.slane %v466, 1
        %v540 = vor.u32 %v463, %v539
        %v541 = vrot.slane %v473, 1
        %v542 = vor.u32 %v470, %v541
        %vm559 = vcmask 1047552
        %vm560 = vsmask.f32 7424
        %vm561 = vmand %vm559, %vm560
        %v562 = vsel %vm561, %v512, 0
        %v563 = vsel %vm561, %v514, 0
        %v564 = vsel %vm561, %v516, 0
        %v565 = vsel %vm561, %v518, 0
        %v566 = vsel %vm561, %v520, 0
        %v567 = vsel %vm561, %v522, 0
        %v568 = vsel %vm561, %v524, 0
        %v569 = vsel %vm561, %v526, 0
        %v570 = vsel %vm561, %v528, 0
        %v571 = vsel %vm561, %v530, 0
        %v572 = vsel %vm561, %v532, 0
        %v573 = vsel %vm561, %v534, 0
        %v574 = vsel %vm561, %v536, 0
        %v575 = vsel %vm561, %v538, 0
        %v576 = vsel %vm561, %v540, 0
        %v577 = vsel %vm561, %v542, 0
        %578 = vrot.lane.b32.xlu0 %v348, 4
        %v579 = vpop.permute.xlu0 %578
        %580 = vrot.lane.b32.xlu0 %v349, 4
        %v581 = vpop.permute.xlu0 %580
        %582 = vrot.lane.b32.xlu0 %v350, 4
        %v583 = vpop.permute.xlu0 %582
        %584 = vrot.lane.b32.xlu0 %v351, 4
        %v585 = vpop.permute.xlu0 %584
        %586 = vrot.lane.b32.xlu0 %v352, 4
        %v587 = vpop.permute.xlu0 %586
        %588 = vrot.lane.b32.xlu0 %v353, 4
        %v589 = vpop.permute.xlu0 %588
        %590 = vrot.lane.b32.xlu0 %v354, 4
        %v591 = vpop.permute.xlu0 %590
        %592 = vrot.lane.b32.xlu0 %v355, 4
        %v593 = vpop.permute.xlu0 %592
        %594 = vrot.lane.b32.xlu0 %v356, 4
        %v595 = vpop.permute.xlu0 %594
        %596 = vrot.lane.b32.xlu0 %v357, 4
        %v597 = vpop.permute.xlu0 %596
        %598 = vrot.lane.b32.xlu0 %v358, 4
        %v599 = vpop.permute.xlu0 %598
        %600 = vrot.lane.b32.xlu0 %v359, 4
        %v601 = vpop.permute.xlu0 %600
        %602 = vrot.lane.b32.xlu0 %v360, 4
        %v603 = vpop.permute.xlu0 %602
        %604 = vrot.lane.b32.xlu0 %v361, 4
        %v605 = vpop.permute.xlu0 %604
        %606 = vrot.lane.b32.xlu0 %v362, 4
        %v607 = vpop.permute.xlu0 %606
        %608 = vrot.lane.b32.xlu0 %v363, 4
        %v609 = vpop.permute.xlu0 %608
        %626 = vrot.lane.b32.xlu0 %v562, 8
        %v627 = vpop.permute.xlu0 %626
        %628 = vrot.lane.b32.xlu0 %v563, 8
        %v629 = vpop.permute.xlu0 %628
        %630 = vrot.lane.b32.xlu0 %v564, 8
        %v631 = vpop.permute.xlu0 %630
        %632 = vrot.lane.b32.xlu0 %v565, 8
        %v633 = vpop.permute.xlu0 %632
        %634 = vrot.lane.b32.xlu0 %v566, 8
        %v635 = vpop.permute.xlu0 %634
        %636 = vrot.lane.b32.xlu0 %v567, 8
        %v637 = vpop.permute.xlu0 %636
        %638 = vrot.lane.b32.xlu0 %v568, 8
        %v639 = vpop.permute.xlu0 %638
        %640 = vrot.lane.b32.xlu0 %v569, 8
        %v641 = vpop.permute.xlu0 %640
        %642 = vrot.lane.b32.xlu0 %v570, 8
        %v643 = vpop.permute.xlu0 %642
        %644 = vrot.lane.b32.xlu0 %v571, 8
        %v645 = vpop.permute.xlu0 %644
        %646 = vrot.lane.b32.xlu0 %v572, 8
        %v647 = vpop.permute.xlu0 %646
        %648 = vrot.lane.b32.xlu0 %v573, 8
        %v649 = vpop.permute.xlu0 %648
        %650 = vrot.lane.b32.xlu0 %v574, 8
        %v651 = vpop.permute.xlu0 %650
        %652 = vrot.lane.b32.xlu0 %v575, 8
        %v653 = vpop.permute.xlu0 %652
        %654 = vrot.lane.b32.xlu0 %v576, 8
        %v655 = vpop.permute.xlu0 %654
        %656 = vrot.lane.b32.xlu0 %v577, 8
        %v657 = vpop.permute.xlu0 %656
        %vm658 = vcmask 31744
        %v661 = vsel %vm658, %v495, %v579
        %v664 = vsel %vm658, %v496, %v581
        %v667 = vsel %vm658, %v497, %v583
        %v670 = vsel %vm658, %v498, %v585
        %v673 = vsel %vm658, %v499, %v587
        %v676 = vsel %vm658, %v500, %v589
        %v679 = vsel %vm658, %v501, %v591
        %v682 = vsel %vm658, %v502, %v593
        %v685 = vsel %vm658, %v503, %v595
        %v688 = vsel %vm658, %v504, %v597
        %v691 = vsel %vm658, %v505, %v599
        %v694 = vsel %vm658, %v506, %v601
        %v697 = vsel %vm658, %v507, %v603
        %v700 = vsel %vm658, %v508, %v605
        %v703 = vsel %vm658, %v509, %v607
        %v706 = vsel %vm658, %v510, %v609
        %vm707 = vcmask 64512
        %v709 = vsel %vm707, %v661, %v627
        %v711 = vsel %vm707, %v664, %v629
        %v713 = vsel %vm707, %v667, %v631
        %v715 = vsel %vm707, %v670, %v633
        %v717 = vsel %vm707, %v673, %v635
        %v719 = vsel %vm707, %v676, %v637
        %v721 = vsel %vm707, %v679, %v639
        %v723 = vsel %vm707, %v682, %v641
        %v725 = vsel %vm707, %v685, %v643
        %v727 = vsel %vm707, %v688, %v645
        %v729 = vsel %vm707, %v691, %v647
        %v731 = vsel %vm707, %v694, %v649
        %v733 = vsel %vm707, %v697, %v651
        %v735 = vsel %vm707, %v700, %v653
        %v737 = vsel %vm707, %v703, %v655
        %v739 = vsel %vm707, %v706, %v657
        %756 = vrot.lane.b32.xlu0 %v709, 12
        %v757 = vpop.permute.xlu0 %756
        %758 = vrot.lane.b32.xlu0 %v711, 12
        %v759 = vpop.permute.xlu0 %758
        %760 = vrot.lane.b32.xlu0 %v713, 12
        %v761 = vpop.permute.xlu0 %760
        %762 = vrot.lane.b32.xlu0 %v715, 12
        %v763 = vpop.permute.xlu0 %762
        %764 = vrot.lane.b32.xlu0 %v717, 12
        %v765 = vpop.permute.xlu0 %764
        %766 = vrot.lane.b32.xlu0 %v719, 12
        %v767 = vpop.permute.xlu0 %766
        %768 = vrot.lane.b32.xlu0 %v721, 12
        %v769 = vpop.permute.xlu0 %768
        %770 = vrot.lane.b32.xlu0 %v723, 12
        %v771 = vpop.permute.xlu0 %770
        %772 = vrot.lane.b32.xlu0 %v725, 12
        %v773 = vpop.permute.xlu0 %772
        %774 = vrot.lane.b32.xlu0 %v727, 12
        %v775 = vpop.permute.xlu0 %774
        %776 = vrot.lane.b32.xlu0 %v729, 12
        %v777 = vpop.permute.xlu0 %776
        %778 = vrot.lane.b32.xlu0 %v731, 12
        %v779 = vpop.permute.xlu0 %778
        %780 = vrot.lane.b32.xlu0 %v733, 12
        %v781 = vpop.permute.xlu0 %780
        %782 = vrot.lane.b32.xlu0 %v735, 12
        %v783 = vpop.permute.xlu0 %782
        %784 = vrot.lane.b32.xlu0 %v737, 12
        %v785 = vpop.permute.xlu0 %784
        %786 = vrot.lane.b32.xlu0 %v739, 12
        %v787 = vpop.permute.xlu0 %786
        %789 = vrot.lane.b32.xlu0 %v711, 24
        %v790 = vpop.permute.xlu0 %789
        %791 = vrot.lane.b32.xlu0 %v713, 24
        %v792 = vpop.permute.xlu0 %791
        %793 = vrot.lane.b32.xlu0 %v715, 24
        %v794 = vpop.permute.xlu0 %793
        %795 = vrot.lane.b32.xlu0 %v717, 24
        %v796 = vpop.permute.xlu0 %795
        %797 = vrot.lane.b32.xlu0 %v719, 24
        %v798 = vpop.permute.xlu0 %797
        %799 = vrot.lane.b32.xlu0 %v721, 24
        %v800 = vpop.permute.xlu0 %799
        %801 = vrot.lane.b32.xlu0 %v723, 24
        %v802 = vpop.permute.xlu0 %801
        %803 = vrot.lane.b32.xlu0 %v725, 24
        %v804 = vpop.permute.xlu0 %803
        %805 = vrot.lane.b32.xlu0 %v727, 24
        %v806 = vpop.permute.xlu0 %805
        %807 = vrot.lane.b32.xlu0 %v729, 24
        %v808 = vpop.permute.xlu0 %807
        %809 = vrot.lane.b32.xlu0 %v731, 24
        %v810 = vpop.permute.xlu0 %809
        %811 = vrot.lane.b32.xlu0 %v733, 24
        %v812 = vpop.permute.xlu0 %811
        %813 = vrot.lane.b32.xlu0 %v735, 24
        %v814 = vpop.permute.xlu0 %813
        %815 = vrot.lane.b32.xlu0 %v737, 24
        %v816 = vpop.permute.xlu0 %815
        %817 = vrot.lane.b32.xlu0 %v739, 24
        %v818 = vpop.permute.xlu0 %817
        %819 = vrot.lane.b32.xlu0 0, 24
        %v820 = vpop.permute.xlu0 %819
        %vm821 = vcmask 97280
        %v824 = vsel %vm821, 0, %v757
        %v826 = vsel %vm821, %v709, %v759
        %v828 = vsel %vm821, %v711, %v761
        %v830 = vsel %vm821, %v713, %v763
        %v832 = vsel %vm821, %v715, %v765
        %v834 = vsel %vm821, %v717, %v767
        %v836 = vsel %vm821, %v719, %v769
        %v838 = vsel %vm821, %v721, %v771
        %v840 = vsel %vm821, %v723, %v773
        %v842 = vsel %vm821, %v725, %v775
        %v844 = vsel %vm821, %v727, %v777
        %v846 = vsel %vm821, %v729, %v779
        %v848 = vsel %vm821, %v731, %v781
        %v850 = vsel %vm821, %v733, %v783
        %v852 = vsel %vm821, %v735, %v785
        %v854 = vsel %vm821, %v737, %v787
        %vm855 = vcmask 195584
        %v857 = vsel %vm855, %v824, %v790
        %v859 = vsel %vm855, %v826, %v792
        %v861 = vsel %vm855, %v828, %v794
        %v863 = vsel %vm855, %v830, %v796
        %v865 = vsel %vm855, %v832, %v798
        %v867 = vsel %vm855, %v834, %v800
        %v869 = vsel %vm855, %v836, %v802
        %v871 = vsel %vm855, %v838, %v804
        %v873 = vsel %vm855, %v840, %v806
        %v875 = vsel %vm855, %v842, %v808
        %v877 = vsel %vm855, %v844, %v810
        %v879 = vsel %vm855, %v846, %v812
        %v881 = vsel %vm855, %v848, %v814
        %v883 = vsel %vm855, %v850, %v816
        %v885 = vsel %vm855, %v852, %v818
        %v887 = vsel %vm855, %v854, %v820
        %v888 = vld [vmem:[%s1] sm:$0xf]
        %v889 = vld [vmem:[%s1 + $0x4] sm:$0xf]
        %v890 = vld [vmem:[%s1 + $0x8] sm:$0xf]
        %v891 = vld [vmem:[%s1 + $0xc] sm:$0xf]
        %v892 = vld [vmem:[%s1 + $0x10] sm:$0x3]
        %v898 = vunpack.c.l.b16 %v888
        %v899 = vunpack.c.l.b16 %v889
        %v900 = vunpack.c.l.b16 %v890
        %v901 = vunpack.c.l.b16 %v891
        %v902 = vunpack.c.l.b16 %v892
        %v903 = vpack.c.b16 %v899, %v898
        %v904 = vpack.c.b16 %v901, %v900
        %v905 = vpack.c.b16 %v902, %v902
        %vm908 = vcmask 293888
        %v909 = vsel %vm908, %v857, 0
        %v911 = vsel %vm908, %v859, 0
        %v913 = vsel %vm908, %v861, 0
        %v915 = vsel %vm908, %v863, 0
        %v917 = vsel %vm908, %v865, 0
        %v919 = vsel %vm908, %v867, 0
        %v921 = vsel %vm908, %v869, 0
        %v923 = vsel %vm908, %v871, 0
        %v925 = vsel %vm908, %v873, 0
        %v927 = vsel %vm908, %v875, 0
        %v929 = vsel %vm908, %v877, 0
        %v931 = vsel %vm908, %v879, 0
        %v933 = vsel %vm908, %v881, 0
        %v935 = vsel %vm908, %v883, 0
        %v937 = vsel %vm908, %v885, 0
        %v939 = vsel %vm908, %v887, 0
        %vm941 = vcmask 1041408
        %v943 = vsel %vm941, %v905, 0
        %945 = vmatpush.bf16.msra.mxu0 0
        %946 = vmatpush.bf16.msra.mxu0 0
        %947 = vmatpush.bf16.msra.mxu0 0
        %948 = vmatpush.bf16.msra.mxu0 0
        %949 = vmatpush.bf16.msra.mxu0 0
        %950 = vmatpush.bf16.msra.mxu0 %v943
        %951 = vmatpush.bf16.msra.mxu0 %v904
        %952 = vmatpush.bf16.msra.mxu0 %v903
        %953 = vmatmul.bf16.gmra.mxu0 %v909
        %v954 = vpop.f32.mrf.mxu0
        %v955 = vadd.f32 0.0, %v954
        %v956 = vpop.f32.mrf.mxu0
        %v957 = vadd.f32 0.0, %v956
        %958 = vmatmul.bf16.gmra.mxu0 %v911
        %v959 = vpop.f32.mrf.mxu0
        %v960 = vadd.f32 0.0, %v959
        %v961 = vpop.f32.mrf.mxu0
        %v962 = vadd.f32 0.0, %v961
        %963 = vmatmul.bf16.gmra.mxu0 %v913
        %v964 = vpop.f32.mrf.mxu0
        %v965 = vadd.f32 0.0, %v964
        %v966 = vpop.f32.mrf.mxu0
        %v967 = vadd.f32 0.0, %v966
        %968 = vmatmul.bf16.gmra.mxu0 %v915
        %v969 = vpop.f32.mrf.mxu0
        %v970 = vadd.f32 0.0, %v969
        %v971 = vpop.f32.mrf.mxu0
        %v972 = vadd.f32 0.0, %v971
        %973 = vmatmul.bf16.gmra.mxu0 %v917
        %v974 = vpop.f32.mrf.mxu0
        %v975 = vadd.f32 0.0, %v974
        %v976 = vpop.f32.mrf.mxu0
        %v977 = vadd.f32 0.0, %v976
        %978 = vmatmul.bf16.gmra.mxu0 %v919
        %v979 = vpop.f32.mrf.mxu0
        %v980 = vadd.f32 0.0, %v979
        %v981 = vpop.f32.mrf.mxu0
        %v982 = vadd.f32 0.0, %v981
        %983 = vmatmul.bf16.gmra.mxu0 %v921
        %v984 = vpop.f32.mrf.mxu0
        %v985 = vadd.f32 0.0, %v984
        %v986 = vpop.f32.mrf.mxu0
        %v987 = vadd.f32 0.0, %v986
        %988 = vmatmul.bf16.gmra.mxu0 %v923
        %v989 = vpop.f32.mrf.mxu0
        %v990 = vadd.f32 0.0, %v989
        %v991 = vpop.f32.mrf.mxu0
        %v992 = vadd.f32 0.0, %v991
        %993 = vmatmul.bf16.gmra.mxu0 %v925
        %v994 = vpop.f32.mrf.mxu0
        %v995 = vadd.f32 0.0, %v994
        %v996 = vpop.f32.mrf.mxu0
        %v997 = vadd.f32 0.0, %v996
        %998 = vmatmul.bf16.gmra.mxu0 %v927
        %v999 = vpop.f32.mrf.mxu0
        %v1000 = vadd.f32 0.0, %v999
        %v1001 = vpop.f32.mrf.mxu0
        %v1002 = vadd.f32 0.0, %v1001
        %1003 = vmatmul.bf16.gmra.mxu0 %v929
        %v1004 = vpop.f32.mrf.mxu0
        %v1005 = vadd.f32 0.0, %v1004
        %v1006 = vpop.f32.mrf.mxu0
        %v1007 = vadd.f32 0.0, %v1006
        %1008 = vmatmul.bf16.gmra.mxu0 %v931
        %v1009 = vpop.f32.mrf.mxu0
        %v1010 = vadd.f32 0.0, %v1009
        %v1011 = vpop.f32.mrf.mxu0
        %v1012 = vadd.f32 0.0, %v1011
        %1013 = vmatmul.bf16.gmra.mxu0 %v933
        %v1014 = vpop.f32.mrf.mxu0
        %v1015 = vadd.f32 0.0, %v1014
        %v1016 = vpop.f32.mrf.mxu0
        %v1017 = vadd.f32 0.0, %v1016
        %1018 = vmatmul.bf16.gmra.mxu0 %v935
        %v1019 = vpop.f32.mrf.mxu0
        %v1020 = vadd.f32 0.0, %v1019
        %v1021 = vpop.f32.mrf.mxu0
        %v1022 = vadd.f32 0.0, %v1021
        %1023 = vmatmul.bf16.gmra.mxu0 %v937
        %v1024 = vpop.f32.mrf.mxu0
        %v1025 = vadd.f32 0.0, %v1024
        %v1026 = vpop.f32.mrf.mxu0
        %v1027 = vadd.f32 0.0, %v1026
        %1028 = vmatmul.bf16.gmra.mxu0 %v939
        %v1029 = vpop.f32.mrf.mxu0
        %v1030 = vadd.f32 0.0, %v1029
        %v1031 = vpop.f32.mrf.mxu0
        %v1032 = vadd.f32 0.0, %v1031
        %1033 = vdwg.mxu0
        %v1034 = vld [vmem:[%s2] sm:$0x1]
        %v1035 = vld [vmem:[%s2 + $0x1] sm:$0x1]
        %v1036 = vperm.slane %v1034, 0
        %v1037 = vmul.f32 %v955, %v1036
        %v1038 = vmul.f32 %v957, %v1036
        %v1039 = vmul.f32 %v960, %v1036
        %v1040 = vmul.f32 %v962, %v1036
        %v1041 = vmul.f32 %v965, %v1036
        %v1042 = vmul.f32 %v967, %v1036
        %v1043 = vmul.f32 %v970, %v1036
        %v1044 = vmul.f32 %v972, %v1036
        %v1045 = vmul.f32 %v975, %v1036
        %v1046 = vmul.f32 %v977, %v1036
        %v1047 = vmul.f32 %v980, %v1036
        %v1048 = vmul.f32 %v982, %v1036
        %v1049 = vmul.f32 %v985, %v1036
        %v1050 = vmul.f32 %v987, %v1036
        %v1051 = vmul.f32 %v990, %v1036
        %v1052 = vmul.f32 %v992, %v1036
        %v1053 = vmul.f32 %v995, %v1036
        %v1054 = vmul.f32 %v997, %v1036
        %v1055 = vmul.f32 %v1000, %v1036
        %v1056 = vmul.f32 %v1002, %v1036
        %v1057 = vmul.f32 %v1005, %v1036
        %v1058 = vmul.f32 %v1007, %v1036
        %v1059 = vmul.f32 %v1010, %v1036
        %v1060 = vmul.f32 %v1012, %v1036
        %v1061 = vmul.f32 %v1015, %v1036
        %v1062 = vmul.f32 %v1017, %v1036
        %v1063 = vmul.f32 %v1020, %v1036
        %v1064 = vmul.f32 %v1022, %v1036
        %v1065 = vmul.f32 %v1025, %v1036
        %v1066 = vmul.f32 %v1027, %v1036
        %v1067 = vmul.f32 %v1030, %v1036
        %v1068 = vmul.f32 %v1032, %v1036
        %v1069 = vperm.slane %v1035, 0
        %v1070 = vadd.f32 %v1037, %v1069
        %v1071 = vadd.f32 %v1038, %v1069
        %v1072 = vadd.f32 %v1039, %v1069
        %v1073 = vadd.f32 %v1040, %v1069
        %v1074 = vadd.f32 %v1041, %v1069
        %v1075 = vadd.f32 %v1042, %v1069
        %v1076 = vadd.f32 %v1043, %v1069
        %v1077 = vadd.f32 %v1044, %v1069
        %v1078 = vadd.f32 %v1045, %v1069
        %v1079 = vadd.f32 %v1046, %v1069
        %v1080 = vadd.f32 %v1047, %v1069
        %v1081 = vadd.f32 %v1048, %v1069
        %v1082 = vadd.f32 %v1049, %v1069
        %v1083 = vadd.f32 %v1050, %v1069
        %v1084 = vadd.f32 %v1051, %v1069
        %v1085 = vadd.f32 %v1052, %v1069
        %v1086 = vadd.f32 %v1053, %v1069
        %v1087 = vadd.f32 %v1054, %v1069
        %v1088 = vadd.f32 %v1055, %v1069
        %v1089 = vadd.f32 %v1056, %v1069
        %v1090 = vadd.f32 %v1057, %v1069
        %v1091 = vadd.f32 %v1058, %v1069
        %v1092 = vadd.f32 %v1059, %v1069
        %v1093 = vadd.f32 %v1060, %v1069
        %v1094 = vadd.f32 %v1061, %v1069
        %v1095 = vadd.f32 %v1062, %v1069
        %v1096 = vadd.f32 %v1063, %v1069
        %v1097 = vadd.f32 %v1064, %v1069
        %v1098 = vadd.f32 %v1065, %v1069
        %v1099 = vadd.f32 %v1066, %v1069
        %v1100 = vadd.f32 %v1067, %v1069
        %v1101 = vadd.f32 %v1068, %v1069
        %v1102 = vmax.f32 %v1070, 0.0
        %v1103 = vmax.f32 %v1071, 0.0
        %v1104 = vmax.f32 %v1072, 0.0
        %v1105 = vmax.f32 %v1073, 0.0
        %v1106 = vmax.f32 %v1074, 0.0
        %v1107 = vmax.f32 %v1075, 0.0
        %v1108 = vmax.f32 %v1076, 0.0
        %v1109 = vmax.f32 %v1077, 0.0
        %v1110 = vmax.f32 %v1078, 0.0
        %v1111 = vmax.f32 %v1079, 0.0
        %v1112 = vmax.f32 %v1080, 0.0
        %v1113 = vmax.f32 %v1081, 0.0
        %v1114 = vmax.f32 %v1082, 0.0
        %v1115 = vmax.f32 %v1083, 0.0
        %v1116 = vmax.f32 %v1084, 0.0
        %v1117 = vmax.f32 %v1085, 0.0
        %v1118 = vmax.f32 %v1086, 0.0
        %v1119 = vmax.f32 %v1087, 0.0
        %v1120 = vmax.f32 %v1088, 0.0
        %v1121 = vmax.f32 %v1089, 0.0
        %v1122 = vmax.f32 %v1090, 0.0
        %v1123 = vmax.f32 %v1091, 0.0
        %v1124 = vmax.f32 %v1092, 0.0
        %v1125 = vmax.f32 %v1093, 0.0
        %v1126 = vmax.f32 %v1094, 0.0
        %v1127 = vmax.f32 %v1095, 0.0
        %v1128 = vmax.f32 %v1096, 0.0
        %v1129 = vmax.f32 %v1097, 0.0
        %v1130 = vmax.f32 %v1098, 0.0
        %v1131 = vmax.f32 %v1099, 0.0
        %v1132 = vmax.f32 %v1100, 0.0
        %v1133 = vmax.f32 %v1101, 0.0
        %v1134 = vpack.c.bf16 %v1102, %v1102
        %v1135 = vpack.c.bf16 %v1103, %v1103
        %v1136 = vpack.c.bf16 %v1104, %v1104
        %v1137 = vpack.c.bf16 %v1105, %v1105
        %v1138 = vpack.c.bf16 %v1106, %v1106
        %v1139 = vpack.c.bf16 %v1107, %v1107
        %v1140 = vpack.c.bf16 %v1108, %v1108
        %v1141 = vpack.c.bf16 %v1109, %v1109
        %v1142 = vpack.c.bf16 %v1110, %v1110
        %v1143 = vpack.c.bf16 %v1111, %v1111
        %v1144 = vpack.c.bf16 %v1112, %v1112
        %v1145 = vpack.c.bf16 %v1113, %v1113
        %v1146 = vpack.c.bf16 %v1114, %v1114
        %v1147 = vpack.c.bf16 %v1115, %v1115
        %v1148 = vpack.c.bf16 %v1116, %v1116
        %v1149 = vpack.c.bf16 %v1117, %v1117
        %v1150 = vpack.c.bf16 %v1118, %v1118
        %v1151 = vpack.c.bf16 %v1119, %v1119
        %v1152 = vpack.c.bf16 %v1120, %v1120
        %v1153 = vpack.c.bf16 %v1121, %v1121
        %v1154 = vpack.c.bf16 %v1122, %v1122
        %v1155 = vpack.c.bf16 %v1123, %v1123
        %v1156 = vpack.c.bf16 %v1124, %v1124
        %v1157 = vpack.c.bf16 %v1125, %v1125
        %v1158 = vpack.c.bf16 %v1126, %v1126
        %v1159 = vpack.c.bf16 %v1127, %v1127
        %v1160 = vpack.c.bf16 %v1128, %v1128
        %v1161 = vpack.c.bf16 %v1129, %v1129
        %v1162 = vpack.c.bf16 %v1130, %v1130
        %v1163 = vpack.c.bf16 %v1131, %v1131
        %v1164 = vpack.c.bf16 %v1132, %v1132
        %v1165 = vpack.c.bf16 %v1133, %v1133
        %v1198 = vunpack.c.l.b16 %v1134
        %v1199 = vunpack.c.l.b16 %v1135
        %v1200 = vunpack.c.l.b16 %v1136
        %v1201 = vunpack.c.l.b16 %v1137
        %v1202 = vunpack.c.l.b16 %v1138
        %v1203 = vunpack.c.l.b16 %v1139
        %v1204 = vunpack.c.l.b16 %v1140
        %v1205 = vunpack.c.l.b16 %v1141
        %v1206 = vunpack.c.l.b16 %v1142
        %v1207 = vunpack.c.l.b16 %v1143
        %v1208 = vunpack.c.l.b16 %v1144
        %v1209 = vunpack.c.l.b16 %v1145
        %v1210 = vunpack.c.l.b16 %v1146
        %v1211 = vunpack.c.l.b16 %v1147
        %v1212 = vunpack.c.l.b16 %v1148
        %v1213 = vunpack.c.l.b16 %v1149
        %v1214 = vunpack.c.l.b16 %v1150
        %v1215 = vunpack.c.l.b16 %v1151
        %v1216 = vunpack.c.l.b16 %v1152
        %v1217 = vunpack.c.l.b16 %v1153
        %v1218 = vunpack.c.l.b16 %v1154
        %v1219 = vunpack.c.l.b16 %v1155
        %v1220 = vunpack.c.l.b16 %v1156
        %v1221 = vunpack.c.l.b16 %v1157
        %v1222 = vunpack.c.l.b16 %v1158
        %v1223 = vunpack.c.l.b16 %v1159
        %v1224 = vunpack.c.l.b16 %v1160
        %v1225 = vunpack.c.l.b16 %v1161
        %v1226 = vunpack.c.l.b16 %v1162
        %v1227 = vunpack.c.l.b16 %v1163
        %v1228 = vunpack.c.l.b16 %v1164
        %v1229 = vunpack.c.l.b16 %v1165
        %v1230 = vpack.c.b16 %v1199, %v1198
        %v1231 = vpack.c.b16 %v1201, %v1200
        %v1232 = vpack.c.b16 %v1203, %v1202
        %v1233 = vpack.c.b16 %v1205, %v1204
        %v1234 = vpack.c.b16 %v1207, %v1206
        %v1235 = vpack.c.b16 %v1209, %v1208
        %v1236 = vpack.c.b16 %v1211, %v1210
        %v1237 = vpack.c.b16 %v1213, %v1212
        %v1238 = vpack.c.b16 %v1215, %v1214
        %v1239 = vpack.c.b16 %v1217, %v1216
        %v1240 = vpack.c.b16 %v1219, %v1218
        %v1241 = vpack.c.b16 %v1221, %v1220
        %v1242 = vpack.c.b16 %v1223, %v1222
        %v1243 = vpack.c.b16 %v1225, %v1224
        %v1244 = vpack.c.b16 %v1227, %v1226
        %v1245 = vpack.c.b16 %v1229, %v1228
        %v1247 = vshrl.u32 %v1230, 16
        %v1249 = vrot.slane %v1247, 7
        %v1250 = vshll.u32 %v1230, 16
        %v1252 = vor.u32 %v1249, %v1250
        %v1254 = vshrl.u32 %v1231, 16
        %v1256 = vrot.slane %v1254, 7
        %v1257 = vshll.u32 %v1231, 16
        %v1259 = vor.u32 %v1256, %v1257
        %v1261 = vshrl.u32 %v1232, 16
        %v1263 = vrot.slane %v1261, 7
        %v1264 = vshll.u32 %v1232, 16
        %v1266 = vor.u32 %v1263, %v1264
        %v1268 = vshrl.u32 %v1233, 16
        %v1270 = vrot.slane %v1268, 7
        %v1271 = vshll.u32 %v1233, 16
        %v1273 = vor.u32 %v1270, %v1271
        %v1275 = vshrl.u32 %v1234, 16
        %v1277 = vrot.slane %v1275, 7
        %v1278 = vshll.u32 %v1234, 16
        %v1280 = vor.u32 %v1277, %v1278
        %v1282 = vshrl.u32 %v1235, 16
        %v1284 = vrot.slane %v1282, 7
        %v1285 = vshll.u32 %v1235, 16
        %v1287 = vor.u32 %v1284, %v1285
        %v1289 = vshrl.u32 %v1236, 16
        %v1291 = vrot.slane %v1289, 7
        %v1292 = vshll.u32 %v1236, 16
        %v1294 = vor.u32 %v1291, %v1292
        %v1296 = vshrl.u32 %v1237, 16
        %v1298 = vrot.slane %v1296, 7
        %v1299 = vshll.u32 %v1237, 16
        %v1301 = vor.u32 %v1298, %v1299
        %v1303 = vshrl.u32 %v1238, 16
        %v1305 = vrot.slane %v1303, 7
        %v1306 = vshll.u32 %v1238, 16
        %v1308 = vor.u32 %v1305, %v1306
        %v1310 = vshrl.u32 %v1239, 16
        %v1312 = vrot.slane %v1310, 7
        %v1313 = vshll.u32 %v1239, 16
        %v1315 = vor.u32 %v1312, %v1313
        %v1317 = vshrl.u32 %v1240, 16
        %v1319 = vrot.slane %v1317, 7
        %v1320 = vshll.u32 %v1240, 16
        %v1322 = vor.u32 %v1319, %v1320
        %v1324 = vshrl.u32 %v1241, 16
        %v1326 = vrot.slane %v1324, 7
        %v1327 = vshll.u32 %v1241, 16
        %v1329 = vor.u32 %v1326, %v1327
        %v1331 = vshrl.u32 %v1242, 16
        %v1333 = vrot.slane %v1331, 7
        %v1334 = vshll.u32 %v1242, 16
        %v1336 = vor.u32 %v1333, %v1334
        %v1338 = vshrl.u32 %v1243, 16
        %v1340 = vrot.slane %v1338, 7
        %v1341 = vshll.u32 %v1243, 16
        %v1343 = vor.u32 %v1340, %v1341
        %v1345 = vshrl.u32 %v1244, 16
        %v1347 = vrot.slane %v1345, 7
        %v1348 = vshll.u32 %v1244, 16
        %v1350 = vor.u32 %v1347, %v1348
        %v1352 = vshrl.u32 %v1245, 16
        %v1354 = vrot.slane %v1352, 7
        %v1355 = vshll.u32 %v1245, 16
        %v1357 = vor.u32 %v1354, %v1355
        %v1374 = vsel %vm494, 0, %v1252
        %v1375 = vsel %vm494, 0, %v1259
        %v1376 = vsel %vm494, 0, %v1266
        %v1377 = vsel %vm494, 0, %v1273
        %v1378 = vsel %vm494, 0, %v1280
        %v1379 = vsel %vm494, 0, %v1287
        %v1380 = vsel %vm494, 0, %v1294
        %v1381 = vsel %vm494, 0, %v1301
        %v1382 = vsel %vm494, 0, %v1308
        %v1383 = vsel %vm494, 0, %v1315
        %v1384 = vsel %vm494, 0, %v1322
        %v1385 = vsel %vm494, 0, %v1329
        %v1386 = vsel %vm494, 0, %v1336
        %v1387 = vsel %vm494, 0, %v1343
        %v1388 = vsel %vm494, 0, %v1350
        %v1389 = vsel %vm494, 0, %v1357
        %v1390 = vrot.slane %v1250, 1
        %v1391 = vor.u32 %v1247, %v1390
        %v1392 = vrot.slane %v1257, 1
        %v1393 = vor.u32 %v1254, %v1392
        %v1394 = vrot.slane %v1264, 1
        %v1395 = vor.u32 %v1261, %v1394
        %v1396 = vrot.slane %v1271, 1
        %v1397 = vor.u32 %v1268, %v1396
        %v1398 = vrot.slane %v1278, 1
        %v1399 = vor.u32 %v1275, %v1398
        %v1400 = vrot.slane %v1285, 1
        %v1401 = vor.u32 %v1282, %v1400
        %v1402 = vrot.slane %v1292, 1
        %v1403 = vor.u32 %v1289, %v1402
        %v1404 = vrot.slane %v1299, 1
        %v1405 = vor.u32 %v1296, %v1404
        %v1406 = vrot.slane %v1306, 1
        %v1407 = vor.u32 %v1303, %v1406
        %v1408 = vrot.slane %v1313, 1
        %v1409 = vor.u32 %v1310, %v1408
        %v1410 = vrot.slane %v1320, 1
        %v1411 = vor.u32 %v1317, %v1410
        %v1412 = vrot.slane %v1327, 1
        %v1413 = vor.u32 %v1324, %v1412
        %v1414 = vrot.slane %v1334, 1
        %v1415 = vor.u32 %v1331, %v1414
        %v1416 = vrot.slane %v1341, 1
        %v1417 = vor.u32 %v1338, %v1416
        %v1418 = vrot.slane %v1348, 1
        %v1419 = vor.u32 %v1345, %v1418
        %v1420 = vrot.slane %v1355, 1
        %v1421 = vor.u32 %v1352, %v1420
        %v1438 = vsel %vm561, %v1391, 0
        %v1439 = vsel %vm561, %v1393, 0
        %v1440 = vsel %vm561, %v1395, 0
        %v1441 = vsel %vm561, %v1397, 0
        %v1442 = vsel %vm561, %v1399, 0
        %v1443 = vsel %vm561, %v1401, 0
        %v1444 = vsel %vm561, %v1403, 0
        %v1445 = vsel %vm561, %v1405, 0
        %v1446 = vsel %vm561, %v1407, 0
        %v1447 = vsel %vm561, %v1409, 0
        %v1448 = vsel %vm561, %v1411, 0
        %v1449 = vsel %vm561, %v1413, 0
        %v1450 = vsel %vm561, %v1415, 0
        %v1451 = vsel %vm561, %v1417, 0
        %v1452 = vsel %vm561, %v1419, 0
        %v1453 = vsel %vm561, %v1421, 0
        %v1486 = vunpack.c.l.b16 %v1374
        %v1487 = vunpack.c.l.b16 %v1438
        %v1488 = vunpack.c.h.b16 %v1374
        %v1489 = vunpack.c.h.b16 %v1438
        %v1490 = vunpack.c.l.b16 %v1375
        %v1491 = vunpack.c.l.b16 %v1439
        %v1492 = vunpack.c.h.b16 %v1375
        %v1493 = vunpack.c.h.b16 %v1439
        %v1494 = vunpack.c.l.b16 %v1376
        %v1495 = vunpack.c.l.b16 %v1440
        %v1496 = vunpack.c.h.b16 %v1376
        %v1497 = vunpack.c.h.b16 %v1440
        %v1498 = vunpack.c.l.b16 %v1377
        %v1499 = vunpack.c.l.b16 %v1441
        %v1500 = vunpack.c.h.b16 %v1377
        %v1501 = vunpack.c.h.b16 %v1441
        %v1502 = vunpack.c.l.b16 %v1378
        %v1503 = vunpack.c.l.b16 %v1442
        %v1504 = vunpack.c.h.b16 %v1378
        %v1505 = vunpack.c.h.b16 %v1442
        %v1506 = vunpack.c.l.b16 %v1379
        %v1507 = vunpack.c.l.b16 %v1443
        %v1508 = vunpack.c.h.b16 %v1379
        %v1509 = vunpack.c.h.b16 %v1443
        %v1510 = vunpack.c.l.b16 %v1380
        %v1511 = vunpack.c.l.b16 %v1444
        %v1512 = vunpack.c.h.b16 %v1380
        %v1513 = vunpack.c.h.b16 %v1444
        %v1514 = vunpack.c.l.b16 %v1381
        %v1515 = vunpack.c.l.b16 %v1445
        %v1516 = vunpack.c.h.b16 %v1381
        %v1517 = vunpack.c.h.b16 %v1445
        %v1518 = vunpack.c.l.b16 %v1382
        %v1519 = vunpack.c.l.b16 %v1446
        %v1520 = vunpack.c.h.b16 %v1382
        %v1521 = vunpack.c.h.b16 %v1446
        %v1522 = vunpack.c.l.b16 %v1383
        %v1523 = vunpack.c.l.b16 %v1447
        %v1524 = vunpack.c.h.b16 %v1383
        %v1525 = vunpack.c.h.b16 %v1447
        %v1526 = vunpack.c.l.b16 %v1384
        %v1527 = vunpack.c.l.b16 %v1448
        %v1528 = vunpack.c.h.b16 %v1384
        %v1529 = vunpack.c.h.b16 %v1448
        %v1530 = vunpack.c.l.b16 %v1385
        %v1531 = vunpack.c.l.b16 %v1449
        %v1532 = vunpack.c.h.b16 %v1385
        %v1533 = vunpack.c.h.b16 %v1449
        %v1534 = vunpack.c.l.b16 %v1386
        %v1535 = vunpack.c.l.b16 %v1450
        %v1536 = vunpack.c.h.b16 %v1386
        %v1537 = vunpack.c.h.b16 %v1450
        %v1538 = vunpack.c.l.b16 %v1387
        %v1539 = vunpack.c.l.b16 %v1451
        %v1540 = vunpack.c.h.b16 %v1387
        %v1541 = vunpack.c.h.b16 %v1451
        %v1542 = vunpack.c.l.b16 %v1388
        %v1543 = vunpack.c.l.b16 %v1452
        %v1544 = vunpack.c.h.b16 %v1388
        %v1545 = vunpack.c.h.b16 %v1452
        %v1546 = vunpack.c.l.b16 %v1389
        %v1547 = vunpack.c.l.b16 %v1453
        %v1548 = vunpack.c.h.b16 %v1389
        %v1549 = vunpack.c.h.b16 %v1453
        %v1550 = vpack.c.b16 %v1198, %v1486
        %v1551 = vpack.c.b16 %v1487, %v1487
        %v1552 = vpack.c.b16 %v1199, %v1488
        %v1553 = vpack.c.b16 %v1489, %v1489
        %v1554 = vpack.c.b16 %v1200, %v1490
        %v1555 = vpack.c.b16 %v1491, %v1491
        %v1556 = vpack.c.b16 %v1201, %v1492
        %v1557 = vpack.c.b16 %v1493, %v1493
        %v1558 = vpack.c.b16 %v1202, %v1494
        %v1559 = vpack.c.b16 %v1495, %v1495
        %v1560 = vpack.c.b16 %v1203, %v1496
        %v1561 = vpack.c.b16 %v1497, %v1497
        %v1562 = vpack.c.b16 %v1204, %v1498
        %v1563 = vpack.c.b16 %v1499, %v1499
        %v1564 = vpack.c.b16 %v1205, %v1500
        %v1565 = vpack.c.b16 %v1501, %v1501
        %v1566 = vpack.c.b16 %v1206, %v1502
        %v1567 = vpack.c.b16 %v1503, %v1503
        %v1568 = vpack.c.b16 %v1207, %v1504
        %v1569 = vpack.c.b16 %v1505, %v1505
        %v1570 = vpack.c.b16 %v1208, %v1506
        %v1571 = vpack.c.b16 %v1507, %v1507
        %v1572 = vpack.c.b16 %v1209, %v1508
        %v1573 = vpack.c.b16 %v1509, %v1509
        %v1574 = vpack.c.b16 %v1210, %v1510
        %v1575 = vpack.c.b16 %v1511, %v1511
        %v1576 = vpack.c.b16 %v1211, %v1512
        %v1577 = vpack.c.b16 %v1513, %v1513
        %v1578 = vpack.c.b16 %v1212, %v1514
        %v1579 = vpack.c.b16 %v1515, %v1515
        %v1580 = vpack.c.b16 %v1213, %v1516
        %v1581 = vpack.c.b16 %v1517, %v1517
        %v1582 = vpack.c.b16 %v1214, %v1518
        %v1583 = vpack.c.b16 %v1519, %v1519
        %v1584 = vpack.c.b16 %v1215, %v1520
        %v1585 = vpack.c.b16 %v1521, %v1521
        %v1586 = vpack.c.b16 %v1216, %v1522
        %v1587 = vpack.c.b16 %v1523, %v1523
        %v1588 = vpack.c.b16 %v1217, %v1524
        %v1589 = vpack.c.b16 %v1525, %v1525
        %v1590 = vpack.c.b16 %v1218, %v1526
        %v1591 = vpack.c.b16 %v1527, %v1527
        %v1592 = vpack.c.b16 %v1219, %v1528
        %v1593 = vpack.c.b16 %v1529, %v1529
        %v1594 = vpack.c.b16 %v1220, %v1530
        %v1595 = vpack.c.b16 %v1531, %v1531
        %v1596 = vpack.c.b16 %v1221, %v1532
        %v1597 = vpack.c.b16 %v1533, %v1533
        %v1598 = vpack.c.b16 %v1222, %v1534
        %v1599 = vpack.c.b16 %v1535, %v1535
        %v1600 = vpack.c.b16 %v1223, %v1536
        %v1601 = vpack.c.b16 %v1537, %v1537
        %v1602 = vpack.c.b16 %v1224, %v1538
        %v1603 = vpack.c.b16 %v1539, %v1539
        %v1604 = vpack.c.b16 %v1225, %v1540
        %v1605 = vpack.c.b16 %v1541, %v1541
        %v1606 = vpack.c.b16 %v1226, %v1542
        %v1607 = vpack.c.b16 %v1543, %v1543
        %v1608 = vpack.c.b16 %v1227, %v1544
        %v1609 = vpack.c.b16 %v1545, %v1545
        %v1610 = vpack.c.b16 %v1228, %v1546
        %v1611 = vpack.c.b16 %v1547, %v1547
        %v1612 = vpack.c.b16 %v1229, %v1548
        %v1613 = vpack.c.b16 %v1549, %v1549
        %s1678 = scalar_lea.vmem [#allocation2], 24
        %1679 = vst [vmem:[%s1678] sm:$0xff] %v1550
        %1680 = vst [vmem:[%s1678 + $0x8] sm:$0xf] %v1551
        %1681 = vst [vmem:[%s1678 + $0xc] sm:$0xff] %v1552
        %1682 = vst [vmem:[%s1678 + $0x14] sm:$0xf] %v1553
        %1683 = vst [vmem:[%s1678 + $0x18] sm:$0xff] %v1554
        %1684 = vst [vmem:[%s1678 + $0x20] sm:$0xf] %v1555
        %1685 = vst [vmem:[%s1678 + $0x24] sm:$0xff] %v1556
        %1686 = vst [vmem:[%s1678 + $0x2c] sm:$0xf] %v1557
        %1687 = vst [vmem:[%s1678 + $0x30] sm:$0xff] %v1558
        %1688 = vst [vmem:[%s1678 + $0x38] sm:$0xf] %v1559
        %1689 = vst [vmem:[%s1678 + $0x3c] sm:$0xff] %v1560
        %1690 = vst [vmem:[%s1678 + $0x44] sm:$0xf] %v1561
        %1691 = vst [vmem:[%s1678 + $0x48] sm:$0xff] %v1562
        %1692 = vst [vmem:[%s1678 + $0x50] sm:$0xf] %v1563
        %1693 = vst [vmem:[%s1678 + $0x54] sm:$0xff] %v1564
        %1694 = vst [vmem:[%s1678 + $0x5c] sm:$0xf] %v1565
        %1695 = vst [vmem:[%s1678 + $0x60] sm:$0xff] %v1566
        %1696 = vst [vmem:[%s1678 + $0x68] sm:$0xf] %v1567
        %1697 = vst [vmem:[%s1678 + $0x6c] sm:$0xff] %v1568
        %1698 = vst [vmem:[%s1678 + $0x74] sm:$0xf] %v1569
        %1699 = vst [vmem:[%s1678 + $0x78] sm:$0xff] %v1570
        %1700 = vst [vmem:[%s1678 + $0x80] sm:$0xf] %v1571
        %1701 = vst [vmem:[%s1678 + $0x84] sm:$0xff] %v1572
        %1702 = vst [vmem:[%s1678 + $0x8c] sm:$0xf] %v1573
        %1703 = vst [vmem:[%s1678 + $0x90] sm:$0xff] %v1574
        %1704 = vst [vmem:[%s1678 + $0x98] sm:$0xf] %v1575
        %1705 = vst [vmem:[%s1678 + $0x9c] sm:$0xff] %v1576
        %1706 = vst [vmem:[%s1678 + $0xa4] sm:$0xf] %v1577
        %1707 = vst [vmem:[%s1678 + $0xa8] sm:$0xff] %v1578
        %1708 = vst [vmem:[%s1678 + $0xb0] sm:$0xf] %v1579
        %1709 = vst [vmem:[%s1678 + $0xb4] sm:$0xff] %v1580
        %1710 = vst [vmem:[%s1678 + $0xbc] sm:$0xf] %v1581
        %1711 = vst [vmem:[%s1678 + $0xc0] sm:$0xff] %v1582
        %1712 = vst [vmem:[%s1678 + $0xc8] sm:$0xf] %v1583
        %1713 = vst [vmem:[%s1678 + $0xcc] sm:$0xff] %v1584
        %1714 = vst [vmem:[%s1678 + $0xd4] sm:$0xf] %v1585
        %1715 = vst [vmem:[%s1678 + $0xd8] sm:$0xff] %v1586
        %1716 = vst [vmem:[%s1678 + $0xe0] sm:$0xf] %v1587
        %1717 = vst [vmem:[%s1678 + $0xe4] sm:$0xff] %v1588
        %1718 = vst [vmem:[%s1678 + $0xec] sm:$0xf] %v1589
        %1719 = vst [vmem:[%s1678 + $0xf0] sm:$0xff] %v1590
        %1720 = vst [vmem:[%s1678 + $0xf8] sm:$0xf] %v1591
        %1721 = vst [vmem:[%s1678 + $0xfc] sm:$0xff] %v1592
        %1722 = vst [vmem:[%s1678 + $0x104] sm:$0xf] %v1593
        %1723 = vst [vmem:[%s1678 + $0x108] sm:$0xff] %v1594
        %1724 = vst [vmem:[%s1678 + $0x110] sm:$0xf] %v1595
        %1725 = vst [vmem:[%s1678 + $0x114] sm:$0xff] %v1596
        %1726 = vst [vmem:[%s1678 + $0x11c] sm:$0xf] %v1597
        %1727 = vst [vmem:[%s1678 + $0x120] sm:$0xff] %v1598
        %1728 = vst [vmem:[%s1678 + $0x128] sm:$0xf] %v1599
        %1729 = vst [vmem:[%s1678 + $0x12c] sm:$0xff] %v1600
        %1730 = vst [vmem:[%s1678 + $0x134] sm:$0xf] %v1601
        %1731 = vst [vmem:[%s1678 + $0x138] sm:$0xff] %v1602
        %1732 = vst [vmem:[%s1678 + $0x140] sm:$0xf] %v1603
        %1733 = vst [vmem:[%s1678 + $0x144] sm:$0xff] %v1604
        %1734 = vst [vmem:[%s1678 + $0x14c] sm:$0xf] %v1605
        %1735 = vst [vmem:[%s1678 + $0x150] sm:$0xff] %v1606
        %1736 = vst [vmem:[%s1678 + $0x158] sm:$0xf] %v1607
        %1737 = vst [vmem:[%s1678 + $0x15c] sm:$0xff] %v1608
        %1738 = vst [vmem:[%s1678 + $0x164] sm:$0xf] %v1609
        %1739 = vst [vmem:[%s1678 + $0x168] sm:$0xff] %v1610
        %1740 = vst [vmem:[%s1678 + $0x170] sm:$0xf] %v1611
        %1741 = vst [vmem:[%s1678 + $0x174] sm:$0xff] %v1612
        %1742 = vst [vmem:[%s1678 + $0x17c] sm:$0xf] %v1613
        %v1743 = vld [vmem:[#allocation2] sm:$0xff]
        %v1744 = vld [vmem:[#allocation2 + $0x8] sm:$0xf]
        %v1745 = vld [vmem:[#allocation2 + $0xc] sm:$0xff]
        %v1746 = vld [vmem:[#allocation2 + $0x14] sm:$0xf]
        %v1747 = vld [vmem:[#allocation2 + $0x18] sm:$0xff]
        %v1748 = vld [vmem:[#allocation2 + $0x20] sm:$0xf]
        %v1749 = vld [vmem:[#allocation2 + $0x24] sm:$0xff]
        %v1750 = vld [vmem:[#allocation2 + $0x2c] sm:$0xf]
        %v1751 = vld [vmem:[#allocation2 + $0x30] sm:$0xff]
        %v1752 = vld [vmem:[#allocation2 + $0x38] sm:$0xf]
        %v1753 = vld [vmem:[#allocation2 + $0x3c] sm:$0xff]
        %v1754 = vld [vmem:[#allocation2 + $0x44] sm:$0xf]
        %v1755 = vld [vmem:[#allocation2 + $0x48] sm:$0xff]
        %v1756 = vld [vmem:[#allocation2 + $0x50] sm:$0xf]
        %v1757 = vld [vmem:[#allocation2 + $0x54] sm:$0xff]
        %v1758 = vld [vmem:[#allocation2 + $0x5c] sm:$0xf]
        %v1759 = vld [vmem:[#allocation2 + $0x60] sm:$0xff]
        %v1760 = vld [vmem:[#allocation2 + $0x68] sm:$0xf]
        %v1761 = vld [vmem:[#allocation2 + $0x6c] sm:$0xff]
        %v1762 = vld [vmem:[#allocation2 + $0x74] sm:$0xf]
        %v1763 = vld [vmem:[#allocation2 + $0x78] sm:$0xff]
        %v1764 = vld [vmem:[#allocation2 + $0x80] sm:$0xf]
        %v1765 = vld [vmem:[#allocation2 + $0x84] sm:$0xff]
        %v1766 = vld [vmem:[#allocation2 + $0x8c] sm:$0xf]
        %v1767 = vld [vmem:[#allocation2 + $0x90] sm:$0xff]
        %v1768 = vld [vmem:[#allocation2 + $0x98] sm:$0xf]
        %v1769 = vld [vmem:[#allocation2 + $0x9c] sm:$0xff]
        %v1770 = vld [vmem:[#allocation2 + $0xa4] sm:$0xf]
        %v1771 = vld [vmem:[#allocation2 + $0xa8] sm:$0xff]
        %v1772 = vld [vmem:[#allocation2 + $0xb0] sm:$0xf]
        %v1773 = vld [vmem:[#allocation2 + $0xb4] sm:$0xff]
        %v1774 = vld [vmem:[#allocation2 + $0xbc] sm:$0xf]
        %v1775 = vld [vmem:[#allocation2 + $0xc0] sm:$0xff]
        %v1776 = vld [vmem:[#allocation2 + $0xc8] sm:$0xf]
        %v1777 = vld [vmem:[#allocation2 + $0xcc] sm:$0xff]
        %v1778 = vld [vmem:[#allocation2 + $0xd4] sm:$0xf]
        %v1779 = vld [vmem:[#allocation2 + $0xd8] sm:$0xff]
        %v1780 = vld [vmem:[#allocation2 + $0xe0] sm:$0xf]
        %v1781 = vld [vmem:[#allocation2 + $0xe4] sm:$0xff]
        %v1782 = vld [vmem:[#allocation2 + $0xec] sm:$0xf]
        %v1783 = vld [vmem:[#allocation2 + $0xf0] sm:$0xff]
        %v1784 = vld [vmem:[#allocation2 + $0xf8] sm:$0xf]
        %v1785 = vld [vmem:[#allocation2 + $0xfc] sm:$0xff]
        %v1786 = vld [vmem:[#allocation2 + $0x104] sm:$0xf]
        %v1787 = vld [vmem:[#allocation2 + $0x108] sm:$0xff]
        %v1788 = vld [vmem:[#allocation2 + $0x110] sm:$0xf]
        %v1789 = vld [vmem:[#allocation2 + $0x114] sm:$0xff]
        %v1790 = vld [vmem:[#allocation2 + $0x11c] sm:$0xf]
        %v1791 = vld [vmem:[#allocation2 + $0x120] sm:$0xff]
        %v1792 = vld [vmem:[#allocation2 + $0x128] sm:$0xf]
        %v1793 = vld [vmem:[#allocation2 + $0x12c] sm:$0xff]
        %v1794 = vld [vmem:[#allocation2 + $0x134] sm:$0xf]
        %v1795 = vld [vmem:[#allocation2 + $0x138] sm:$0xff]
        %v1796 = vld [vmem:[#allocation2 + $0x140] sm:$0xf]
        %v1797 = vld [vmem:[#allocation2 + $0x144] sm:$0xff]
        %v1798 = vld [vmem:[#allocation2 + $0x14c] sm:$0xf]
        %v1799 = vld [vmem:[#allocation2 + $0x150] sm:$0xff]
        %v1800 = vld [vmem:[#allocation2 + $0x158] sm:$0xf]
        %v1801 = vld [vmem:[#allocation2 + $0x15c] sm:$0xff]
        %v1802 = vld [vmem:[#allocation2 + $0x164] sm:$0xf]
        %v1803 = vld [vmem:[#allocation2 + $0x168] sm:$0xff]
        %v1804 = vld [vmem:[#allocation2 + $0x170] sm:$0xf]
        %v1805 = vld [vmem:[#allocation2 + $0x174] sm:$0xff]
        %v1806 = vld [vmem:[#allocation2 + $0x17c] sm:$0xf]
        %v1807 = vld [vmem:[#allocation3] sm:$0xf]
        %v1808 = vld [vmem:[#allocation3 + $0x4] sm:$0xf]
        %v1809 = vld [vmem:[#allocation3 + $0x8] sm:$0xf]
        %v1810 = vld [vmem:[#allocation3 + $0xc] sm:$0xf]
        %v1811 = vld [vmem:[#allocation3 + $0x10] sm:$0xf]
        %v1812 = vld [vmem:[#allocation3 + $0x14] sm:$0xf]
        %v1813 = vld [vmem:[#allocation3 + $0x18] sm:$0xf]
        %v1814 = vld [vmem:[#allocation3 + $0x1c] sm:$0xf]
        %v1815 = vld [vmem:[#allocation3 + $0x20] sm:$0xf]
        %v1816 = vld [vmem:[#allocation3 + $0x24] sm:$0xf]
        %v1817 = vld [vmem:[#allocation3 + $0x28] sm:$0xf]
        %v1818 = vld [vmem:[#allocation3 + $0x2c] sm:$0xf]
        %v1819 = vld [vmem:[#allocation3 + $0x30] sm:$0xf]
        %v1820 = vld [vmem:[#allocation3 + $0x34] sm:$0xf]
        %v1821 = vld [vmem:[#allocation3 + $0x38] sm:$0xf]
        %v1822 = vld [vmem:[#allocation3 + $0x3c] sm:$0xf]
        %v1823 = vld [vmem:[#allocation3 + $0x40] sm:$0xf]
        %v1824 = vld [vmem:[#allocation3 + $0x44] sm:$0xf]
        %v1825 = vld [vmem:[#allocation3 + $0x48] sm:$0xf]
        %v1826 = vld [vmem:[#allocation3 + $0x4c] sm:$0xf]
        %v1827 = vld [vmem:[#allocation3 + $0x50] sm:$0xf]
        %v1828 = vld [vmem:[#allocation3 + $0x54] sm:$0xf]
        %v1829 = vld [vmem:[#allocation3 + $0x58] sm:$0xf]
        %v1830 = vld [vmem:[#allocation3 + $0x5c] sm:$0xf]
        %v1831 = vld [vmem:[#allocation3 + $0x60] sm:$0xf]
        %v1832 = vld [vmem:[#allocation3 + $0x64] sm:$0xf]
        %v1833 = vld [vmem:[#allocation3 + $0x68] sm:$0xf]
        %v1834 = vld [vmem:[#allocation3 + $0x6c] sm:$0xf]
        %v1835 = vld [vmem:[#allocation3 + $0x70] sm:$0xf]
        %v1836 = vld [vmem:[#allocation3 + $0x74] sm:$0xf]
        %v1837 = vld [vmem:[#allocation3 + $0x78] sm:$0xf]
        %v1838 = vld [vmem:[#allocation3 + $0x7c] sm:$0xf]
        %v1839 = vld [vmem:[#allocation3 + $0x80] sm:$0xf]
        %v1840 = vld [vmem:[#allocation3 + $0x84] sm:$0xf]
        %v1841 = vld [vmem:[#allocation3 + $0x88] sm:$0xf]
        %v1842 = vld [vmem:[#allocation3 + $0x8c] sm:$0xf]
        %v1843 = vld [vmem:[#allocation3 + $0x90] sm:$0xf]
        %v1844 = vld [vmem:[#allocation3 + $0x94] sm:$0xf]
        %v1845 = vld [vmem:[#allocation3 + $0x98] sm:$0xf]
        %v1846 = vld [vmem:[#allocation3 + $0x9c] sm:$0xf]
        %v1847 = vld [vmem:[#allocation3 + $0xa0] sm:$0xf]
        %v1848 = vld [vmem:[#allocation3 + $0xa4] sm:$0xf]
        %v1849 = vld [vmem:[#allocation3 + $0xa8] sm:$0xf]
        %v1850 = vld [vmem:[#allocation3 + $0xac] sm:$0xf]
        %v1851 = vld [vmem:[#allocation3 + $0xb0] sm:$0xf]
        %v1852 = vld [vmem:[#allocation3 + $0xb4] sm:$0xf]
        %v1853 = vld [vmem:[#allocation3 + $0xb8] sm:$0xf]
        %v1854 = vld [vmem:[#allocation3 + $0xbc] sm:$0xf]
        %v1855 = vld [vmem:[%s1678] sm:$0xff]
        %v1856 = vld [vmem:[%s1678 + $0x8] sm:$0xf]
        %v1857 = vld [vmem:[%s1678 + $0xc] sm:$0xff]
        %v1858 = vld [vmem:[%s1678 + $0x14] sm:$0xf]
        %v1859 = vld [vmem:[%s1678 + $0x18] sm:$0xff]
        %v1860 = vld [vmem:[%s1678 + $0x20] sm:$0xf]
        %v1861 = vld [vmem:[%s1678 + $0x24] sm:$0xff]
        %v1862 = vld [vmem:[%s1678 + $0x2c] sm:$0xf]
        %v1863 = vld [vmem:[%s1678 + $0x30] sm:$0xff]
        %v1864 = vld [vmem:[%s1678 + $0x38] sm:$0xf]
        %v1865 = vld [vmem:[%s1678 + $0x3c] sm:$0xff]
        %v1866 = vld [vmem:[%s1678 + $0x44] sm:$0xf]
        %v1867 = vld [vmem:[%s1678 + $0x48] sm:$0xff]
        %v1868 = vld [vmem:[%s1678 + $0x50] sm:$0xf]
        %v1869 = vld [vmem:[%s1678 + $0x54] sm:$0xff]
        %v1870 = vld [vmem:[%s1678 + $0x5c] sm:$0xf]
        %v1871 = vld [vmem:[%s1678 + $0x60] sm:$0xff]
        %v1872 = vld [vmem:[%s1678 + $0x68] sm:$0xf]
        %v1873 = vld [vmem:[%s1678 + $0x6c] sm:$0xff]
        %v1874 = vld [vmem:[%s1678 + $0x74] sm:$0xf]
        %v1875 = vld [vmem:[%s1678 + $0x78] sm:$0xff]
        %v1876 = vld [vmem:[%s1678 + $0x80] sm:$0xf]
        %v1877 = vld [vmem:[%s1678 + $0x84] sm:$0xff]
        %v1878 = vld [vmem:[%s1678 + $0x8c] sm:$0xf]
        %v1879 = vld [vmem:[%s1678 + $0x90] sm:$0xff]
        %v1880 = vld [vmem:[%s1678 + $0x98] sm:$0xf]
        %v1881 = vld [vmem:[%s1678 + $0x9c] sm:$0xff]
        %v1882 = vld [vmem:[%s1678 + $0xa4] sm:$0xf]
        %v1883 = vld [vmem:[%s1678 + $0xa8] sm:$0xff]
        %v1884 = vld [vmem:[%s1678 + $0xb0] sm:$0xf]
        %v1885 = vld [vmem:[%s1678 + $0xb4] sm:$0xff]
        %v1886 = vld [vmem:[%s1678 + $0xbc] sm:$0xf]
        %v1887 = vld [vmem:[%s1678 + $0xc0] sm:$0xff]
        %v1888 = vld [vmem:[%s1678 + $0xc8] sm:$0xf]
        %v1889 = vld [vmem:[%s1678 + $0xcc] sm:$0xff]
        %v1890 = vld [vmem:[%s1678 + $0xd4] sm:$0xf]
        %v1891 = vld [vmem:[%s1678 + $0xd8] sm:$0xff]
        %v1892 = vld [vmem:[%s1678 + $0xe0] sm:$0xf]
        %v1893 = vld [vmem:[%s1678 + $0xe4] sm:$0xff]
        %v1894 = vld [vmem:[%s1678 + $0xec] sm:$0xf]
        %v1895 = vld [vmem:[%s1678 + $0xf0] sm:$0xff]
        %v1896 = vld [vmem:[%s1678 + $0xf8] sm:$0xf]
        %v1897 = vld [vmem:[%s1678 + $0xfc] sm:$0xff]
        %v1898 = vld [vmem:[%s1678 + $0x104] sm:$0xf]
        %v1899 = vld [vmem:[%s1678 + $0x108] sm:$0xff]
        %v1900 = vld [vmem:[%s1678 + $0x110] sm:$0xf]
        %v1901 = vld [vmem:[%s1678 + $0x114] sm:$0xff]
        %v1902 = vld [vmem:[%s1678 + $0x11c] sm:$0xf]
        %v1903 = vld [vmem:[%s1678 + $0x120] sm:$0xff]
        %v1904 = vld [vmem:[%s1678 + $0x128] sm:$0xf]
        %v1905 = vld [vmem:[%s1678 + $0x12c] sm:$0xff]
        %v1906 = vld [vmem:[%s1678 + $0x134] sm:$0xf]
        %v1907 = vld [vmem:[%s1678 + $0x138] sm:$0xff]
        %v1908 = vld [vmem:[%s1678 + $0x140] sm:$0xf]
        %v1909 = vld [vmem:[%s1678 + $0x144] sm:$0xff]
        %v1910 = vld [vmem:[%s1678 + $0x14c] sm:$0xf]
        %v1911 = vld [vmem:[%s1678 + $0x150] sm:$0xff]
        %v1912 = vld [vmem:[%s1678 + $0x158] sm:$0xf]
        %v1913 = vld [vmem:[%s1678 + $0x15c] sm:$0xff]
        %v1914 = vld [vmem:[%s1678 + $0x164] sm:$0xf]
        %v1915 = vld [vmem:[%s1678 + $0x168] sm:$0xff]
        %v1916 = vld [vmem:[%s1678 + $0x170] sm:$0xf]
        %v1917 = vld [vmem:[%s1678 + $0x174] sm:$0xff]
        %v1918 = vld [vmem:[%s1678 + $0x17c] sm:$0xf]
        %s1919 = scalar_lea.vmem [#allocation3], 192
        %v1920 = vld [vmem:[%s1919] sm:$0xf]
        %v1921 = vld [vmem:[%s1919 + $0x4] sm:$0xf]
        %v1922 = vld [vmem:[%s1919 + $0x8] sm:$0xf]
        %v1923 = vld [vmem:[%s1919 + $0xc] sm:$0xf]
        %v1924 = vld [vmem:[%s1919 + $0x10] sm:$0xf]
        %v1925 = vld [vmem:[%s1919 + $0x14] sm:$0xf]
        %v1926 = vld [vmem:[%s1919 + $0x18] sm:$0xf]
        %v1927 = vld [vmem:[%s1919 + $0x1c] sm:$0xf]
        %v1928 = vld [vmem:[%s1919 + $0x20] sm:$0xf]
        %v1929 = vld [vmem:[%s1919 + $0x24] sm:$0xf]
        %v1930 = vld [vmem:[%s1919 + $0x28] sm:$0xf]
        %v1931 = vld [vmem:[%s1919 + $0x2c] sm:$0xf]
        %v1932 = vld [vmem:[%s1919 + $0x30] sm:$0xf]
        %v1933 = vld [vmem:[%s1919 + $0x34] sm:$0xf]
        %v1934 = vld [vmem:[%s1919 + $0x38] sm:$0xf]
        %v1935 = vld [vmem:[%s1919 + $0x3c] sm:$0xf]
        %v1936 = vld [vmem:[%s1919 + $0x40] sm:$0xf]
        %v1937 = vld [vmem:[%s1919 + $0x44] sm:$0xf]
        %v1938 = vld [vmem:[%s1919 + $0x48] sm:$0xf]
        %v1939 = vld [vmem:[%s1919 + $0x4c] sm:$0xf]
        %v1940 = vld [vmem:[%s1919 + $0x50] sm:$0xf]
        %v1941 = vld [vmem:[%s1919 + $0x54] sm:$0xf]
        %v1942 = vld [vmem:[%s1919 + $0x58] sm:$0xf]
        %v1943 = vld [vmem:[%s1919 + $0x5c] sm:$0xf]
        %v1944 = vld [vmem:[%s1919 + $0x60] sm:$0xf]
        %v1945 = vld [vmem:[%s1919 + $0x64] sm:$0xf]
        %v1946 = vld [vmem:[%s1919 + $0x68] sm:$0xf]
        %v1947 = vld [vmem:[%s1919 + $0x6c] sm:$0xf]
        %v1948 = vld [vmem:[%s1919 + $0x70] sm:$0xf]
        %v1949 = vld [vmem:[%s1919 + $0x74] sm:$0xf]
        %v1950 = vld [vmem:[%s1919 + $0x78] sm:$0xf]
        %v1951 = vld [vmem:[%s1919 + $0x7c] sm:$0xf]
        %v1952 = vld [vmem:[%s1919 + $0x80] sm:$0xf]
        %v1953 = vld [vmem:[%s1919 + $0x84] sm:$0xf]
        %v1954 = vld [vmem:[%s1919 + $0x88] sm:$0xf]
        %v1955 = vld [vmem:[%s1919 + $0x8c] sm:$0xf]
        %v1956 = vld [vmem:[%s1919 + $0x90] sm:$0xf]
        %v1957 = vld [vmem:[%s1919 + $0x94] sm:$0xf]
        %v1958 = vld [vmem:[%s1919 + $0x98] sm:$0xf]
        %v1959 = vld [vmem:[%s1919 + $0x9c] sm:$0xf]
        %v1960 = vld [vmem:[%s1919 + $0xa0] sm:$0xf]
        %v1961 = vld [vmem:[%s1919 + $0xa4] sm:$0xf]
        %v1962 = vld [vmem:[%s1919 + $0xa8] sm:$0xf]
        %v1963 = vld [vmem:[%s1919 + $0xac] sm:$0xf]
        %v1964 = vld [vmem:[%s1919 + $0xb0] sm:$0xf]
        %v1965 = vld [vmem:[%s1919 + $0xb4] sm:$0xf]
        %v1966 = vld [vmem:[%s1919 + $0xb8] sm:$0xf]
        %v1967 = vld [vmem:[%s1919 + $0xbc] sm:$0xf]
        %v2032 = vunpack.c.l.b16 %v1855
        %v2033 = vunpack.c.h.b16 %v1855
        %v2034 = vunpack.c.l.b16 %v1856
        %v2035 = vunpack.c.l.b16 %v1857
        %v2036 = vunpack.c.h.b16 %v1857
        %v2037 = vunpack.c.l.b16 %v1858
        %v2038 = vunpack.c.l.b16 %v1859
        %v2039 = vunpack.c.h.b16 %v1859
        %v2040 = vunpack.c.l.b16 %v1860
        %v2041 = vunpack.c.l.b16 %v1861
        %v2042 = vunpack.c.h.b16 %v1861
        %v2043 = vunpack.c.l.b16 %v1862
        %v2044 = vunpack.c.l.b16 %v1863
        %v2045 = vunpack.c.h.b16 %v1863
        %v2046 = vunpack.c.l.b16 %v1864
        %v2047 = vunpack.c.l.b16 %v1865
        %v2048 = vunpack.c.h.b16 %v1865
        %v2049 = vunpack.c.l.b16 %v1866
        %v2050 = vunpack.c.l.b16 %v1867
        %v2051 = vunpack.c.h.b16 %v1867
        %v2052 = vunpack.c.l.b16 %v1868
        %v2053 = vunpack.c.l.b16 %v1869
        %v2054 = vunpack.c.h.b16 %v1869
        %v2055 = vunpack.c.l.b16 %v1870
        %v2056 = vunpack.c.l.b16 %v1871
        %v2057 = vunpack.c.h.b16 %v1871
        %v2058 = vunpack.c.l.b16 %v1872
        %v2059 = vunpack.c.l.b16 %v1873
        %v2060 = vunpack.c.h.b16 %v1873
        %v2061 = vunpack.c.l.b16 %v1874
        %v2062 = vunpack.c.l.b16 %v1875
        %v2063 = vunpack.c.h.b16 %v1875
        %v2064 = vunpack.c.l.b16 %v1876
        %v2065 = vunpack.c.l.b16 %v1877
        %v2066 = vunpack.c.h.b16 %v1877
        %v2067 = vunpack.c.l.b16 %v1878
        %v2068 = vunpack.c.l.b16 %v1879
        %v2069 = vunpack.c.h.b16 %v1879
        %v2070 = vunpack.c.l.b16 %v1880
        %v2071 = vunpack.c.l.b16 %v1881
        %v2072 = vunpack.c.h.b16 %v1881
        %v2073 = vunpack.c.l.b16 %v1882
        %v2074 = vunpack.c.l.b16 %v1883
        %v2075 = vunpack.c.h.b16 %v1883
        %v2076 = vunpack.c.l.b16 %v1884
        %v2077 = vunpack.c.l.b16 %v1885
        %v2078 = vunpack.c.h.b16 %v1885
        %v2079 = vunpack.c.l.b16 %v1886
        %v2080 = vunpack.c.l.b16 %v1887
        %v2081 = vunpack.c.h.b16 %v1887
        %v2082 = vunpack.c.l.b16 %v1888
        %v2083 = vunpack.c.l.b16 %v1889
        %v2084 = vunpack.c.h.b16 %v1889
        %v2085 = vunpack.c.l.b16 %v1890
        %v2086 = vunpack.c.l.b16 %v1891
        %v2087 = vunpack.c.h.b16 %v1891
        %v2088 = vunpack.c.l.b16 %v1892
        %v2089 = vunpack.c.l.b16 %v1893
        %v2090 = vunpack.c.h.b16 %v1893
        %v2091 = vunpack.c.l.b16 %v1894
        %v2092 = vunpack.c.l.b16 %v1895
        %v2093 = vunpack.c.h.b16 %v1895
        %v2094 = vunpack.c.l.b16 %v1896
        %v2095 = vunpack.c.l.b16 %v1897
        %v2096 = vunpack.c.h.b16 %v1897
        %v2097 = vunpack.c.l.b16 %v1898
        %v2098 = vunpack.c.l.b16 %v1899
        %v2099 = vunpack.c.h.b16 %v1899
        %v2100 = vunpack.c.l.b16 %v1900
        %v2101 = vunpack.c.l.b16 %v1901
        %v2102 = vunpack.c.h.b16 %v1901
        %v2103 = vunpack.c.l.b16 %v1902
        %v2104 = vunpack.c.l.b16 %v1903
        %v2105 = vunpack.c.h.b16 %v1903
        %v2106 = vunpack.c.l.b16 %v1904
        %v2107 = vunpack.c.l.b16 %v1905
        %v2108 = vunpack.c.h.b16 %v1905
        %v2109 = vunpack.c.l.b16 %v1906
        %v2110 = vunpack.c.l.b16 %v1907
        %v2111 = vunpack.c.h.b16 %v1907
        %v2112 = vunpack.c.l.b16 %v1908
        %v2113 = vunpack.c.l.b16 %v1909
        %v2114 = vunpack.c.h.b16 %v1909
        %v2115 = vunpack.c.l.b16 %v1910
        %v2116 = vunpack.c.l.b16 %v1911
        %v2117 = vunpack.c.h.b16 %v1911
        %v2118 = vunpack.c.l.b16 %v1912
        %v2119 = vunpack.c.l.b16 %v1913
        %v2120 = vunpack.c.h.b16 %v1913
        %v2121 = vunpack.c.l.b16 %v1914
        %v2122 = vunpack.c.l.b16 %v1915
        %v2123 = vunpack.c.h.b16 %v1915
        %v2124 = vunpack.c.l.b16 %v1916
        %v2125 = vunpack.c.l.b16 %v1917
        %v2126 = vunpack.c.h.b16 %v1917
        %v2127 = vunpack.c.l.b16 %v1918
        %v2128 = vpack.c.b16 %v2035, %v2032
        %v2129 = vpack.c.b16 %v2036, %v2033
        %v2130 = vpack.c.b16 %v2037, %v2034
        %v2131 = vpack.c.b16 %v2041, %v2038
        %v2132 = vpack.c.b16 %v2042, %v2039
        %v2133 = vpack.c.b16 %v2043, %v2040
        %v2134 = vpack.c.b16 %v2047, %v2044
        %v2135 = vpack.c.b16 %v2048, %v2045
        %v2136 = vpack.c.b16 %v2049, %v2046
        %v2137 = vpack.c.b16 %v2053, %v2050
        %v2138 = vpack.c.b16 %v2054, %v2051
        %v2139 = vpack.c.b16 %v2055, %v2052
        %v2140 = vpack.c.b16 %v2059, %v2056
        %v2141 = vpack.c.b16 %v2060, %v2057
        %v2142 = vpack.c.b16 %v2061, %v2058
        %v2143 = vpack.c.b16 %v2065, %v2062
        %v2144 = vpack.c.b16 %v2066, %v2063
        %v2145 = vpack.c.b16 %v2067, %v2064
        %v2146 = vpack.c.b16 %v2071, %v2068
        %v2147 = vpack.c.b16 %v2072, %v2069
        %v2148 = vpack.c.b16 %v2073, %v2070
        %v2149 = vpack.c.b16 %v2077, %v2074
        %v2150 = vpack.c.b16 %v2078, %v2075
        %v2151 = vpack.c.b16 %v2079, %v2076
        %v2152 = vpack.c.b16 %v2083, %v2080
        %v2153 = vpack.c.b16 %v2084, %v2081
        %v2154 = vpack.c.b16 %v2085, %v2082
        %v2155 = vpack.c.b16 %v2089, %v2086
        %v2156 = vpack.c.b16 %v2090, %v2087
        %v2157 = vpack.c.b16 %v2091, %v2088
        %v2158 = vpack.c.b16 %v2095, %v2092
        %v2159 = vpack.c.b16 %v2096, %v2093
        %v2160 = vpack.c.b16 %v2097, %v2094
        %v2161 = vpack.c.b16 %v2101, %v2098
        %v2162 = vpack.c.b16 %v2102, %v2099
        %v2163 = vpack.c.b16 %v2103, %v2100
        %v2164 = vpack.c.b16 %v2107, %v2104
        %v2165 = vpack.c.b16 %v2108, %v2105
        %v2166 = vpack.c.b16 %v2109, %v2106
        %v2167 = vpack.c.b16 %v2113, %v2110
        %v2168 = vpack.c.b16 %v2114, %v2111
        %v2169 = vpack.c.b16 %v2115, %v2112
        %v2170 = vpack.c.b16 %v2119, %v2116
        %v2171 = vpack.c.b16 %v2120, %v2117
        %v2172 = vpack.c.b16 %v2121, %v2118
        %v2173 = vpack.c.b16 %v2125, %v2122
        %v2174 = vpack.c.b16 %v2126, %v2123
        %v2175 = vpack.c.b16 %v2127, %v2124
        %v2272 = vunpack.c.l.b16 %v1920
        %v2273 = vunpack.c.l.b16 %v1921
        %v2274 = vunpack.c.l.b16 %v1922
        %v2275 = vunpack.c.l.b16 %v1923
        %v2276 = vunpack.c.l.b16 %v1924
        %v2277 = vunpack.c.l.b16 %v1925
        %v2278 = vunpack.c.l.b16 %v1926
        %v2279 = vunpack.c.l.b16 %v1927
        %v2280 = vunpack.c.l.b16 %v1928
        %v2281 = vunpack.c.l.b16 %v1929
        %v2282 = vunpack.c.l.b16 %v1930
        %v2283 = vunpack.c.l.b16 %v1931
        %v2284 = vunpack.c.l.b16 %v1932
        %v2285 = vunpack.c.l.b16 %v1933
        %v2286 = vunpack.c.l.b16 %v1934
        %v2287 = vunpack.c.l.b16 %v1935
        %v2288 = vunpack.c.l.b16 %v1936
        %v2289 = vunpack.c.l.b16 %v1937
        %v2290 = vunpack.c.l.b16 %v1938
        %v2291 = vunpack.c.l.b16 %v1939
        %v2292 = vunpack.c.l.b16 %v1940
        %v2293 = vunpack.c.l.b16 %v1941
        %v2294 = vunpack.c.l.b16 %v1942
        %v2295 = vunpack.c.l.b16 %v1943
        %v2296 = vunpack.c.l.b16 %v1944
        %v2297 = vunpack.c.l.b16 %v1945
        %v2298 = vunpack.c.l.b16 %v1946
        %v2299 = vunpack.c.l.b16 %v1947
        %v2300 = vunpack.c.l.b16 %v1948
        %v2301 = vunpack.c.l.b16 %v1949
        %v2302 = vunpack.c.l.b16 %v1950
        %v2303 = vunpack.c.l.b16 %v1951
        %v2304 = vunpack.c.l.b16 %v1952
        %v2305 = vunpack.c.l.b16 %v1953
        %v2306 = vunpack.c.l.b16 %v1954
        %v2307 = vunpack.c.l.b16 %v1955
        %v2308 = vunpack.c.l.b16 %v1956
        %v2309 = vunpack.c.l.b16 %v1957
        %v2310 = vunpack.c.l.b16 %v1958
        %v2311 = vunpack.c.l.b16 %v1959
        %v2312 = vunpack.c.l.b16 %v1960
        %v2313 = vunpack.c.l.b16 %v1961
        %v2314 = vunpack.c.l.b16 %v1962
        %v2315 = vunpack.c.l.b16 %v1963
        %v2316 = vunpack.c.l.b16 %v1964
        %v2317 = vunpack.c.l.b16 %v1965
        %v2318 = vunpack.c.l.b16 %v1966
        %v2319 = vunpack.c.l.b16 %v1967
        %v2320 = vpack.c.b16 %v2273, %v2272
        %v2321 = vpack.c.b16 %v2275, %v2274
        %v2322 = vpack.c.b16 %v2277, %v2276
        %v2323 = vpack.c.b16 %v2279, %v2278
        %v2324 = vpack.c.b16 %v2281, %v2280
        %v2325 = vpack.c.b16 %v2283, %v2282
        %v2326 = vpack.c.b16 %v2285, %v2284
        %v2327 = vpack.c.b16 %v2287, %v2286
        %v2328 = vpack.c.b16 %v2289, %v2288
        %v2329 = vpack.c.b16 %v2291, %v2290
        %v2330 = vpack.c.b16 %v2293, %v2292
        %v2331 = vpack.c.b16 %v2295, %v2294
        %v2332 = vpack.c.b16 %v2297, %v2296
        %v2333 = vpack.c.b16 %v2299, %v2298
        %v2334 = vpack.c.b16 %v2301, %v2300
        %v2335 = vpack.c.b16 %v2303, %v2302
        %v2336 = vpack.c.b16 %v2305, %v2304
        %v2337 = vpack.c.b16 %v2307, %v2306
        %v2338 = vpack.c.b16 %v2309, %v2308
        %v2339 = vpack.c.b16 %v2311, %v2310
        %v2340 = vpack.c.b16 %v2313, %v2312
        %v2341 = vpack.c.b16 %v2315, %v2314
        %v2342 = vpack.c.b16 %v2317, %v2316
        %v2343 = vpack.c.b16 %v2319, %v2318
        %2368 = vmatpush.bf16.msra.mxu0 %v2327
        %2369 = vmatpush.bf16.msra.mxu0 %v2326
        %2370 = vmatpush.bf16.msra.mxu0 %v2325
        %2371 = vmatpush.bf16.msra.mxu0 %v2324
        %2372 = vmatpush.bf16.msra.mxu0 %v2323
        %2373 = vmatpush.bf16.msra.mxu0 %v2322
        %2374 = vmatpush.bf16.msra.mxu0 %v2321
        %2375 = vmatpush.bf16.msra.mxu0 %v2320
        %2376 = vmatmul.bf16.gmra.mxu0 %v2128
        %v2377 = vpop.f32.mrf.mxu0
        %v2378 = vadd.f32 0.0, %v2377
        %v2379 = vpop.f32.mrf.mxu0
        %v2380 = vadd.f32 0.0, %v2379
        %2381 = vmatmul.bf16.gmra.mxu0 %v2131
        %v2382 = vpop.f32.mrf.mxu0
        %v2383 = vadd.f32 0.0, %v2382
        %v2384 = vpop.f32.mrf.mxu0
        %v2385 = vadd.f32 0.0, %v2384
        %2386 = vmatmul.bf16.gmra.mxu0 %v2134
        %v2387 = vpop.f32.mrf.mxu0
        %v2388 = vadd.f32 0.0, %v2387
        %v2389 = vpop.f32.mrf.mxu0
        %v2390 = vadd.f32 0.0, %v2389
        %2391 = vmatmul.bf16.gmra.mxu0 %v2137
        %v2392 = vpop.f32.mrf.mxu0
        %v2393 = vadd.f32 0.0, %v2392
        %v2394 = vpop.f32.mrf.mxu0
        %v2395 = vadd.f32 0.0, %v2394
        %2396 = vmatmul.bf16.gmra.mxu0 %v2140
        %v2397 = vpop.f32.mrf.mxu0
        %v2398 = vadd.f32 0.0, %v2397
        %v2399 = vpop.f32.mrf.mxu0
        %v2400 = vadd.f32 0.0, %v2399
        %2401 = vmatmul.bf16.gmra.mxu0 %v2143
        %v2402 = vpop.f32.mrf.mxu0
        %v2403 = vadd.f32 0.0, %v2402
        %v2404 = vpop.f32.mrf.mxu0
        %v2405 = vadd.f32 0.0, %v2404
        %2406 = vmatmul.bf16.gmra.mxu0 %v2146
        %v2407 = vpop.f32.mrf.mxu0
        %v2408 = vadd.f32 0.0, %v2407
        %v2409 = vpop.f32.mrf.mxu0
        %v2410 = vadd.f32 0.0, %v2409
        %2411 = vmatmul.bf16.gmra.mxu0 %v2149
        %v2412 = vpop.f32.mrf.mxu0
        %v2413 = vadd.f32 0.0, %v2412
        %v2414 = vpop.f32.mrf.mxu0
        %v2415 = vadd.f32 0.0, %v2414
        %2416 = vmatmul.bf16.gmra.mxu0 %v2152
        %v2417 = vpop.f32.mrf.mxu0
        %v2418 = vadd.f32 0.0, %v2417
        %v2419 = vpop.f32.mrf.mxu0
        %v2420 = vadd.f32 0.0, %v2419
        %2421 = vmatmul.bf16.gmra.mxu0 %v2155
        %v2422 = vpop.f32.mrf.mxu0
        %v2423 = vadd.f32 0.0, %v2422
        %v2424 = vpop.f32.mrf.mxu0
        %v2425 = vadd.f32 0.0, %v2424
        %2426 = vmatmul.bf16.gmra.mxu0 %v2158
        %v2427 = vpop.f32.mrf.mxu0
        %v2428 = vadd.f32 0.0, %v2427
        %v2429 = vpop.f32.mrf.mxu0
        %v2430 = vadd.f32 0.0, %v2429
        %2431 = vmatmul.bf16.gmra.mxu0 %v2161
        %v2432 = vpop.f32.mrf.mxu0
        %v2433 = vadd.f32 0.0, %v2432
        %v2434 = vpop.f32.mrf.mxu0
        %v2435 = vadd.f32 0.0, %v2434
        %2436 = vmatmul.bf16.gmra.mxu0 %v2164
        %v2437 = vpop.f32.mrf.mxu0
        %v2438 = vadd.f32 0.0, %v2437
        %v2439 = vpop.f32.mrf.mxu0
        %v2440 = vadd.f32 0.0, %v2439
        %2441 = vmatmul.bf16.gmra.mxu0 %v2167
        %v2442 = vpop.f32.mrf.mxu0
        %v2443 = vadd.f32 0.0, %v2442
        %v2444 = vpop.f32.mrf.mxu0
        %v2445 = vadd.f32 0.0, %v2444
        %2446 = vmatmul.bf16.gmra.mxu0 %v2170
        %v2447 = vpop.f32.mrf.mxu0
        %v2448 = vadd.f32 0.0, %v2447
        %v2449 = vpop.f32.mrf.mxu0
        %v2450 = vadd.f32 0.0, %v2449
        %2451 = vmatmul.bf16.gmra.mxu0 %v2173
        %v2452 = vpop.f32.mrf.mxu0
        %v2453 = vadd.f32 0.0, %v2452
        %v2454 = vpop.f32.mrf.mxu0
        %v2455 = vadd.f32 0.0, %v2454
        %2456 = vdwg.mxu0
        %2457 = vmatpush.bf16.msra.mxu0 %v2335
        %2458 = vmatpush.bf16.msra.mxu0 %v2334
        %2459 = vmatpush.bf16.msra.mxu0 %v2333
        %2460 = vmatpush.bf16.msra.mxu0 %v2332
        %2461 = vmatpush.bf16.msra.mxu0 %v2331
        %2462 = vmatpush.bf16.msra.mxu0 %v2330
        %2463 = vmatpush.bf16.msra.mxu0 %v2329
        %2464 = vmatpush.bf16.msra.mxu0 %v2328
        %2465 = vmatmul.bf16.gmra.mxu0 %v2129
        %v2466 = vpop.f32.mrf.mxu0
        %v2467 = vadd.f32 %v2378, %v2466
        %v2468 = vpop.f32.mrf.mxu0
        %v2469 = vadd.f32 %v2380, %v2468
        %2470 = vmatmul.bf16.gmra.mxu0 %v2132
        %v2471 = vpop.f32.mrf.mxu0
        %v2472 = vadd.f32 %v2383, %v2471
        %v2473 = vpop.f32.mrf.mxu0
        %v2474 = vadd.f32 %v2385, %v2473
        %2475 = vmatmul.bf16.gmra.mxu0 %v2135
        %v2476 = vpop.f32.mrf.mxu0
        %v2477 = vadd.f32 %v2388, %v2476
        %v2478 = vpop.f32.mrf.mxu0
        %v2479 = vadd.f32 %v2390, %v2478
        %2480 = vmatmul.bf16.gmra.mxu0 %v2138
        %v2481 = vpop.f32.mrf.mxu0
        %v2482 = vadd.f32 %v2393, %v2481
        %v2483 = vpop.f32.mrf.mxu0
        %v2484 = vadd.f32 %v2395, %v2483
        %2485 = vmatmul.bf16.gmra.mxu0 %v2141
        %v2486 = vpop.f32.mrf.mxu0
        %v2487 = vadd.f32 %v2398, %v2486
        %v2488 = vpop.f32.mrf.mxu0
        %v2489 = vadd.f32 %v2400, %v2488
        %2490 = vmatmul.bf16.gmra.mxu0 %v2144
        %v2491 = vpop.f32.mrf.mxu0
        %v2492 = vadd.f32 %v2403, %v2491
        %v2493 = vpop.f32.mrf.mxu0
        %v2494 = vadd.f32 %v2405, %v2493
        %2495 = vmatmul.bf16.gmra.mxu0 %v2147
        %v2496 = vpop.f32.mrf.mxu0
        %v2497 = vadd.f32 %v2408, %v2496
        %v2498 = vpop.f32.mrf.mxu0
        %v2499 = vadd.f32 %v2410, %v2498
        %2500 = vmatmul.bf16.gmra.mxu0 %v2150
        %v2501 = vpop.f32.mrf.mxu0
        %v2502 = vadd.f32 %v2413, %v2501
        %v2503 = vpop.f32.mrf.mxu0
        %v2504 = vadd.f32 %v2415, %v2503
        %2505 = vmatmul.bf16.gmra.mxu0 %v2153
        %v2506 = vpop.f32.mrf.mxu0
        %v2507 = vadd.f32 %v2418, %v2506
        %v2508 = vpop.f32.mrf.mxu0
        %v2509 = vadd.f32 %v2420, %v2508
        %2510 = vmatmul.bf16.gmra.mxu0 %v2156
        %v2511 = vpop.f32.mrf.mxu0
        %v2512 = vadd.f32 %v2423, %v2511
        %v2513 = vpop.f32.mrf.mxu0
        %v2514 = vadd.f32 %v2425, %v2513
        %2515 = vmatmul.bf16.gmra.mxu0 %v2159
        %v2516 = vpop.f32.mrf.mxu0
        %v2517 = vadd.f32 %v2428, %v2516
        %v2518 = vpop.f32.mrf.mxu0
        %v2519 = vadd.f32 %v2430, %v2518
        %2520 = vmatmul.bf16.gmra.mxu0 %v2162
        %v2521 = vpop.f32.mrf.mxu0
        %v2522 = vadd.f32 %v2433, %v2521
        %v2523 = vpop.f32.mrf.mxu0
        %v2524 = vadd.f32 %v2435, %v2523
        %2525 = vmatmul.bf16.gmra.mxu0 %v2165
        %v2526 = vpop.f32.mrf.mxu0
        %v2527 = vadd.f32 %v2438, %v2526
        %v2528 = vpop.f32.mrf.mxu0
        %v2529 = vadd.f32 %v2440, %v2528
        %2530 = vmatmul.bf16.gmra.mxu0 %v2168
        %v2531 = vpop.f32.mrf.mxu0
        %v2532 = vadd.f32 %v2443, %v2531
        %v2533 = vpop.f32.mrf.mxu0
        %v2534 = vadd.f32 %v2445, %v2533
        %2535 = vmatmul.bf16.gmra.mxu0 %v2171
        %v2536 = vpop.f32.mrf.mxu0
        %v2537 = vadd.f32 %v2448, %v2536
        %v2538 = vpop.f32.mrf.mxu0
        %v2539 = vadd.f32 %v2450, %v2538
        %2540 = vmatmul.bf16.gmra.mxu0 %v2174
        %v2541 = vpop.f32.mrf.mxu0
        %v2542 = vadd.f32 %v2453, %v2541
        %v2543 = vpop.f32.mrf.mxu0
        %v2544 = vadd.f32 %v2455, %v2543
        %2545 = vdwg.mxu0
        %2546 = vmatpush.bf16.msra.mxu0 %v2343
        %2547 = vmatpush.bf16.msra.mxu0 %v2342
        %2548 = vmatpush.bf16.msra.mxu0 %v2341
        %2549 = vmatpush.bf16.msra.mxu0 %v2340
        %2550 = vmatpush.bf16.msra.mxu0 %v2339
        %2551 = vmatpush.bf16.msra.mxu0 %v2338
        %2552 = vmatpush.bf16.msra.mxu0 %v2337
        %2553 = vmatpush.bf16.msra.mxu0 %v2336
        %2554 = vmatmul.bf16.gmra.mxu0 %v2130
        %v2555 = vpop.f32.mrf.mxu0
        %v2556 = vadd.f32 %v2467, %v2555
        %v2557 = vpop.f32.mrf.mxu0
        %v2558 = vadd.f32 %v2469, %v2557
        %2559 = vmatmul.bf16.gmra.mxu0 %v2133
        %v2560 = vpop.f32.mrf.mxu0
        %v2561 = vadd.f32 %v2472, %v2560
        %v2562 = vpop.f32.mrf.mxu0
        %v2563 = vadd.f32 %v2474, %v2562
        %2564 = vmatmul.bf16.gmra.mxu0 %v2136
        %v2565 = vpop.f32.mrf.mxu0
        %v2566 = vadd.f32 %v2477, %v2565
        %v2567 = vpop.f32.mrf.mxu0
        %v2568 = vadd.f32 %v2479, %v2567
        %2569 = vmatmul.bf16.gmra.mxu0 %v2139
        %v2570 = vpop.f32.mrf.mxu0
        %v2571 = vadd.f32 %v2482, %v2570
        %v2572 = vpop.f32.mrf.mxu0
        %v2573 = vadd.f32 %v2484, %v2572
        %2574 = vmatmul.bf16.gmra.mxu0 %v2142
        %v2575 = vpop.f32.mrf.mxu0
        %v2576 = vadd.f32 %v2487, %v2575
        %v2577 = vpop.f32.mrf.mxu0
        %v2578 = vadd.f32 %v2489, %v2577
        %2579 = vmatmul.bf16.gmra.mxu0 %v2145
        %v2580 = vpop.f32.mrf.mxu0
        %v2581 = vadd.f32 %v2492, %v2580
        %v2582 = vpop.f32.mrf.mxu0
        %v2583 = vadd.f32 %v2494, %v2582
        %2584 = vmatmul.bf16.gmra.mxu0 %v2148
        %v2585 = vpop.f32.mrf.mxu0
        %v2586 = vadd.f32 %v2497, %v2585
        %v2587 = vpop.f32.mrf.mxu0
        %v2588 = vadd.f32 %v2499, %v2587
        %2589 = vmatmul.bf16.gmra.mxu0 %v2151
        %v2590 = vpop.f32.mrf.mxu0
        %v2591 = vadd.f32 %v2502, %v2590
        %v2592 = vpop.f32.mrf.mxu0
        %v2593 = vadd.f32 %v2504, %v2592
        %2594 = vmatmul.bf16.gmra.mxu0 %v2154
        %v2595 = vpop.f32.mrf.mxu0
        %v2596 = vadd.f32 %v2507, %v2595
        %v2597 = vpop.f32.mrf.mxu0
        %v2598 = vadd.f32 %v2509, %v2597
        %2599 = vmatmul.bf16.gmra.mxu0 %v2157
        %v2600 = vpop.f32.mrf.mxu0
        %v2601 = vadd.f32 %v2512, %v2600
        %v2602 = vpop.f32.mrf.mxu0
        %v2603 = vadd.f32 %v2514, %v2602
        %2604 = vmatmul.bf16.gmra.mxu0 %v2160
        %v2605 = vpop.f32.mrf.mxu0
        %v2606 = vadd.f32 %v2517, %v2605
        %v2607 = vpop.f32.mrf.mxu0
        %v2608 = vadd.f32 %v2519, %v2607
        %2609 = vmatmul.bf16.gmra.mxu0 %v2163
        %v2610 = vpop.f32.mrf.mxu0
        %v2611 = vadd.f32 %v2522, %v2610
        %v2612 = vpop.f32.mrf.mxu0
        %v2613 = vadd.f32 %v2524, %v2612
        %2614 = vmatmul.bf16.gmra.mxu0 %v2166
        %v2615 = vpop.f32.mrf.mxu0
        %v2616 = vadd.f32 %v2527, %v2615
        %v2617 = vpop.f32.mrf.mxu0
        %v2618 = vadd.f32 %v2529, %v2617
        %2619 = vmatmul.bf16.gmra.mxu0 %v2169
        %v2620 = vpop.f32.mrf.mxu0
        %v2621 = vadd.f32 %v2532, %v2620
        %v2622 = vpop.f32.mrf.mxu0
        %v2623 = vadd.f32 %v2534, %v2622
        %2624 = vmatmul.bf16.gmra.mxu0 %v2172
        %v2625 = vpop.f32.mrf.mxu0
        %v2626 = vadd.f32 %v2537, %v2625
        %v2627 = vpop.f32.mrf.mxu0
        %v2628 = vadd.f32 %v2539, %v2627
        %2629 = vmatmul.bf16.gmra.mxu0 %v2175
        %v2630 = vpop.f32.mrf.mxu0
        %v2631 = vadd.f32 %v2542, %v2630
        %v2632 = vpop.f32.mrf.mxu0
        %v2633 = vadd.f32 %v2544, %v2632
        %2634 = vdwg.mxu0
        %v2699 = vunpack.c.l.b16 %v1743
        %v2700 = vunpack.c.h.b16 %v1743
        %v2701 = vunpack.c.l.b16 %v1744
        %v2702 = vunpack.c.l.b16 %v1745
        %v2703 = vunpack.c.h.b16 %v1745
        %v2704 = vunpack.c.l.b16 %v1746
        %v2705 = vunpack.c.l.b16 %v1747
        %v2706 = vunpack.c.h.b16 %v1747
        %v2707 = vunpack.c.l.b16 %v1748
        %v2708 = vunpack.c.l.b16 %v1749
        %v2709 = vunpack.c.h.b16 %v1749
        %v2710 = vunpack.c.l.b16 %v1750
        %v2711 = vunpack.c.l.b16 %v1751
        %v2712 = vunpack.c.h.b16 %v1751
        %v2713 = vunpack.c.l.b16 %v1752
        %v2714 = vunpack.c.l.b16 %v1753
        %v2715 = vunpack.c.h.b16 %v1753
        %v2716 = vunpack.c.l.b16 %v1754
        %v2717 = vunpack.c.l.b16 %v1755
        %v2718 = vunpack.c.h.b16 %v1755
        %v2719 = vunpack.c.l.b16 %v1756
        %v2720 = vunpack.c.l.b16 %v1757
        %v2721 = vunpack.c.h.b16 %v1757
        %v2722 = vunpack.c.l.b16 %v1758
        %v2723 = vunpack.c.l.b16 %v1759
        %v2724 = vunpack.c.h.b16 %v1759
        %v2725 = vunpack.c.l.b16 %v1760
        %v2726 = vunpack.c.l.b16 %v1761
        %v2727 = vunpack.c.h.b16 %v1761
        %v2728 = vunpack.c.l.b16 %v1762
        %v2729 = vunpack.c.l.b16 %v1763
        %v2730 = vunpack.c.h.b16 %v1763
        %v2731 = vunpack.c.l.b16 %v1764
        %v2732 = vunpack.c.l.b16 %v1765
        %v2733 = vunpack.c.h.b16 %v1765
        %v2734 = vunpack.c.l.b16 %v1766
        %v2735 = vunpack.c.l.b16 %v1767
        %v2736 = vunpack.c.h.b16 %v1767
        %v2737 = vunpack.c.l.b16 %v1768
        %v2738 = vunpack.c.l.b16 %v1769
        %v2739 = vunpack.c.h.b16 %v1769
        %v2740 = vunpack.c.l.b16 %v1770
        %v2741 = vunpack.c.l.b16 %v1771
        %v2742 = vunpack.c.h.b16 %v1771
        %v2743 = vunpack.c.l.b16 %v1772
        %v2744 = vunpack.c.l.b16 %v1773
        %v2745 = vunpack.c.h.b16 %v1773
        %v2746 = vunpack.c.l.b16 %v1774
        %v2747 = vunpack.c.l.b16 %v1775
        %v2748 = vunpack.c.h.b16 %v1775
        %v2749 = vunpack.c.l.b16 %v1776
        %v2750 = vunpack.c.l.b16 %v1777
        %v2751 = vunpack.c.h.b16 %v1777
        %v2752 = vunpack.c.l.b16 %v1778
        %v2753 = vunpack.c.l.b16 %v1779
        %v2754 = vunpack.c.h.b16 %v1779
        %v2755 = vunpack.c.l.b16 %v1780
        %v2756 = vunpack.c.l.b16 %v1781
        %v2757 = vunpack.c.h.b16 %v1781
        %v2758 = vunpack.c.l.b16 %v1782
        %v2759 = vunpack.c.l.b16 %v1783
        %v2760 = vunpack.c.h.b16 %v1783
        %v2761 = vunpack.c.l.b16 %v1784
        %v2762 = vunpack.c.l.b16 %v1785
        %v2763 = vunpack.c.h.b16 %v1785
        %v2764 = vunpack.c.l.b16 %v1786
        %v2765 = vunpack.c.l.b16 %v1787
        %v2766 = vunpack.c.h.b16 %v1787
        %v2767 = vunpack.c.l.b16 %v1788
        %v2768 = vunpack.c.l.b16 %v1789
        %v2769 = vunpack.c.h.b16 %v1789
        %v2770 = vunpack.c.l.b16 %v1790
        %v2771 = vunpack.c.l.b16 %v1791
        %v2772 = vunpack.c.h.b16 %v1791
        %v2773 = vunpack.c.l.b16 %v1792
        %v2774 = vunpack.c.l.b16 %v1793
        %v2775 = vunpack.c.h.b16 %v1793
        %v2776 = vunpack.c.l.b16 %v1794
        %v2777 = vunpack.c.l.b16 %v1795
        %v2778 = vunpack.c.h.b16 %v1795
        %v2779 = vunpack.c.l.b16 %v1796
        %v2780 = vunpack.c.l.b16 %v1797
        %v2781 = vunpack.c.h.b16 %v1797
        %v2782 = vunpack.c.l.b16 %v1798
        %v2783 = vunpack.c.l.b16 %v1799
        %v2784 = vunpack.c.h.b16 %v1799
        %v2785 = vunpack.c.l.b16 %v1800
        %v2786 = vunpack.c.l.b16 %v1801
        %v2787 = vunpack.c.h.b16 %v1801
        %v2788 = vunpack.c.l.b16 %v1802
        %v2789 = vunpack.c.l.b16 %v1803
        %v2790 = vunpack.c.h.b16 %v1803
        %v2791 = vunpack.c.l.b16 %v1804
        %v2792 = vunpack.c.l.b16 %v1805
        %v2793 = vunpack.c.h.b16 %v1805
        %v2794 = vunpack.c.l.b16 %v1806
        %v2795 = vpack.c.b16 %v2702, %v2699
        %v2796 = vpack.c.b16 %v2703, %v2700
        %v2797 = vpack.c.b16 %v2704, %v2701
        %v2798 = vpack.c.b16 %v2708, %v2705
        %v2799 = vpack.c.b16 %v2709, %v2706
        %v2800 = vpack.c.b16 %v2710, %v2707
        %v2801 = vpack.c.b16 %v2714, %v2711
        %v2802 = vpack.c.b16 %v2715, %v2712
        %v2803 = vpack.c.b16 %v2716, %v2713
        %v2804 = vpack.c.b16 %v2720, %v2717
        %v2805 = vpack.c.b16 %v2721, %v2718
        %v2806 = vpack.c.b16 %v2722, %v2719
        %v2807 = vpack.c.b16 %v2726, %v2723
        %v2808 = vpack.c.b16 %v2727, %v2724
        %v2809 = vpack.c.b16 %v2728, %v2725
        %v2810 = vpack.c.b16 %v2732, %v2729
        %v2811 = vpack.c.b16 %v2733, %v2730
        %v2812 = vpack.c.b16 %v2734, %v2731
        %v2813 = vpack.c.b16 %v2738, %v2735
        %v2814 = vpack.c.b16 %v2739, %v2736
        %v2815 = vpack.c.b16 %v2740, %v2737
        %v2816 = vpack.c.b16 %v2744, %v2741
        %v2817 = vpack.c.b16 %v2745, %v2742
        %v2818 = vpack.c.b16 %v2746, %v2743
        %v2819 = vpack.c.b16 %v2750, %v2747
        %v2820 = vpack.c.b16 %v2751, %v2748
        %v2821 = vpack.c.b16 %v2752, %v2749
        %v2822 = vpack.c.b16 %v2756, %v2753
        %v2823 = vpack.c.b16 %v2757, %v2754
        %v2824 = vpack.c.b16 %v2758, %v2755
        %v2825 = vpack.c.b16 %v2762, %v2759
        %v2826 = vpack.c.b16 %v2763, %v2760
        %v2827 = vpack.c.b16 %v2764, %v2761
        %v2828 = vpack.c.b16 %v2768, %v2765
        %v2829 = vpack.c.b16 %v2769, %v2766
        %v2830 = vpack.c.b16 %v2770, %v2767
        %v2831 = vpack.c.b16 %v2774, %v2771
        %v2832 = vpack.c.b16 %v2775, %v2772
        %v2833 = vpack.c.b16 %v2776, %v2773
        %v2834 = vpack.c.b16 %v2780, %v2777
        %v2835 = vpack.c.b16 %v2781, %v2778
        %v2836 = vpack.c.b16 %v2782, %v2779
        %v2837 = vpack.c.b16 %v2786, %v2783
        %v2838 = vpack.c.b16 %v2787, %v2784
        %v2839 = vpack.c.b16 %v2788, %v2785
        %v2840 = vpack.c.b16 %v2792, %v2789
        %v2841 = vpack.c.b16 %v2793, %v2790
        %v2842 = vpack.c.b16 %v2794, %v2791
        %v2939 = vunpack.c.l.b16 %v1807
        %v2940 = vunpack.c.l.b16 %v1808
        %v2941 = vunpack.c.l.b16 %v1809
        %v2942 = vunpack.c.l.b16 %v1810
        %v2943 = vunpack.c.l.b16 %v1811
        %v2944 = vunpack.c.l.b16 %v1812
        %v2945 = vunpack.c.l.b16 %v1813
        %v2946 = vunpack.c.l.b16 %v1814
        %v2947 = vunpack.c.l.b16 %v1815
        %v2948 = vunpack.c.l.b16 %v1816
        %v2949 = vunpack.c.l.b16 %v1817
        %v2950 = vunpack.c.l.b16 %v1818
        %v2951 = vunpack.c.l.b16 %v1819
        %v2952 = vunpack.c.l.b16 %v1820
        %v2953 = vunpack.c.l.b16 %v1821
        %v2954 = vunpack.c.l.b16 %v1822
        %v2955 = vunpack.c.l.b16 %v1823
        %v2956 = vunpack.c.l.b16 %v1824
        %v2957 = vunpack.c.l.b16 %v1825
        %v2958 = vunpack.c.l.b16 %v1826
        %v2959 = vunpack.c.l.b16 %v1827
        %v2960 = vunpack.c.l.b16 %v1828
        %v2961 = vunpack.c.l.b16 %v1829
        %v2962 = vunpack.c.l.b16 %v1830
        %v2963 = vunpack.c.l.b16 %v1831
        %v2964 = vunpack.c.l.b16 %v1832
        %v2965 = vunpack.c.l.b16 %v1833
        %v2966 = vunpack.c.l.b16 %v1834
        %v2967 = vunpack.c.l.b16 %v1835
        %v2968 = vunpack.c.l.b16 %v1836
        %v2969 = vunpack.c.l.b16 %v1837
        %v2970 = vunpack.c.l.b16 %v1838
        %v2971 = vunpack.c.l.b16 %v1839
        %v2972 = vunpack.c.l.b16 %v1840
        %v2973 = vunpack.c.l.b16 %v1841
        %v2974 = vunpack.c.l.b16 %v1842
        %v2975 = vunpack.c.l.b16 %v1843
        %v2976 = vunpack.c.l.b16 %v1844
        %v2977 = vunpack.c.l.b16 %v1845
        %v2978 = vunpack.c.l.b16 %v1846
        %v2979 = vunpack.c.l.b16 %v1847
        %v2980 = vunpack.c.l.b16 %v1848
        %v2981 = vunpack.c.l.b16 %v1849
        %v2982 = vunpack.c.l.b16 %v1850
        %v2983 = vunpack.c.l.b16 %v1851
        %v2984 = vunpack.c.l.b16 %v1852
        %v2985 = vunpack.c.l.b16 %v1853
        %v2986 = vunpack.c.l.b16 %v1854
        %v2987 = vpack.c.b16 %v2940, %v2939
        %v2988 = vpack.c.b16 %v2942, %v2941
        %v2989 = vpack.c.b16 %v2944, %v2943
        %v2990 = vpack.c.b16 %v2946, %v2945
        %v2991 = vpack.c.b16 %v2948, %v2947
        %v2992 = vpack.c.b16 %v2950, %v2949
        %v2993 = vpack.c.b16 %v2952, %v2951
        %v2994 = vpack.c.b16 %v2954, %v2953
        %v2995 = vpack.c.b16 %v2956, %v2955
        %v2996 = vpack.c.b16 %v2958, %v2957
        %v2997 = vpack.c.b16 %v2960, %v2959
        %v2998 = vpack.c.b16 %v2962, %v2961
        %v2999 = vpack.c.b16 %v2964, %v2963
        %v3000 = vpack.c.b16 %v2966, %v2965
        %v3001 = vpack.c.b16 %v2968, %v2967
        %v3002 = vpack.c.b16 %v2970, %v2969
        %v3003 = vpack.c.b16 %v2972, %v2971
        %v3004 = vpack.c.b16 %v2974, %v2973
        %v3005 = vpack.c.b16 %v2976, %v2975
        %v3006 = vpack.c.b16 %v2978, %v2977
        %v3007 = vpack.c.b16 %v2980, %v2979
        %v3008 = vpack.c.b16 %v2982, %v2981
        %v3009 = vpack.c.b16 %v2984, %v2983
        %v3010 = vpack.c.b16 %v2986, %v2985
        %3035 = vmatpush.bf16.msra.mxu0 %v2994
        %3036 = vmatpush.bf16.msra.mxu0 %v2993
        %3037 = vmatpush.bf16.msra.mxu0 %v2992
        %3038 = vmatpush.bf16.msra.mxu0 %v2991
        %3039 = vmatpush.bf16.msra.mxu0 %v2990
        %3040 = vmatpush.bf16.msra.mxu0 %v2989
        %3041 = vmatpush.bf16.msra.mxu0 %v2988
        %3042 = vmatpush.bf16.msra.mxu0 %v2987
        %3043 = vmatmul.bf16.gmra.mxu0 %v2795
        %v3044 = vpop.f32.mrf.mxu0
        %v3045 = vadd.f32 %v2556, %v3044
        %v3046 = vpop.f32.mrf.mxu0
        %v3047 = vadd.f32 %v2558, %v3046
        %3048 = vmatmul.bf16.gmra.mxu0 %v2798
        %v3049 = vpop.f32.mrf.mxu0
        %v3050 = vadd.f32 %v2561, %v3049
        %v3051 = vpop.f32.mrf.mxu0
        %v3052 = vadd.f32 %v2563, %v3051
        %3053 = vmatmul.bf16.gmra.mxu0 %v2801
        %v3054 = vpop.f32.mrf.mxu0
        %v3055 = vadd.f32 %v2566, %v3054
        %v3056 = vpop.f32.mrf.mxu0
        %v3057 = vadd.f32 %v2568, %v3056
        %3058 = vmatmul.bf16.gmra.mxu0 %v2804
        %v3059 = vpop.f32.mrf.mxu0
        %v3060 = vadd.f32 %v2571, %v3059
        %v3061 = vpop.f32.mrf.mxu0
        %v3062 = vadd.f32 %v2573, %v3061
        %3063 = vmatmul.bf16.gmra.mxu0 %v2807
        %v3064 = vpop.f32.mrf.mxu0
        %v3065 = vadd.f32 %v2576, %v3064
        %v3066 = vpop.f32.mrf.mxu0
        %v3067 = vadd.f32 %v2578, %v3066
        %3068 = vmatmul.bf16.gmra.mxu0 %v2810
        %v3069 = vpop.f32.mrf.mxu0
        %v3070 = vadd.f32 %v2581, %v3069
        %v3071 = vpop.f32.mrf.mxu0
        %v3072 = vadd.f32 %v2583, %v3071
        %3073 = vmatmul.bf16.gmra.mxu0 %v2813
        %v3074 = vpop.f32.mrf.mxu0
        %v3075 = vadd.f32 %v2586, %v3074
        %v3076 = vpop.f32.mrf.mxu0
        %v3077 = vadd.f32 %v2588, %v3076
        %3078 = vmatmul.bf16.gmra.mxu0 %v2816
        %v3079 = vpop.f32.mrf.mxu0
        %v3080 = vadd.f32 %v2591, %v3079
        %v3081 = vpop.f32.mrf.mxu0
        %v3082 = vadd.f32 %v2593, %v3081
        %3083 = vmatmul.bf16.gmra.mxu0 %v2819
        %v3084 = vpop.f32.mrf.mxu0
        %v3085 = vadd.f32 %v2596, %v3084
        %v3086 = vpop.f32.mrf.mxu0
        %v3087 = vadd.f32 %v2598, %v3086
        %3088 = vmatmul.bf16.gmra.mxu0 %v2822
        %v3089 = vpop.f32.mrf.mxu0
        %v3090 = vadd.f32 %v2601, %v3089
        %v3091 = vpop.f32.mrf.mxu0
        %v3092 = vadd.f32 %v2603, %v3091
        %3093 = vmatmul.bf16.gmra.mxu0 %v2825
        %v3094 = vpop.f32.mrf.mxu0
        %v3095 = vadd.f32 %v2606, %v3094
        %v3096 = vpop.f32.mrf.mxu0
        %v3097 = vadd.f32 %v2608, %v3096
        %3098 = vmatmul.bf16.gmra.mxu0 %v2828
        %v3099 = vpop.f32.mrf.mxu0
        %v3100 = vadd.f32 %v2611, %v3099
        %v3101 = vpop.f32.mrf.mxu0
        %v3102 = vadd.f32 %v2613, %v3101
        %3103 = vmatmul.bf16.gmra.mxu0 %v2831
        %v3104 = vpop.f32.mrf.mxu0
        %v3105 = vadd.f32 %v2616, %v3104
        %v3106 = vpop.f32.mrf.mxu0
        %v3107 = vadd.f32 %v2618, %v3106
        %3108 = vmatmul.bf16.gmra.mxu0 %v2834
        %v3109 = vpop.f32.mrf.mxu0
        %v3110 = vadd.f32 %v2621, %v3109
        %v3111 = vpop.f32.mrf.mxu0
        %v3112 = vadd.f32 %v2623, %v3111
        %3113 = vmatmul.bf16.gmra.mxu0 %v2837
        %v3114 = vpop.f32.mrf.mxu0
        %v3115 = vadd.f32 %v2626, %v3114
        %v3116 = vpop.f32.mrf.mxu0
        %v3117 = vadd.f32 %v2628, %v3116
        %3118 = vmatmul.bf16.gmra.mxu0 %v2840
        %v3119 = vpop.f32.mrf.mxu0
        %v3120 = vadd.f32 %v2631, %v3119
        %v3121 = vpop.f32.mrf.mxu0
        %v3122 = vadd.f32 %v2633, %v3121
        %3123 = vdwg.mxu0
        %3124 = vmatpush.bf16.msra.mxu0 %v3002
        %3125 = vmatpush.bf16.msra.mxu0 %v3001
        %3126 = vmatpush.bf16.msra.mxu0 %v3000
        %3127 = vmatpush.bf16.msra.mxu0 %v2999
        %3128 = vmatpush.bf16.msra.mxu0 %v2998
        %3129 = vmatpush.bf16.msra.mxu0 %v2997
        %3130 = vmatpush.bf16.msra.mxu0 %v2996
        %3131 = vmatpush.bf16.msra.mxu0 %v2995
        %3132 = vmatmul.bf16.gmra.mxu0 %v2796
        %v3133 = vpop.f32.mrf.mxu0
        %v3134 = vadd.f32 %v3045, %v3133
        %v3135 = vpop.f32.mrf.mxu0
        %v3136 = vadd.f32 %v3047, %v3135
        %3137 = vmatmul.bf16.gmra.mxu0 %v2799
        %v3138 = vpop.f32.mrf.mxu0
        %v3139 = vadd.f32 %v3050, %v3138
        %v3140 = vpop.f32.mrf.mxu0
        %v3141 = vadd.f32 %v3052, %v3140
        %3142 = vmatmul.bf16.gmra.mxu0 %v2802
        %v3143 = vpop.f32.mrf.mxu0
        %v3144 = vadd.f32 %v3055, %v3143
        %v3145 = vpop.f32.mrf.mxu0
        %v3146 = vadd.f32 %v3057, %v3145
        %3147 = vmatmul.bf16.gmra.mxu0 %v2805
        %v3148 = vpop.f32.mrf.mxu0
        %v3149 = vadd.f32 %v3060, %v3148
        %v3150 = vpop.f32.mrf.mxu0
        %v3151 = vadd.f32 %v3062, %v3150
        %3152 = vmatmul.bf16.gmra.mxu0 %v2808
        %v3153 = vpop.f32.mrf.mxu0
        %v3154 = vadd.f32 %v3065, %v3153
        %v3155 = vpop.f32.mrf.mxu0
        %v3156 = vadd.f32 %v3067, %v3155
        %3157 = vmatmul.bf16.gmra.mxu0 %v2811
        %v3158 = vpop.f32.mrf.mxu0
        %v3159 = vadd.f32 %v3070, %v3158
        %v3160 = vpop.f32.mrf.mxu0
        %v3161 = vadd.f32 %v3072, %v3160
        %3162 = vmatmul.bf16.gmra.mxu0 %v2814
        %v3163 = vpop.f32.mrf.mxu0
        %v3164 = vadd.f32 %v3075, %v3163
        %v3165 = vpop.f32.mrf.mxu0
        %v3166 = vadd.f32 %v3077, %v3165
        %3167 = vmatmul.bf16.gmra.mxu0 %v2817
        %v3168 = vpop.f32.mrf.mxu0
        %v3169 = vadd.f32 %v3080, %v3168
        %v3170 = vpop.f32.mrf.mxu0
        %v3171 = vadd.f32 %v3082, %v3170
        %3172 = vmatmul.bf16.gmra.mxu0 %v2820
        %v3173 = vpop.f32.mrf.mxu0
        %v3174 = vadd.f32 %v3085, %v3173
        %v3175 = vpop.f32.mrf.mxu0
        %v3176 = vadd.f32 %v3087, %v3175
        %3177 = vmatmul.bf16.gmra.mxu0 %v2823
        %v3178 = vpop.f32.mrf.mxu0
        %v3179 = vadd.f32 %v3090, %v3178
        %v3180 = vpop.f32.mrf.mxu0
        %v3181 = vadd.f32 %v3092, %v3180
        %3182 = vmatmul.bf16.gmra.mxu0 %v2826
        %v3183 = vpop.f32.mrf.mxu0
        %v3184 = vadd.f32 %v3095, %v3183
        %v3185 = vpop.f32.mrf.mxu0
        %v3186 = vadd.f32 %v3097, %v3185
        %3187 = vmatmul.bf16.gmra.mxu0 %v2829
        %v3188 = vpop.f32.mrf.mxu0
        %v3189 = vadd.f32 %v3100, %v3188
        %v3190 = vpop.f32.mrf.mxu0
        %v3191 = vadd.f32 %v3102, %v3190
        %3192 = vmatmul.bf16.gmra.mxu0 %v2832
        %v3193 = vpop.f32.mrf.mxu0
        %v3194 = vadd.f32 %v3105, %v3193
        %v3195 = vpop.f32.mrf.mxu0
        %v3196 = vadd.f32 %v3107, %v3195
        %3197 = vmatmul.bf16.gmra.mxu0 %v2835
        %v3198 = vpop.f32.mrf.mxu0
        %v3199 = vadd.f32 %v3110, %v3198
        %v3200 = vpop.f32.mrf.mxu0
        %v3201 = vadd.f32 %v3112, %v3200
        %3202 = vmatmul.bf16.gmra.mxu0 %v2838
        %v3203 = vpop.f32.mrf.mxu0
        %v3204 = vadd.f32 %v3115, %v3203
        %v3205 = vpop.f32.mrf.mxu0
        %v3206 = vadd.f32 %v3117, %v3205
        %3207 = vmatmul.bf16.gmra.mxu0 %v2841
        %v3208 = vpop.f32.mrf.mxu0
        %v3209 = vadd.f32 %v3120, %v3208
        %v3210 = vpop.f32.mrf.mxu0
        %v3211 = vadd.f32 %v3122, %v3210
        %3212 = vdwg.mxu0
        %3213 = vmatpush.bf16.msra.mxu0 %v3010
        %3214 = vmatpush.bf16.msra.mxu0 %v3009
        %3215 = vmatpush.bf16.msra.mxu0 %v3008
        %3216 = vmatpush.bf16.msra.mxu0 %v3007
        %3217 = vmatpush.bf16.msra.mxu0 %v3006
        %3218 = vmatpush.bf16.msra.mxu0 %v3005
        %3219 = vmatpush.bf16.msra.mxu0 %v3004
        %3220 = vmatpush.bf16.msra.mxu0 %v3003
        %3221 = vmatmul.bf16.gmra.mxu0 %v2797
        %v3222 = vpop.f32.mrf.mxu0
        %v3223 = vadd.f32 %v3134, %v3222
        %v3224 = vpop.f32.mrf.mxu0
        %v3225 = vadd.f32 %v3136, %v3224
        %3226 = vmatmul.bf16.gmra.mxu0 %v2800
        %v3227 = vpop.f32.mrf.mxu0
        %v3228 = vadd.f32 %v3139, %v3227
        %v3229 = vpop.f32.mrf.mxu0
        %v3230 = vadd.f32 %v3141, %v3229
        %3231 = vmatmul.bf16.gmra.mxu0 %v2803
        %v3232 = vpop.f32.mrf.mxu0
        %v3233 = vadd.f32 %v3144, %v3232
        %v3234 = vpop.f32.mrf.mxu0
        %v3235 = vadd.f32 %v3146, %v3234
        %3236 = vmatmul.bf16.gmra.mxu0 %v2806
        %v3237 = vpop.f32.mrf.mxu0
        %v3238 = vadd.f32 %v3149, %v3237
        %v3239 = vpop.f32.mrf.mxu0
        %v3240 = vadd.f32 %v3151, %v3239
        %3241 = vmatmul.bf16.gmra.mxu0 %v2809
        %v3242 = vpop.f32.mrf.mxu0
        %v3243 = vadd.f32 %v3154, %v3242
        %v3244 = vpop.f32.mrf.mxu0
        %v3245 = vadd.f32 %v3156, %v3244
        %3246 = vmatmul.bf16.gmra.mxu0 %v2812
        %v3247 = vpop.f32.mrf.mxu0
        %v3248 = vadd.f32 %v3159, %v3247
        %v3249 = vpop.f32.mrf.mxu0
        %v3250 = vadd.f32 %v3161, %v3249
        %3251 = vmatmul.bf16.gmra.mxu0 %v2815
        %v3252 = vpop.f32.mrf.mxu0
        %v3253 = vadd.f32 %v3164, %v3252
        %v3254 = vpop.f32.mrf.mxu0
        %v3255 = vadd.f32 %v3166, %v3254
        %3256 = vmatmul.bf16.gmra.mxu0 %v2818
        %v3257 = vpop.f32.mrf.mxu0
        %v3258 = vadd.f32 %v3169, %v3257
        %v3259 = vpop.f32.mrf.mxu0
        %v3260 = vadd.f32 %v3171, %v3259
        %3261 = vmatmul.bf16.gmra.mxu0 %v2821
        %v3262 = vpop.f32.mrf.mxu0
        %v3263 = vadd.f32 %v3174, %v3262
        %v3264 = vpop.f32.mrf.mxu0
        %v3265 = vadd.f32 %v3176, %v3264
        %3266 = vmatmul.bf16.gmra.mxu0 %v2824
        %v3267 = vpop.f32.mrf.mxu0
        %v3268 = vadd.f32 %v3179, %v3267
        %v3269 = vpop.f32.mrf.mxu0
        %v3270 = vadd.f32 %v3181, %v3269
        %3271 = vmatmul.bf16.gmra.mxu0 %v2827
        %v3272 = vpop.f32.mrf.mxu0
        %v3273 = vadd.f32 %v3184, %v3272
        %v3274 = vpop.f32.mrf.mxu0
        %v3275 = vadd.f32 %v3186, %v3274
        %3276 = vmatmul.bf16.gmra.mxu0 %v2830
        %v3277 = vpop.f32.mrf.mxu0
        %v3278 = vadd.f32 %v3189, %v3277
        %v3279 = vpop.f32.mrf.mxu0
        %v3280 = vadd.f32 %v3191, %v3279
        %3281 = vmatmul.bf16.gmra.mxu0 %v2833
        %v3282 = vpop.f32.mrf.mxu0
        %v3283 = vadd.f32 %v3194, %v3282
        %v3284 = vpop.f32.mrf.mxu0
        %v3285 = vadd.f32 %v3196, %v3284
        %3286 = vmatmul.bf16.gmra.mxu0 %v2836
        %v3287 = vpop.f32.mrf.mxu0
        %v3288 = vadd.f32 %v3199, %v3287
        %v3289 = vpop.f32.mrf.mxu0
        %v3290 = vadd.f32 %v3201, %v3289
        %3291 = vmatmul.bf16.gmra.mxu0 %v2839
        %v3292 = vpop.f32.mrf.mxu0
        %v3293 = vadd.f32 %v3204, %v3292
        %v3294 = vpop.f32.mrf.mxu0
        %v3295 = vadd.f32 %v3206, %v3294
        %3296 = vmatmul.bf16.gmra.mxu0 %v2842
        %v3297 = vpop.f32.mrf.mxu0
        %v3298 = vadd.f32 %v3209, %v3297
        %v3299 = vpop.f32.mrf.mxu0
        %v3300 = vadd.f32 %v3211, %v3299
        %3301 = vdwg.mxu0
        %s3302 = scalar_lea.vmem [#allocation2], 48
        %v3303 = vld [vmem:[%s3302] sm:$0xff]
        %v3304 = vld [vmem:[%s3302 + $0x8] sm:$0xf]
        %v3305 = vld [vmem:[%s3302 + $0xc] sm:$0xff]
        %v3306 = vld [vmem:[%s3302 + $0x14] sm:$0xf]
        %v3307 = vld [vmem:[%s3302 + $0x18] sm:$0xff]
        %v3308 = vld [vmem:[%s3302 + $0x20] sm:$0xf]
        %v3309 = vld [vmem:[%s3302 + $0x24] sm:$0xff]
        %v3310 = vld [vmem:[%s3302 + $0x2c] sm:$0xf]
        %v3311 = vld [vmem:[%s3302 + $0x30] sm:$0xff]
        %v3312 = vld [vmem:[%s3302 + $0x38] sm:$0xf]
        %v3313 = vld [vmem:[%s3302 + $0x3c] sm:$0xff]
        %v3314 = vld [vmem:[%s3302 + $0x44] sm:$0xf]
        %v3315 = vld [vmem:[%s3302 + $0x48] sm:$0xff]
        %v3316 = vld [vmem:[%s3302 + $0x50] sm:$0xf]
        %v3317 = vld [vmem:[%s3302 + $0x54] sm:$0xff]
        %v3318 = vld [vmem:[%s3302 + $0x5c] sm:$0xf]
        %v3319 = vld [vmem:[%s3302 + $0x60] sm:$0xff]
        %v3320 = vld [vmem:[%s3302 + $0x68] sm:$0xf]
        %v3321 = vld [vmem:[%s3302 + $0x6c] sm:$0xff]
        %v3322 = vld [vmem:[%s3302 + $0x74] sm:$0xf]
        %v3323 = vld [vmem:[%s3302 + $0x78] sm:$0xff]
        %v3324 = vld [vmem:[%s3302 + $0x80] sm:$0xf]
        %v3325 = vld [vmem:[%s3302 + $0x84] sm:$0xff]
        %v3326 = vld [vmem:[%s3302 + $0x8c] sm:$0xf]
        %v3327 = vld [vmem:[%s3302 + $0x90] sm:$0xff]
        %v3328 = vld [vmem:[%s3302 + $0x98] sm:$0xf]
        %v3329 = vld [vmem:[%s3302 + $0x9c] sm:$0xff]
        %v3330 = vld [vmem:[%s3302 + $0xa4] sm:$0xf]
        %v3331 = vld [vmem:[%s3302 + $0xa8] sm:$0xff]
        %v3332 = vld [vmem:[%s3302 + $0xb0] sm:$0xf]
        %v3333 = vld [vmem:[%s3302 + $0xb4] sm:$0xff]
        %v3334 = vld [vmem:[%s3302 + $0xbc] sm:$0xf]
        %v3335 = vld [vmem:[%s3302 + $0xc0] sm:$0xff]
        %v3336 = vld [vmem:[%s3302 + $0xc8] sm:$0xf]
        %v3337 = vld [vmem:[%s3302 + $0xcc] sm:$0xff]
        %v3338 = vld [vmem:[%s3302 + $0xd4] sm:$0xf]
        %v3339 = vld [vmem:[%s3302 + $0xd8] sm:$0xff]
        %v3340 = vld [vmem:[%s3302 + $0xe0] sm:$0xf]
        %v3341 = vld [vmem:[%s3302 + $0xe4] sm:$0xff]
        %v3342 = vld [vmem:[%s3302 + $0xec] sm:$0xf]
        %v3343 = vld [vmem:[%s3302 + $0xf0] sm:$0xff]
        %v3344 = vld [vmem:[%s3302 + $0xf8] sm:$0xf]
        %v3345 = vld [vmem:[%s3302 + $0xfc] sm:$0xff]
        %v3346 = vld [vmem:[%s3302 + $0x104] sm:$0xf]
        %v3347 = vld [vmem:[%s3302 + $0x108] sm:$0xff]
        %v3348 = vld [vmem:[%s3302 + $0x110] sm:$0xf]
        %v3349 = vld [vmem:[%s3302 + $0x114] sm:$0xff]
        %v3350 = vld [vmem:[%s3302 + $0x11c] sm:$0xf]
        %v3351 = vld [vmem:[%s3302 + $0x120] sm:$0xff]
        %v3352 = vld [vmem:[%s3302 + $0x128] sm:$0xf]
        %v3353 = vld [vmem:[%s3302 + $0x12c] sm:$0xff]
        %v3354 = vld [vmem:[%s3302 + $0x134] sm:$0xf]
        %v3355 = vld [vmem:[%s3302 + $0x138] sm:$0xff]
        %v3356 = vld [vmem:[%s3302 + $0x140] sm:$0xf]
        %v3357 = vld [vmem:[%s3302 + $0x144] sm:$0xff]
        %v3358 = vld [vmem:[%s3302 + $0x14c] sm:$0xf]
        %v3359 = vld [vmem:[%s3302 + $0x150] sm:$0xff]
        %v3360 = vld [vmem:[%s3302 + $0x158] sm:$0xf]
        %v3361 = vld [vmem:[%s3302 + $0x15c] sm:$0xff]
        %v3362 = vld [vmem:[%s3302 + $0x164] sm:$0xf]
        %v3363 = vld [vmem:[%s3302 + $0x168] sm:$0xff]
        %v3364 = vld [vmem:[%s3302 + $0x170] sm:$0xf]
        %v3365 = vld [vmem:[%s3302 + $0x174] sm:$0xff]
        %v3366 = vld [vmem:[%s3302 + $0x17c] sm:$0xf]
        %s3367 = scalar_lea.vmem [#allocation3], 384
        %v3368 = vld [vmem:[%s3367] sm:$0xf]
        %v3369 = vld [vmem:[%s3367 + $0x4] sm:$0xf]
        %v3370 = vld [vmem:[%s3367 + $0x8] sm:$0xf]
        %v3371 = vld [vmem:[%s3367 + $0xc] sm:$0xf]
        %v3372 = vld [vmem:[%s3367 + $0x10] sm:$0xf]
        %v3373 = vld [vmem:[%s3367 + $0x14] sm:$0xf]
        %v3374 = vld [vmem:[%s3367 + $0x18] sm:$0xf]
        %v3375 = vld [vmem:[%s3367 + $0x1c] sm:$0xf]
        %v3376 = vld [vmem:[%s3367 + $0x20] sm:$0xf]
        %v3377 = vld [vmem:[%s3367 + $0x24] sm:$0xf]
        %v3378 = vld [vmem:[%s3367 + $0x28] sm:$0xf]
        %v3379 = vld [vmem:[%s3367 + $0x2c] sm:$0xf]
        %v3380 = vld [vmem:[%s3367 + $0x30] sm:$0xf]
        %v3381 = vld [vmem:[%s3367 + $0x34] sm:$0xf]
        %v3382 = vld [vmem:[%s3367 + $0x38] sm:$0xf]
        %v3383 = vld [vmem:[%s3367 + $0x3c] sm:$0xf]
        %v3384 = vld [vmem:[%s3367 + $0x40] sm:$0xf]
        %v3385 = vld [vmem:[%s3367 + $0x44] sm:$0xf]
        %v3386 = vld [vmem:[%s3367 + $0x48] sm:$0xf]
        %v3387 = vld [vmem:[%s3367 + $0x4c] sm:$0xf]
        %v3388 = vld [vmem:[%s3367 + $0x50] sm:$0xf]
        %v3389 = vld [vmem:[%s3367 + $0x54] sm:$0xf]
        %v3390 = vld [vmem:[%s3367 + $0x58] sm:$0xf]
        %v3391 = vld [vmem:[%s3367 + $0x5c] sm:$0xf]
        %v3392 = vld [vmem:[%s3367 + $0x60] sm:$0xf]
        %v3393 = vld [vmem:[%s3367 + $0x64] sm:$0xf]
        %v3394 = vld [vmem:[%s3367 + $0x68] sm:$0xf]
        %v3395 = vld [vmem:[%s3367 + $0x6c] sm:$0xf]
        %v3396 = vld [vmem:[%s3367 + $0x70] sm:$0xf]
        %v3397 = vld [vmem:[%s3367 + $0x74] sm:$0xf]
        %v3398 = vld [vmem:[%s3367 + $0x78] sm:$0xf]
        %v3399 = vld [vmem:[%s3367 + $0x7c] sm:$0xf]
        %v3400 = vld [vmem:[%s3367 + $0x80] sm:$0xf]
        %v3401 = vld [vmem:[%s3367 + $0x84] sm:$0xf]
        %v3402 = vld [vmem:[%s3367 + $0x88] sm:$0xf]
        %v3403 = vld [vmem:[%s3367 + $0x8c] sm:$0xf]
        %v3404 = vld [vmem:[%s3367 + $0x90] sm:$0xf]
        %v3405 = vld [vmem:[%s3367 + $0x94] sm:$0xf]
        %v3406 = vld [vmem:[%s3367 + $0x98] sm:$0xf]
        %v3407 = vld [vmem:[%s3367 + $0x9c] sm:$0xf]
        %v3408 = vld [vmem:[%s3367 + $0xa0] sm:$0xf]
        %v3409 = vld [vmem:[%s3367 + $0xa4] sm:$0xf]
        %v3410 = vld [vmem:[%s3367 + $0xa8] sm:$0xf]
        %v3411 = vld [vmem:[%s3367 + $0xac] sm:$0xf]
        %v3412 = vld [vmem:[%s3367 + $0xb0] sm:$0xf]
        %v3413 = vld [vmem:[%s3367 + $0xb4] sm:$0xf]
        %v3414 = vld [vmem:[%s3367 + $0xb8] sm:$0xf]
        %v3415 = vld [vmem:[%s3367 + $0xbc] sm:$0xf]
        %v3480 = vunpack.c.l.b16 %v3303
        %v3481 = vunpack.c.h.b16 %v3303
        %v3482 = vunpack.c.l.b16 %v3304
        %v3483 = vunpack.c.l.b16 %v3305
        %v3484 = vunpack.c.h.b16 %v3305
        %v3485 = vunpack.c.l.b16 %v3306
        %v3486 = vunpack.c.l.b16 %v3307
        %v3487 = vunpack.c.h.b16 %v3307
        %v3488 = vunpack.c.l.b16 %v3308
        %v3489 = vunpack.c.l.b16 %v3309
        %v3490 = vunpack.c.h.b16 %v3309
        %v3491 = vunpack.c.l.b16 %v3310
        %v3492 = vunpack.c.l.b16 %v3311
        %v3493 = vunpack.c.h.b16 %v3311
        %v3494 = vunpack.c.l.b16 %v3312
        %v3495 = vunpack.c.l.b16 %v3313
        %v3496 = vunpack.c.h.b16 %v3313
        %v3497 = vunpack.c.l.b16 %v3314
        %v3498 = vunpack.c.l.b16 %v3315
        %v3499 = vunpack.c.h.b16 %v3315
        %v3500 = vunpack.c.l.b16 %v3316
        %v3501 = vunpack.c.l.b16 %v3317
        %v3502 = vunpack.c.h.b16 %v3317
        %v3503 = vunpack.c.l.b16 %v3318
        %v3504 = vunpack.c.l.b16 %v3319
        %v3505 = vunpack.c.h.b16 %v3319
        %v3506 = vunpack.c.l.b16 %v3320
        %v3507 = vunpack.c.l.b16 %v3321
        %v3508 = vunpack.c.h.b16 %v3321
        %v3509 = vunpack.c.l.b16 %v3322
        %v3510 = vunpack.c.l.b16 %v3323
        %v3511 = vunpack.c.h.b16 %v3323
        %v3512 = vunpack.c.l.b16 %v3324
        %v3513 = vunpack.c.l.b16 %v3325
        %v3514 = vunpack.c.h.b16 %v3325
        %v3515 = vunpack.c.l.b16 %v3326
        %v3516 = vunpack.c.l.b16 %v3327
        %v3517 = vunpack.c.h.b16 %v3327
        %v3518 = vunpack.c.l.b16 %v3328
        %v3519 = vunpack.c.l.b16 %v3329
        %v3520 = vunpack.c.h.b16 %v3329
        %v3521 = vunpack.c.l.b16 %v3330
        %v3522 = vunpack.c.l.b16 %v3331
        %v3523 = vunpack.c.h.b16 %v3331
        %v3524 = vunpack.c.l.b16 %v3332
        %v3525 = vunpack.c.l.b16 %v3333
        %v3526 = vunpack.c.h.b16 %v3333
        %v3527 = vunpack.c.l.b16 %v3334
        %v3528 = vunpack.c.l.b16 %v3335
        %v3529 = vunpack.c.h.b16 %v3335
        %v3530 = vunpack.c.l.b16 %v3336
        %v3531 = vunpack.c.l.b16 %v3337
        %v3532 = vunpack.c.h.b16 %v3337
        %v3533 = vunpack.c.l.b16 %v3338
        %v3534 = vunpack.c.l.b16 %v3339
        %v3535 = vunpack.c.h.b16 %v3339
        %v3536 = vunpack.c.l.b16 %v3340
        %v3537 = vunpack.c.l.b16 %v3341
        %v3538 = vunpack.c.h.b16 %v3341
        %v3539 = vunpack.c.l.b16 %v3342
        %v3540 = vunpack.c.l.b16 %v3343
        %v3541 = vunpack.c.h.b16 %v3343
        %v3542 = vunpack.c.l.b16 %v3344
        %v3543 = vunpack.c.l.b16 %v3345
        %v3544 = vunpack.c.h.b16 %v3345
        %v3545 = vunpack.c.l.b16 %v3346
        %v3546 = vunpack.c.l.b16 %v3347
        %v3547 = vunpack.c.h.b16 %v3347
        %v3548 = vunpack.c.l.b16 %v3348
        %v3549 = vunpack.c.l.b16 %v3349
        %v3550 = vunpack.c.h.b16 %v3349
        %v3551 = vunpack.c.l.b16 %v3350
        %v3552 = vunpack.c.l.b16 %v3351
        %v3553 = vunpack.c.h.b16 %v3351
        %v3554 = vunpack.c.l.b16 %v3352
        %v3555 = vunpack.c.l.b16 %v3353
        %v3556 = vunpack.c.h.b16 %v3353
        %v3557 = vunpack.c.l.b16 %v3354
        %v3558 = vunpack.c.l.b16 %v3355
        %v3559 = vunpack.c.h.b16 %v3355
        %v3560 = vunpack.c.l.b16 %v3356
        %v3561 = vunpack.c.l.b16 %v3357
        %v3562 = vunpack.c.h.b16 %v3357
        %v3563 = vunpack.c.l.b16 %v3358
        %v3564 = vunpack.c.l.b16 %v3359
        %v3565 = vunpack.c.h.b16 %v3359
        %v3566 = vunpack.c.l.b16 %v3360
        %v3567 = vunpack.c.l.b16 %v3361
        %v3568 = vunpack.c.h.b16 %v3361
        %v3569 = vunpack.c.l.b16 %v3362
        %v3570 = vunpack.c.l.b16 %v3363
        %v3571 = vunpack.c.h.b16 %v3363
        %v3572 = vunpack.c.l.b16 %v3364
        %v3573 = vunpack.c.l.b16 %v3365
        %v3574 = vunpack.c.h.b16 %v3365
        %v3575 = vunpack.c.l.b16 %v3366
        %v3576 = vpack.c.b16 %v3483, %v3480
        %v3577 = vpack.c.b16 %v3484, %v3481
        %v3578 = vpack.c.b16 %v3485, %v3482
        %v3579 = vpack.c.b16 %v3489, %v3486
        %v3580 = vpack.c.b16 %v3490, %v3487
        %v3581 = vpack.c.b16 %v3491, %v3488
        %v3582 = vpack.c.b16 %v3495, %v3492
        %v3583 = vpack.c.b16 %v3496, %v3493
        %v3584 = vpack.c.b16 %v3497, %v3494
        %v3585 = vpack.c.b16 %v3501, %v3498
        %v3586 = vpack.c.b16 %v3502, %v3499
        %v3587 = vpack.c.b16 %v3503, %v3500
        %v3588 = vpack.c.b16 %v3507, %v3504
        %v3589 = vpack.c.b16 %v3508, %v3505
        %v3590 = vpack.c.b16 %v3509, %v3506
        %v3591 = vpack.c.b16 %v3513, %v3510
        %v3592 = vpack.c.b16 %v3514, %v3511
        %v3593 = vpack.c.b16 %v3515, %v3512
        %v3594 = vpack.c.b16 %v3519, %v3516
        %v3595 = vpack.c.b16 %v3520, %v3517
        %v3596 = vpack.c.b16 %v3521, %v3518
        %v3597 = vpack.c.b16 %v3525, %v3522
        %v3598 = vpack.c.b16 %v3526, %v3523
        %v3599 = vpack.c.b16 %v3527, %v3524
        %v3600 = vpack.c.b16 %v3531, %v3528
        %v3601 = vpack.c.b16 %v3532, %v3529
        %v3602 = vpack.c.b16 %v3533, %v3530
        %v3603 = vpack.c.b16 %v3537, %v3534
        %v3604 = vpack.c.b16 %v3538, %v3535
        %v3605 = vpack.c.b16 %v3539, %v3536
        %v3606 = vpack.c.b16 %v3543, %v3540
        %v3607 = vpack.c.b16 %v3544, %v3541
        %v3608 = vpack.c.b16 %v3545, %v3542
        %v3609 = vpack.c.b16 %v3549, %v3546
        %v3610 = vpack.c.b16 %v3550, %v3547
        %v3611 = vpack.c.b16 %v3551, %v3548
        %v3612 = vpack.c.b16 %v3555, %v3552
        %v3613 = vpack.c.b16 %v3556, %v3553
        %v3614 = vpack.c.b16 %v3557, %v3554
        %v3615 = vpack.c.b16 %v3561, %v3558
        %v3616 = vpack.c.b16 %v3562, %v3559
        %v3617 = vpack.c.b16 %v3563, %v3560
        %v3618 = vpack.c.b16 %v3567, %v3564
        %v3619 = vpack.c.b16 %v3568, %v3565
        %v3620 = vpack.c.b16 %v3569, %v3566
        %v3621 = vpack.c.b16 %v3573, %v3570
        %v3622 = vpack.c.b16 %v3574, %v3571
        %v3623 = vpack.c.b16 %v3575, %v3572
        %v3720 = vunpack.c.l.b16 %v3368
        %v3721 = vunpack.c.l.b16 %v3369
        %v3722 = vunpack.c.l.b16 %v3370
        %v3723 = vunpack.c.l.b16 %v3371
        %v3724 = vunpack.c.l.b16 %v3372
        %v3725 = vunpack.c.l.b16 %v3373
        %v3726 = vunpack.c.l.b16 %v3374
        %v3727 = vunpack.c.l.b16 %v3375
        %v3728 = vunpack.c.l.b16 %v3376
        %v3729 = vunpack.c.l.b16 %v3377
        %v3730 = vunpack.c.l.b16 %v3378
        %v3731 = vunpack.c.l.b16 %v3379
        %v3732 = vunpack.c.l.b16 %v3380
        %v3733 = vunpack.c.l.b16 %v3381
        %v3734 = vunpack.c.l.b16 %v3382
        %v3735 = vunpack.c.l.b16 %v3383
        %v3736 = vunpack.c.l.b16 %v3384
        %v3737 = vunpack.c.l.b16 %v3385
        %v3738 = vunpack.c.l.b16 %v3386
        %v3739 = vunpack.c.l.b16 %v3387
        %v3740 = vunpack.c.l.b16 %v3388
        %v3741 = vunpack.c.l.b16 %v3389
        %v3742 = vunpack.c.l.b16 %v3390
        %v3743 = vunpack.c.l.b16 %v3391
        %v3744 = vunpack.c.l.b16 %v3392
        %v3745 = vunpack.c.l.b16 %v3393
        %v3746 = vunpack.c.l.b16 %v3394
        %v3747 = vunpack.c.l.b16 %v3395
        %v3748 = vunpack.c.l.b16 %v3396
        %v3749 = vunpack.c.l.b16 %v3397
        %v3750 = vunpack.c.l.b16 %v3398
        %v3751 = vunpack.c.l.b16 %v3399
        %v3752 = vunpack.c.l.b16 %v3400
        %v3753 = vunpack.c.l.b16 %v3401
        %v3754 = vunpack.c.l.b16 %v3402
        %v3755 = vunpack.c.l.b16 %v3403
        %v3756 = vunpack.c.l.b16 %v3404
        %v3757 = vunpack.c.l.b16 %v3405
        %v3758 = vunpack.c.l.b16 %v3406
        %v3759 = vunpack.c.l.b16 %v3407
        %v3760 = vunpack.c.l.b16 %v3408
        %v3761 = vunpack.c.l.b16 %v3409
        %v3762 = vunpack.c.l.b16 %v3410
        %v3763 = vunpack.c.l.b16 %v3411
        %v3764 = vunpack.c.l.b16 %v3412
        %v3765 = vunpack.c.l.b16 %v3413
        %v3766 = vunpack.c.l.b16 %v3414
        %v3767 = vunpack.c.l.b16 %v3415
        %v3768 = vpack.c.b16 %v3721, %v3720
        %v3769 = vpack.c.b16 %v3723, %v3722
        %v3770 = vpack.c.b16 %v3725, %v3724
        %v3771 = vpack.c.b16 %v3727, %v3726
        %v3772 = vpack.c.b16 %v3729, %v3728
        %v3773 = vpack.c.b16 %v3731, %v3730
        %v3774 = vpack.c.b16 %v3733, %v3732
        %v3775 = vpack.c.b16 %v3735, %v3734
        %v3776 = vpack.c.b16 %v3737, %v3736
        %v3777 = vpack.c.b16 %v3739, %v3738
        %v3778 = vpack.c.b16 %v3741, %v3740
        %v3779 = vpack.c.b16 %v3743, %v3742
        %v3780 = vpack.c.b16 %v3745, %v3744
        %v3781 = vpack.c.b16 %v3747, %v3746
        %v3782 = vpack.c.b16 %v3749, %v3748
        %v3783 = vpack.c.b16 %v3751, %v3750
        %v3784 = vpack.c.b16 %v3753, %v3752
        %v3785 = vpack.c.b16 %v3755, %v3754
        %v3786 = vpack.c.b16 %v3757, %v3756
        %v3787 = vpack.c.b16 %v3759, %v3758
        %v3788 = vpack.c.b16 %v3761, %v3760
        %v3789 = vpack.c.b16 %v3763, %v3762
        %v3790 = vpack.c.b16 %v3765, %v3764
        %v3791 = vpack.c.b16 %v3767, %v3766
        %3816 = vmatpush.bf16.msra.mxu0 %v3775
        %3817 = vmatpush.bf16.msra.mxu0 %v3774
        %3818 = vmatpush.bf16.msra.mxu0 %v3773
        %3819 = vmatpush.bf16.msra.mxu0 %v3772
        %3820 = vmatpush.bf16.msra.mxu0 %v3771
        %3821 = vmatpush.bf16.msra.mxu0 %v3770
        %3822 = vmatpush.bf16.msra.mxu0 %v3769
        %3823 = vmatpush.bf16.msra.mxu0 %v3768
        %3824 = vmatmul.bf16.gmra.mxu0 %v3576
        %v3825 = vpop.f32.mrf.mxu0
        %v3826 = vadd.f32 0.0, %v3825
        %v3827 = vpop.f32.mrf.mxu0
        %v3828 = vadd.f32 0.0, %v3827
        %3829 = vmatmul.bf16.gmra.mxu0 %v3579
        %v3830 = vpop.f32.mrf.mxu0
        %v3831 = vadd.f32 0.0, %v3830
        %v3832 = vpop.f32.mrf.mxu0
        %v3833 = vadd.f32 0.0, %v3832
        %3834 = vmatmul.bf16.gmra.mxu0 %v3582
        %v3835 = vpop.f32.mrf.mxu0
        %v3836 = vadd.f32 0.0, %v3835
        %v3837 = vpop.f32.mrf.mxu0
        %v3838 = vadd.f32 0.0, %v3837
        %3839 = vmatmul.bf16.gmra.mxu0 %v3585
        %v3840 = vpop.f32.mrf.mxu0
        %v3841 = vadd.f32 0.0, %v3840
        %v3842 = vpop.f32.mrf.mxu0
        %v3843 = vadd.f32 0.0, %v3842
        %3844 = vmatmul.bf16.gmra.mxu0 %v3588
        %v3845 = vpop.f32.mrf.mxu0
        %v3846 = vadd.f32 0.0, %v3845
        %v3847 = vpop.f32.mrf.mxu0
        %v3848 = vadd.f32 0.0, %v3847
        %3849 = vmatmul.bf16.gmra.mxu0 %v3591
        %v3850 = vpop.f32.mrf.mxu0
        %v3851 = vadd.f32 0.0, %v3850
        %v3852 = vpop.f32.mrf.mxu0
        %v3853 = vadd.f32 0.0, %v3852
        %3854 = vmatmul.bf16.gmra.mxu0 %v3594
        %v3855 = vpop.f32.mrf.mxu0
        %v3856 = vadd.f32 0.0, %v3855
        %v3857 = vpop.f32.mrf.mxu0
        %v3858 = vadd.f32 0.0, %v3857
        %3859 = vmatmul.bf16.gmra.mxu0 %v3597
        %v3860 = vpop.f32.mrf.mxu0
        %v3861 = vadd.f32 0.0, %v3860
        %v3862 = vpop.f32.mrf.mxu0
        %v3863 = vadd.f32 0.0, %v3862
        %3864 = vmatmul.bf16.gmra.mxu0 %v3600
        %v3865 = vpop.f32.mrf.mxu0
        %v3866 = vadd.f32 0.0, %v3865
        %v3867 = vpop.f32.mrf.mxu0
        %v3868 = vadd.f32 0.0, %v3867
        %3869 = vmatmul.bf16.gmra.mxu0 %v3603
        %v3870 = vpop.f32.mrf.mxu0
        %v3871 = vadd.f32 0.0, %v3870
        %v3872 = vpop.f32.mrf.mxu0
        %v3873 = vadd.f32 0.0, %v3872
        %3874 = vmatmul.bf16.gmra.mxu0 %v3606
        %v3875 = vpop.f32.mrf.mxu0
        %v3876 = vadd.f32 0.0, %v3875
        %v3877 = vpop.f32.mrf.mxu0
        %v3878 = vadd.f32 0.0, %v3877
        %3879 = vmatmul.bf16.gmra.mxu0 %v3609
        %v3880 = vpop.f32.mrf.mxu0
        %v3881 = vadd.f32 0.0, %v3880
        %v3882 = vpop.f32.mrf.mxu0
        %v3883 = vadd.f32 0.0, %v3882
        %3884 = vmatmul.bf16.gmra.mxu0 %v3612
        %v3885 = vpop.f32.mrf.mxu0
        %v3886 = vadd.f32 0.0, %v3885
        %v3887 = vpop.f32.mrf.mxu0
        %v3888 = vadd.f32 0.0, %v3887
        %3889 = vmatmul.bf16.gmra.mxu0 %v3615
        %v3890 = vpop.f32.mrf.mxu0
        %v3891 = vadd.f32 0.0, %v3890
        %v3892 = vpop.f32.mrf.mxu0
        %v3893 = vadd.f32 0.0, %v3892
        %3894 = vmatmul.bf16.gmra.mxu0 %v3618
        %v3895 = vpop.f32.mrf.mxu0
        %v3896 = vadd.f32 0.0, %v3895
        %v3897 = vpop.f32.mrf.mxu0
        %v3898 = vadd.f32 0.0, %v3897
        %3899 = vmatmul.bf16.gmra.mxu0 %v3621
        %v3900 = vpop.f32.mrf.mxu0
        %v3901 = vadd.f32 0.0, %v3900
        %v3902 = vpop.f32.mrf.mxu0
        %v3903 = vadd.f32 0.0, %v3902
        %3904 = vdwg.mxu0
        %3905 = vmatpush.bf16.msra.mxu0 %v3783
        %3906 = vmatpush.bf16.msra.mxu0 %v3782
        %3907 = vmatpush.bf16.msra.mxu0 %v3781
        %3908 = vmatpush.bf16.msra.mxu0 %v3780
        %3909 = vmatpush.bf16.msra.mxu0 %v3779
        %3910 = vmatpush.bf16.msra.mxu0 %v3778
        %3911 = vmatpush.bf16.msra.mxu0 %v3777
        %3912 = vmatpush.bf16.msra.mxu0 %v3776
        %3913 = vmatmul.bf16.gmra.mxu0 %v3577
        %v3914 = vpop.f32.mrf.mxu0
        %v3915 = vadd.f32 %v3826, %v3914
        %v3916 = vpop.f32.mrf.mxu0
        %v3917 = vadd.f32 %v3828, %v3916
        %3918 = vmatmul.bf16.gmra.mxu0 %v3580
        %v3919 = vpop.f32.mrf.mxu0
        %v3920 = vadd.f32 %v3831, %v3919
        %v3921 = vpop.f32.mrf.mxu0
        %v3922 = vadd.f32 %v3833, %v3921
        %3923 = vmatmul.bf16.gmra.mxu0 %v3583
        %v3924 = vpop.f32.mrf.mxu0
        %v3925 = vadd.f32 %v3836, %v3924
        %v3926 = vpop.f32.mrf.mxu0
        %v3927 = vadd.f32 %v3838, %v3926
        %3928 = vmatmul.bf16.gmra.mxu0 %v3586
        %v3929 = vpop.f32.mrf.mxu0
        %v3930 = vadd.f32 %v3841, %v3929
        %v3931 = vpop.f32.mrf.mxu0
        %v3932 = vadd.f32 %v3843, %v3931
        %3933 = vmatmul.bf16.gmra.mxu0 %v3589
        %v3934 = vpop.f32.mrf.mxu0
        %v3935 = vadd.f32 %v3846, %v3934
        %v3936 = vpop.f32.mrf.mxu0
        %v3937 = vadd.f32 %v3848, %v3936
        %3938 = vmatmul.bf16.gmra.mxu0 %v3592
        %v3939 = vpop.f32.mrf.mxu0
        %v3940 = vadd.f32 %v3851, %v3939
        %v3941 = vpop.f32.mrf.mxu0
        %v3942 = vadd.f32 %v3853, %v3941
        %3943 = vmatmul.bf16.gmra.mxu0 %v3595
        %v3944 = vpop.f32.mrf.mxu0
        %v3945 = vadd.f32 %v3856, %v3944
        %v3946 = vpop.f32.mrf.mxu0
        %v3947 = vadd.f32 %v3858, %v3946
        %3948 = vmatmul.bf16.gmra.mxu0 %v3598
        %v3949 = vpop.f32.mrf.mxu0
        %v3950 = vadd.f32 %v3861, %v3949
        %v3951 = vpop.f32.mrf.mxu0
        %v3952 = vadd.f32 %v3863, %v3951
        %3953 = vmatmul.bf16.gmra.mxu0 %v3601
        %v3954 = vpop.f32.mrf.mxu0
        %v3955 = vadd.f32 %v3866, %v3954
        %v3956 = vpop.f32.mrf.mxu0
        %v3957 = vadd.f32 %v3868, %v3956
        %3958 = vmatmul.bf16.gmra.mxu0 %v3604
        %v3959 = vpop.f32.mrf.mxu0
        %v3960 = vadd.f32 %v3871, %v3959
        %v3961 = vpop.f32.mrf.mxu0
        %v3962 = vadd.f32 %v3873, %v3961
        %3963 = vmatmul.bf16.gmra.mxu0 %v3607
        %v3964 = vpop.f32.mrf.mxu0
        %v3965 = vadd.f32 %v3876, %v3964
        %v3966 = vpop.f32.mrf.mxu0
        %v3967 = vadd.f32 %v3878, %v3966
        %3968 = vmatmul.bf16.gmra.mxu0 %v3610
        %v3969 = vpop.f32.mrf.mxu0
        %v3970 = vadd.f32 %v3881, %v3969
        %v3971 = vpop.f32.mrf.mxu0
        %v3972 = vadd.f32 %v3883, %v3971
        %3973 = vmatmul.bf16.gmra.mxu0 %v3613
        %v3974 = vpop.f32.mrf.mxu0
        %v3975 = vadd.f32 %v3886, %v3974
        %v3976 = vpop.f32.mrf.mxu0
        %v3977 = vadd.f32 %v3888, %v3976
        %3978 = vmatmul.bf16.gmra.mxu0 %v3616
        %v3979 = vpop.f32.mrf.mxu0
        %v3980 = vadd.f32 %v3891, %v3979
        %v3981 = vpop.f32.mrf.mxu0
        %v3982 = vadd.f32 %v3893, %v3981
        %3983 = vmatmul.bf16.gmra.mxu0 %v3619
        %v3984 = vpop.f32.mrf.mxu0
        %v3985 = vadd.f32 %v3896, %v3984
        %v3986 = vpop.f32.mrf.mxu0
        %v3987 = vadd.f32 %v3898, %v3986
        %3988 = vmatmul.bf16.gmra.mxu0 %v3622
        %v3989 = vpop.f32.mrf.mxu0
        %v3990 = vadd.f32 %v3901, %v3989
        %v3991 = vpop.f32.mrf.mxu0
        %v3992 = vadd.f32 %v3903, %v3991
        %3993 = vdwg.mxu0
        %3994 = vmatpush.bf16.msra.mxu0 %v3791
        %3995 = vmatpush.bf16.msra.mxu0 %v3790
        %3996 = vmatpush.bf16.msra.mxu0 %v3789
        %3997 = vmatpush.bf16.msra.mxu0 %v3788
        %3998 = vmatpush.bf16.msra.mxu0 %v3787
        %3999 = vmatpush.bf16.msra.mxu0 %v3786
        %4000 = vmatpush.bf16.msra.mxu0 %v3785
        %4001 = vmatpush.bf16.msra.mxu0 %v3784
        %4002 = vmatmul.bf16.gmra.mxu0 %v3578
        %v4003 = vpop.f32.mrf.mxu0
        %v4004 = vadd.f32 %v3915, %v4003
        %v4005 = vpop.f32.mrf.mxu0
        %v4006 = vadd.f32 %v3917, %v4005
        %4007 = vmatmul.bf16.gmra.mxu0 %v3581
        %v4008 = vpop.f32.mrf.mxu0
        %v4009 = vadd.f32 %v3920, %v4008
        %v4010 = vpop.f32.mrf.mxu0
        %v4011 = vadd.f32 %v3922, %v4010
        %4012 = vmatmul.bf16.gmra.mxu0 %v3584
        %v4013 = vpop.f32.mrf.mxu0
        %v4014 = vadd.f32 %v3925, %v4013
        %v4015 = vpop.f32.mrf.mxu0
        %v4016 = vadd.f32 %v3927, %v4015
        %4017 = vmatmul.bf16.gmra.mxu0 %v3587
        %v4018 = vpop.f32.mrf.mxu0
        %v4019 = vadd.f32 %v3930, %v4018
        %v4020 = vpop.f32.mrf.mxu0
        %v4021 = vadd.f32 %v3932, %v4020
        %4022 = vmatmul.bf16.gmra.mxu0 %v3590
        %v4023 = vpop.f32.mrf.mxu0
        %v4024 = vadd.f32 %v3935, %v4023
        %v4025 = vpop.f32.mrf.mxu0
        %v4026 = vadd.f32 %v3937, %v4025
        %4027 = vmatmul.bf16.gmra.mxu0 %v3593
        %v4028 = vpop.f32.mrf.mxu0
        %v4029 = vadd.f32 %v3940, %v4028
        %v4030 = vpop.f32.mrf.mxu0
        %v4031 = vadd.f32 %v3942, %v4030
        %4032 = vmatmul.bf16.gmra.mxu0 %v3596
        %v4033 = vpop.f32.mrf.mxu0
        %v4034 = vadd.f32 %v3945, %v4033
        %v4035 = vpop.f32.mrf.mxu0
        %v4036 = vadd.f32 %v3947, %v4035
        %4037 = vmatmul.bf16.gmra.mxu0 %v3599
        %v4038 = vpop.f32.mrf.mxu0
        %v4039 = vadd.f32 %v3950, %v4038
        %v4040 = vpop.f32.mrf.mxu0
        %v4041 = vadd.f32 %v3952, %v4040
        %4042 = vmatmul.bf16.gmra.mxu0 %v3602
        %v4043 = vpop.f32.mrf.mxu0
        %v4044 = vadd.f32 %v3955, %v4043
        %v4045 = vpop.f32.mrf.mxu0
        %v4046 = vadd.f32 %v3957, %v4045
        %4047 = vmatmul.bf16.gmra.mxu0 %v3605
        %v4048 = vpop.f32.mrf.mxu0
        %v4049 = vadd.f32 %v3960, %v4048
        %v4050 = vpop.f32.mrf.mxu0
        %v4051 = vadd.f32 %v3962, %v4050
        %4052 = vmatmul.bf16.gmra.mxu0 %v3608
        %v4053 = vpop.f32.mrf.mxu0
        %v4054 = vadd.f32 %v3965, %v4053
        %v4055 = vpop.f32.mrf.mxu0
        %v4056 = vadd.f32 %v3967, %v4055
        %4057 = vmatmul.bf16.gmra.mxu0 %v3611
        %v4058 = vpop.f32.mrf.mxu0
        %v4059 = vadd.f32 %v3970, %v4058
        %v4060 = vpop.f32.mrf.mxu0
        %v4061 = vadd.f32 %v3972, %v4060
        %4062 = vmatmul.bf16.gmra.mxu0 %v3614
        %v4063 = vpop.f32.mrf.mxu0
        %v4064 = vadd.f32 %v3975, %v4063
        %v4065 = vpop.f32.mrf.mxu0
        %v4066 = vadd.f32 %v3977, %v4065
        %4067 = vmatmul.bf16.gmra.mxu0 %v3617
        %v4068 = vpop.f32.mrf.mxu0
        %v4069 = vadd.f32 %v3980, %v4068
        %v4070 = vpop.f32.mrf.mxu0
        %v4071 = vadd.f32 %v3982, %v4070
        %4072 = vmatmul.bf16.gmra.mxu0 %v3620
        %v4073 = vpop.f32.mrf.mxu0
        %v4074 = vadd.f32 %v3985, %v4073
        %v4075 = vpop.f32.mrf.mxu0
        %v4076 = vadd.f32 %v3987, %v4075
        %4077 = vmatmul.bf16.gmra.mxu0 %v3623
        %v4078 = vpop.f32.mrf.mxu0
        %v4079 = vadd.f32 %v3990, %v4078
        %v4080 = vpop.f32.mrf.mxu0
        %v4081 = vadd.f32 %v3992, %v4080
        %4082 = vdwg.mxu0
        %v4083 = vadd.f32 %v3223, %v4004
        %v4084 = vadd.f32 %v3225, %v4006
        %v4085 = vadd.f32 %v3228, %v4009
        %v4086 = vadd.f32 %v3230, %v4011
        %v4087 = vadd.f32 %v3233, %v4014
        %v4088 = vadd.f32 %v3235, %v4016
        %v4089 = vadd.f32 %v3238, %v4019
        %v4090 = vadd.f32 %v3240, %v4021
        %v4091 = vadd.f32 %v3243, %v4024
        %v4092 = vadd.f32 %v3245, %v4026
        %v4093 = vadd.f32 %v3248, %v4029
        %v4094 = vadd.f32 %v3250, %v4031
        %v4095 = vadd.f32 %v3253, %v4034
        %v4096 = vadd.f32 %v3255, %v4036
        %v4097 = vadd.f32 %v3258, %v4039
        %v4098 = vadd.f32 %v3260, %v4041
        %v4099 = vadd.f32 %v3263, %v4044
        %v4100 = vadd.f32 %v3265, %v4046
        %v4101 = vadd.f32 %v3268, %v4049
        %v4102 = vadd.f32 %v3270, %v4051
        %v4103 = vadd.f32 %v3273, %v4054
        %v4104 = vadd.f32 %v3275, %v4056
        %v4105 = vadd.f32 %v3278, %v4059
        %v4106 = vadd.f32 %v3280, %v4061
        %v4107 = vadd.f32 %v3283, %v4064
        %v4108 = vadd.f32 %v3285, %v4066
        %v4109 = vadd.f32 %v3288, %v4069
        %v4110 = vadd.f32 %v3290, %v4071
        %v4111 = vadd.f32 %v3293, %v4074
        %v4112 = vadd.f32 %v3295, %v4076
        %v4113 = vadd.f32 %v3298, %v4079
        %v4114 = vadd.f32 %v3300, %v4081
        %v4115 = vld [vmem:[%s4] sm:$0x1]
        %v4116 = vld [vmem:[%s4 + $0x1] sm:$0x1]
        %v4117 = vperm.slane %v4115, 0
        %v4118 = vmul.f32 %v4083, %v4117
        %v4119 = vmul.f32 %v4084, %v4117
        %v4120 = vmul.f32 %v4085, %v4117
        %v4121 = vmul.f32 %v4086, %v4117
        %v4122 = vmul.f32 %v4087, %v4117
        %v4123 = vmul.f32 %v4088, %v4117
        %v4124 = vmul.f32 %v4089, %v4117
        %v4125 = vmul.f32 %v4090, %v4117
        %v4126 = vmul.f32 %v4091, %v4117
        %v4127 = vmul.f32 %v4092, %v4117
        %v4128 = vmul.f32 %v4093, %v4117
        %v4129 = vmul.f32 %v4094, %v4117
        %v4130 = vmul.f32 %v4095, %v4117
        %v4131 = vmul.f32 %v4096, %v4117
        %v4132 = vmul.f32 %v4097, %v4117
        %v4133 = vmul.f32 %v4098, %v4117
        %v4134 = vmul.f32 %v4099, %v4117
        %v4135 = vmul.f32 %v4100, %v4117
        %v4136 = vmul.f32 %v4101, %v4117
        %v4137 = vmul.f32 %v4102, %v4117
        %v4138 = vmul.f32 %v4103, %v4117
        %v4139 = vmul.f32 %v4104, %v4117
        %v4140 = vmul.f32 %v4105, %v4117
        %v4141 = vmul.f32 %v4106, %v4117
        %v4142 = vmul.f32 %v4107, %v4117
        %v4143 = vmul.f32 %v4108, %v4117
        %v4144 = vmul.f32 %v4109, %v4117
        %v4145 = vmul.f32 %v4110, %v4117
        %v4146 = vmul.f32 %v4111, %v4117
        %v4147 = vmul.f32 %v4112, %v4117
        %v4148 = vmul.f32 %v4113, %v4117
        %v4149 = vmul.f32 %v4114, %v4117
        %v4150 = vperm.slane %v4116, 0
        %v4151 = vadd.f32 %v4118, %v4150
        %v4152 = vadd.f32 %v4119, %v4150
        %v4153 = vadd.f32 %v4120, %v4150
        %v4154 = vadd.f32 %v4121, %v4150
        %v4155 = vadd.f32 %v4122, %v4150
        %v4156 = vadd.f32 %v4123, %v4150
        %v4157 = vadd.f32 %v4124, %v4150
        %v4158 = vadd.f32 %v4125, %v4150
        %v4159 = vadd.f32 %v4126, %v4150
        %v4160 = vadd.f32 %v4127, %v4150
        %v4161 = vadd.f32 %v4128, %v4150
        %v4162 = vadd.f32 %v4129, %v4150
        %v4163 = vadd.f32 %v4130, %v4150
        %v4164 = vadd.f32 %v4131, %v4150
        %v4165 = vadd.f32 %v4132, %v4150
        %v4166 = vadd.f32 %v4133, %v4150
        %v4167 = vadd.f32 %v4134, %v4150
        %v4168 = vadd.f32 %v4135, %v4150
        %v4169 = vadd.f32 %v4136, %v4150
        %v4170 = vadd.f32 %v4137, %v4150
        %v4171 = vadd.f32 %v4138, %v4150
        %v4172 = vadd.f32 %v4139, %v4150
        %v4173 = vadd.f32 %v4140, %v4150
        %v4174 = vadd.f32 %v4141, %v4150
        %v4175 = vadd.f32 %v4142, %v4150
        %v4176 = vadd.f32 %v4143, %v4150
        %v4177 = vadd.f32 %v4144, %v4150
        %v4178 = vadd.f32 %v4145, %v4150
        %v4179 = vadd.f32 %v4146, %v4150
        %v4180 = vadd.f32 %v4147, %v4150
        %v4181 = vadd.f32 %v4148, %v4150
        %v4182 = vadd.f32 %v4149, %v4150
        %v4183 = vmax.f32 %v4151, 0.0
        %v4184 = vmax.f32 %v4152, 0.0
        %v4185 = vmax.f32 %v4153, 0.0
        %v4186 = vmax.f32 %v4154, 0.0
        %v4187 = vmax.f32 %v4155, 0.0
        %v4188 = vmax.f32 %v4156, 0.0
        %v4189 = vmax.f32 %v4157, 0.0
        %v4190 = vmax.f32 %v4158, 0.0
        %v4191 = vmax.f32 %v4159, 0.0
        %v4192 = vmax.f32 %v4160, 0.0
        %v4193 = vmax.f32 %v4161, 0.0
        %v4194 = vmax.f32 %v4162, 0.0
        %v4195 = vmax.f32 %v4163, 0.0
        %v4196 = vmax.f32 %v4164, 0.0
        %v4197 = vmax.f32 %v4165, 0.0
        %v4198 = vmax.f32 %v4166, 0.0
        %v4199 = vmax.f32 %v4167, 0.0
        %v4200 = vmax.f32 %v4168, 0.0
        %v4201 = vmax.f32 %v4169, 0.0
        %v4202 = vmax.f32 %v4170, 0.0
        %v4203 = vmax.f32 %v4171, 0.0
        %v4204 = vmax.f32 %v4172, 0.0
        %v4205 = vmax.f32 %v4173, 0.0
        %v4206 = vmax.f32 %v4174, 0.0
        %v4207 = vmax.f32 %v4175, 0.0
        %v4208 = vmax.f32 %v4176, 0.0
        %v4209 = vmax.f32 %v4177, 0.0
        %v4210 = vmax.f32 %v4178, 0.0
        %v4211 = vmax.f32 %v4179, 0.0
        %v4212 = vmax.f32 %v4180, 0.0
        %v4213 = vmax.f32 %v4181, 0.0
        %v4214 = vmax.f32 %v4182, 0.0
        %4215 = vst.msk [vmem:[%s241] sm:$0xff] %vm707, %v4183
        %4216 = vst.msk [vmem:[%s241 + $0x8] sm:$0xff] %vm707, %v4184
        %4217 = vst.msk [vmem:[%s241 + $0x10] sm:$0xff] %vm707, %v4185
        %4218 = vst.msk [vmem:[%s241 + $0x18] sm:$0xff] %vm707, %v4186
        %4219 = vst.msk [vmem:[%s241 + $0x20] sm:$0xff] %vm707, %v4187
        %4220 = vst.msk [vmem:[%s241 + $0x28] sm:$0xff] %vm707, %v4188
        %4221 = vst.msk [vmem:[%s241 + $0x30] sm:$0xff] %vm707, %v4189
        %4222 = vst.msk [vmem:[%s241 + $0x38] sm:$0xff] %vm707, %v4190
        %4223 = vst.msk [vmem:[%s241 + $0x40] sm:$0xff] %vm707, %v4191
        %4224 = vst.msk [vmem:[%s241 + $0x48] sm:$0xff] %vm707, %v4192
        %4225 = vst.msk [vmem:[%s241 + $0x50] sm:$0xff] %vm707, %v4193
        %4226 = vst.msk [vmem:[%s241 + $0x58] sm:$0xff] %vm707, %v4194
        %4227 = vst.msk [vmem:[%s241 + $0x60] sm:$0xff] %vm707, %v4195
        %4228 = vst.msk [vmem:[%s241 + $0x68] sm:$0xff] %vm707, %v4196
        %4229 = vst.msk [vmem:[%s241 + $0x70] sm:$0xff] %vm707, %v4197
        %4230 = vst.msk [vmem:[%s241 + $0x78] sm:$0xff] %vm707, %v4198
        %4231 = vst.msk [vmem:[%s241 + $0x80] sm:$0xff] %vm707, %v4199
        %4232 = vst.msk [vmem:[%s241 + $0x88] sm:$0xff] %vm707, %v4200
        %4233 = vst.msk [vmem:[%s241 + $0x90] sm:$0xff] %vm707, %v4201
        %4234 = vst.msk [vmem:[%s241 + $0x98] sm:$0xff] %vm707, %v4202
        %4235 = vst.msk [vmem:[%s241 + $0xa0] sm:$0xff] %vm707, %v4203
        %4236 = vst.msk [vmem:[%s241 + $0xa8] sm:$0xff] %vm707, %v4204
        %4237 = vst.msk [vmem:[%s241 + $0xb0] sm:$0xff] %vm707, %v4205
        %4238 = vst.msk [vmem:[%s241 + $0xb8] sm:$0xff] %vm707, %v4206
        %4239 = vst.msk [vmem:[%s241 + $0xc0] sm:$0xff] %vm707, %v4207
        %4240 = vst.msk [vmem:[%s241 + $0xc8] sm:$0xff] %vm707, %v4208
        %4241 = vst.msk [vmem:[%s241 + $0xd0] sm:$0xff] %vm707, %v4209
        %4242 = vst.msk [vmem:[%s241 + $0xd8] sm:$0xff] %vm707, %v4210
        %4243 = vst.msk [vmem:[%s241 + $0xe0] sm:$0xff] %vm707, %v4211
        %4244 = vst.msk [vmem:[%s241 + $0xe8] sm:$0xff] %vm707, %v4212
        %4245 = vst.msk [vmem:[%s241 + $0xf0] sm:$0xff] %vm707, %v4213
        %4246 = vst.msk [vmem:[%s241 + $0xf8] sm:$0xff] %vm707, %v4214
        %p4247 = scmp.lt.s32.totalorder %s17, 1
        %s4248 = scalar_select %p4247, %s17, 1
        %s4249 = smul.addr %s4248, 32
        %s4250 = smul.addr %s4249, 8
        %s4251 = scalar_lea.vmem %s5, %s4250
        // Predicated region
        $region45: #{tpu_custom_call.1} parent=39 // pred_check
          %p4252 = pneg %p145
        $region46: #{tpu_custom_call.1} parent=39 // pred_check_branch
          %4254 = sbr.rel (%p4252) target = $region48
        $region47: #{tpu_custom_call.1} parent=39 // pred_region
          _
        $region48: #{tpu_custom_call.1} parent=39 // pred_fallthru
          _
      $region40: #{tpu_custom_call.1} parent=5 // pred_fallthru
        _
      %p4255 = scmp.le.s32.totalorder 2, %s12
      // Predicated region
      $region49: #{tpu_custom_call.1} parent=5 // pred_check
        %p4256 = pneg %p4255
      $region50: #{tpu_custom_call.1} parent=5 // pred_check_branch
        %4258 = sbr.rel (%p4256) target = $region52
      $region51: #{tpu_custom_call.1} parent=5 // pred_region
        %s4259 = ssub.s32 %s12, 2
        // Predicated region
        $region53: #{tpu_custom_call.1} parent=51 // pred_check
          %p4260 = pneg %p151
        $region54: #{tpu_custom_call.1} parent=51 // pred_check_branch
          %4262 = sbr.rel (%p4260) target = $region56
        $region55: #{tpu_custom_call.1} parent=51 // pred_region
          %p4263 = scmp.lt.s32.totalorder %s18, 1
          %s4264 = scalar_select %p4263, %s18, 1
          %s4265 = smul.addr %s4264, 32
          %s4266 = smul.addr %s4265, 8
          %s4267 = scalar_lea.vmem %s5, %s4266
        $region56: #{tpu_custom_call.1} parent=51 // pred_fallthru
          _
      $region52: #{tpu_custom_call.1} parent=5 // pred_fallthru
        _
    $region6: #{tpu_custom_call.1} parent=1 // loop_footer
      %s16 = sadd.s32 1, %s12
    $region7: #{tpu_custom_call.1} parent=1 // loop_footer_branch
      %11 = sbr.rel target = $region3
    $region8: #{tpu_custom_call.1} parent=1 // loop_exit
      _
    %4268 = vsyncpa [#allocation4], 1
    %s4269 = scalar_lea.sflag [#allocation4], 1
    %4270 = vsyncpa %s4269, 1

</llo_original>
